<compile_context>
chip_gen: v7x
topology: tpu7x:2x2x1
jax: 0.10.0
libtpu: 0.0.40
codegen_flags: <defaults>
</compile_context>

<pallas_src>
import functools
import math

import numpy as np
import jax
import jax.numpy as jnp
from jax import lax
from jax.experimental import pallas as pl
from jax.experimental.pallas import tpu as pltpu


def _softplus(x):
    # numerically-safe softplus shared by kernel and reference
    return jnp.where(x > 20.0, x, jnp.log1p(jnp.exp(jnp.minimum(x, 20.0))))


def _silu(x):
    return x * jax.nn.sigmoid(x)


def _mm_nt(a, b):
    # a: (M, Kc), b: (N, Kc) -> (M, N)   (i.e. a @ b.T), f32 accumulation on MXU
    return lax.dot_general(
        a, b, (((a.ndim - 1,), (b.ndim - 1,)), ((), ())),
        preferred_element_type=jnp.float32)


# ----------------------------------------------------------------------------
# Pallas kernel: one grid step == Bb batch elements.
# ----------------------------------------------------------------------------
def _htm_kernel(hs_ref, norm_w_ref, in_wx_ref, in_wz_ref,
                conv_w_ref, conv_b_ref, xdt_w_ref, xB_w_ref, xC_w_ref,
                dtp_w_ref, dtp_b_ref, AlogT_ref, Dp_ref, agg_w_ref, out_w_ref,
                out_ref, *, Bb, T, E, S, R, W, K, eps):
    M = Bb * T
    Dm = hs_ref.shape[-1]
    x_in = hs_ref[...].astype(jnp.float32).reshape(M, Dm)     # (M, D)

    # RMSNorm (prenorm; residual is unused downstream in HTM.forward)
    ms = jnp.mean(x_in * x_in, axis=-1, keepdims=True)
    xn = x_in * lax.rsqrt(ms + eps) * norm_w_ref[...]         # (M, D)

    # in_proj (bias=False), split into x / z halves
    x = _mm_nt(xn, in_wx_ref[...])                            # (M, E)
    z = _mm_nt(xn, in_wz_ref[...])                            # (M, E)
    zact = _silu(z)

    conv_b = conv_b_ref[...]                                  # (K, E)
    dtp_b = dtp_b_ref[...]                                    # (K, E)
    Dp = Dp_ref[...]                                          # (K, E)

    # --- per-tap causally-shifted copies of x (shared across modules) -------
    # conv output[t] = bias + sum_w weight[w] * x[t - (W-1-w)]  (zero if <0)
    row_t = lax.broadcasted_iota(jnp.int32, (M, 1), 0) % T    # position in seq
    xsh = []
    for w in range(W):
        shift = W - 1 - w
        if shift == 0:
            xsh.append(x)
        else:
            xs = pltpu.roll(x, shift=shift, axis=0)           # xs[i] = x[i-shift]
            xsh.append(jnp.where(row_t >= shift, xs, 0.0))    # mask causal / batch edge

    # --- depthwise causal conv1d + SiLU, per module --------------------------
    xc_list = []
    for k in range(K):
        cw = conv_w_ref[k]                                    # (W, E)
        acc = conv_b[k:k + 1, :]
        for w in range(W):
            acc = acc + xsh[w] * cw[w:w + 1, :]
        xc_list.append(_silu(acc))                            # (M, E)

    # --- shared x_proj, batched over all modules -----------------------------
    xc_cat = jnp.concatenate(xc_list, axis=0)                 # (K*M, E)
    dtr_all = _mm_nt(xc_cat, xdt_w_ref[...])                  # (K*M, R)
    Bm_all = _mm_nt(xc_cat, xB_w_ref[...])                    # (K*M, S)
    Cm_all = _mm_nt(xc_cat, xC_w_ref[...])                    # (K*M, S)

    y_list = []
    for k in range(K):
        xc = xc_list[k]                                       # (M, E)
        sl = slice(k * M, (k + 1) * M)
        dtr = dtr_all[sl]                                     # (M, R)
        delta = _softplus(_mm_nt(dtr, dtp_w_ref[k]) + dtp_b[k:k + 1, :])  # (M, E)
        Bm = Bm_all[sl]                                       # (M, S)
        Cm = Cm_all[sl]                                       # (M, S)
        A_T = -jnp.exp(AlogT_ref[k])                          # (S, E)

        # --- selective scan: vectorized prologue, serial FMA recurrence ------
        dA = jnp.exp(delta[:, None, :] * A_T[None, :, :])     # (M, S, E)
        dBu = Bm[:, :, None] * (delta * xc)[:, None, :]       # (M, S, E)
        dA4 = dA.reshape(Bb, T, S, E)
        dBu4 = dBu.reshape(Bb, T, S, E)
        Cm3 = Cm.reshape(Bb, T, S)

        h = jnp.zeros((Bb, S, E), jnp.float32)
        ys = []
        # T is small (statically unrolled); for large T switch to
        # lax.fori_loop(..., unroll=4-8) carrying (h, y).
        for t in range(T):
            h = h * dA4[:, t] + dBu4[:, t]                    # (Bb, S, E)
            ys.append(jnp.sum(h * Cm3[:, t][:, :, None], axis=1))  # (Bb, E)
        y = jnp.stack(ys, axis=1).reshape(M, E)               # (M, E)
        y = (y + xc * Dp[k:k + 1, :]) * zact                  # skip (D) + SiLU(z) gate
        y_list.append(y)

    # concat over modules (lane-dense) + aggregate_linear, then out_proj
    y_cat = jnp.concatenate(y_list, axis=-1)                  # (M, K*E)
    agg = _mm_nt(y_cat, agg_w_ref[...])                       # (M, E)
    out = _mm_nt(agg, out_w_ref[...])                         # (M, Dm)
    out_ref[...] = out.reshape(Bb, T, Dm).astype(out_ref.dtype)


# ----------------------------------------------------------------------------
# Wrapper
# ----------------------------------------------------------------------------
def _pick_block_batch(B, T):
    # aim for >= ~256 matmul rows per grid step, but keep >= 2 parallel grid
    # steps when possible so both v7x TensorCores get work.
    target = max(1, 256 // T)
    divs = [d for d in range(1, B + 1) if B % d == 0 and d <= target]
    if not divs:
        return 1
    pref = [d for d in divs if B // d >= 2]
    return max(pref) if pref else max(divs)


def htm_forward(hs, p, block_batch=None):
    B, T, Dm = hs.shape
    K, W, E = p['conv_w'].shape
    S = p['xB_w'].shape[0]
    R = p['xdt_w'].shape[0]

    Bb = _pick_block_batch(B, T) if block_batch is None else block_batch
    assert B % Bb == 0

    kern = functools.partial(_htm_kernel, Bb=Bb, T=T, E=E, S=S, R=R, W=W, K=K,
                             eps=p['eps'])

    def full(shape):
        return pl.BlockSpec(shape, lambda b, _s=len(shape): (0,) * _s)

    in_specs = [
        pl.BlockSpec((Bb, T, Dm), lambda b: (b, 0, 0)),  # hidden_states
        full(p['norm_w'].shape),                         # RMSNorm weight
        full(p['in_wx'].shape), full(p['in_wz'].shape),  # in_proj (x / z halves)
        full(p['conv_w'].shape), full(p['conv_b'].shape),  # conv weight / bias
        full(p['xdt_w'].shape), full(p['xB_w'].shape), full(p['xC_w'].shape),  # x_proj
        full(p['dtp_w'].shape), full(p['dtp_b'].shape),  # dt_proj weight / bias
        full(p['AlogT'].shape), full(p['Dp'].shape),     # A_log (transposed), D
        full(p['agg_w'].shape),                          # aggregate_linear (full)
        full(p['out_w'].shape),                          # out_proj
    ]

    return pl.pallas_call(
        kern,
        out_shape=jax.ShapeDtypeStruct((B, T, Dm), jnp.float32),
        grid=(B // Bb,),
        in_specs=in_specs,
        out_specs=pl.BlockSpec((Bb, T, Dm), lambda b: (b, 0, 0)),
        compiler_params=pltpu.CompilerParams(
            dimension_semantics=("parallel",)),
    )(hs, p['norm_w'], p['in_wx'], p['in_wz'],
      p['conv_w'], p['conv_b'], p['xdt_w'], p['xB_w'], p['xC_w'],
      p['dtp_w'], p['dtp_b'], p['AlogT'], p['Dp'], p['agg_w'], p['out_w'])


# ----------------------------------------------------------------------------
# Deterministic parameter construction (shapes from HTM.__init__)
# ----------------------------------------------------------------------------
def init_params(key, d_model=32, d_state=16, d_conv=4, expand=2, num_module=2,
                dt_min=0.001, dt_max=0.1, dt_init_floor=1e-4, eps=1e-5):
    E = int(expand * d_model)
    R = math.ceil(d_model / 16)
    K = num_module
    ks = jax.random.split(key, 8)

    norm_w = jnp.ones((1, d_model), jnp.float32)                        # RMSNorm weight
    in_w = 0.02 * jax.random.normal(ks[0], (2 * E, d_model), jnp.float32)
    in_wx, in_wz = in_w[:E], in_w[E:]                                    # in_proj split

    conv_w = 0.2 * jax.random.normal(ks[1], (K, d_conv, E), jnp.float32)  # (d_inner,1,W) -> (W,E) per k
    conv_b = 0.1 * jax.random.normal(ks[2], (K, E), jnp.float32)

    xp = 0.05 * jax.random.normal(ks[3], (R + 2 * d_state, E), jnp.float32)  # shared x_proj
    xdt_w, xB_w, xC_w = xp[:R], xp[R:R + d_state], xp[R + d_state:]

    std = R ** -0.5
    dtp_w = jax.random.uniform(ks[4], (K, E, R), jnp.float32, -std, std)
    dt = jnp.exp(jax.random.uniform(ks[5], (E,), jnp.float32)
                 * (math.log(dt_max) - math.log(dt_min)) + math.log(dt_min))
    dt = jnp.maximum(dt, dt_init_floor)
    inv_dt = dt + jnp.log(-jnp.expm1(-dt))                               # inverse-softplus init
    dtp_b = jnp.broadcast_to(inv_dt[None, :], (K, E)).astype(jnp.float32)

    AlogT = jnp.broadcast_to(
        jnp.log(jnp.arange(1, d_state + 1, dtype=jnp.float32))[None, :, None],
        (K, d_state, E)).astype(jnp.float32)                             # A_log transposed: (S, E)
    Dp = jnp.ones((K, E), jnp.float32)

    agg_w = 0.05 * jax.random.normal(ks[6], (E, K * E), jnp.float32)     # aggregate_linear
    out_w = 0.05 * jax.random.normal(ks[7], (d_model, E), jnp.float32)   # out_proj

    return dict(norm_w=norm_w, in_wx=in_wx, in_wz=in_wz,
                conv_w=conv_w, conv_b=conv_b, xdt_w=xdt_w, xB_w=xB_w, xC_w=xC_w,
                dtp_w=dtp_w, dtp_b=dtp_b, AlogT=AlogT, Dp=Dp,
                agg_w=agg_w, out_w=out_w, eps=float(eps))


# ----------------------------------------------------------------------------
# Pure-JAX reference (mirrors the PyTorch fast-path semantics) for validation.
# ----------------------------------------------------------------------------
def reference(hs, p):
    Bn, T, Dm = hs.shape
    K, W, E = p['conv_w'].shape
    x32 = hs.astype(jnp.float32)
    xn = x32 * lax.rsqrt(jnp.mean(x32 * x32, -1, keepdims=True) + p['eps']) * p['norm_w'][0]
    x = jnp.einsum('btd,ed->bte', xn, p['in_wx'])
    z = jnp.einsum('btd,ed->bte', xn, p['in_wz'])
    zact = z * jax.nn.sigmoid(z)
    ys_all = []
    for k in range(K):
        xpad = jnp.pad(x, ((0, 0), (W - 1, 0), (0, 0)))
        xc = p['conv_b'][k][None, None, :] + jnp.zeros((Bn, T, E), jnp.float32)
        for w in range(W):
            xc = xc + p['conv_w'][k, w][None, None, :] * xpad[:, w:w + T, :]
        xc = xc * jax.nn.sigmoid(xc)
        dtr = jnp.einsum('bte,re->btr', xc, p['xdt_w'])
        delta = _softplus(jnp.einsum('btr,er->bte', dtr, p['dtp_w'][k]) + p['dtp_b'][k])
        Bm = jnp.einsum('bte,se->bts', xc, p['xB_w'])
        Cm = jnp.einsum('bte,se->bts', xc, p['xC_w'])
        A = -jnp.exp(p['AlogT'][k]).T                                    # (E, S)
        h = jnp.zeros((Bn, E, A.shape[1]), jnp.float32)
        yk = []
        for t in range(T):
            h = (h * jnp.exp(delta[:, t, :, None] * A[None])
                 + delta[:, t, :, None] * Bm[:, t, None, :] * xc[:, t, :, None])
            yk.append(jnp.sum(h * Cm[:, t, None, :], -1))
        y = jnp.stack(yk, axis=1)
        y = (y + xc * p['Dp'][k][None, None, :]) * zact
        ys_all.append(y)
    cat = jnp.concatenate(ys_all, axis=-1)                               # (B, T, K*E)
    agg = jnp.einsum('btf,ef->bte', cat, p['agg_w'])
    return jnp.einsum('bte,de->btd', agg, p['out_w'])


if __name__ == "__main__":
    key = jax.random.PRNGKey(0)
    kp, kx = jax.random.split(key)
    B, T, Dm = 2, 8, 32
    params = init_params(kp, d_model=Dm, d_state=16, d_conv=4, expand=2,
                         num_module=2)
    hidden_states = jax.random.normal(kx, (B, T, Dm), jnp.float32)

    out = htm_forward(hidden_states, params)
    out = jax.block_until_ready(out)

    ref = reference(hidden_states, params)
    assert out.shape == (B, T, Dm)
    np.testing.assert_allclose(np.asarray(out), np.asarray(ref),
                               rtol=2e-4, atol=2e-4)
    print("KERNEL_OK")
</pallas_src>

<mosaic_0001>
module attributes {stable_mosaic.version = 11 : i64} {
  func.func @_htm_kernel(%arg0: i32, %arg1: memref<1x8x32xf32, #tpu.memory_space<vmem>>, %arg2: memref<1x32xf32, #tpu.memory_space<vmem>>, %arg3: memref<64x32xf32, #tpu.memory_space<vmem>>, %arg4: memref<64x32xf32, #tpu.memory_space<vmem>>, %arg5: memref<2x4x64xf32, #tpu.memory_space<vmem>>, %arg6: memref<2x64xf32, #tpu.memory_space<vmem>>, %arg7: memref<2x64xf32, #tpu.memory_space<vmem>>, %arg8: memref<16x64xf32, #tpu.memory_space<vmem>>, %arg9: memref<16x64xf32, #tpu.memory_space<vmem>>, %arg10: memref<2x64x2xf32, #tpu.memory_space<vmem>>, %arg11: memref<2x64xf32, #tpu.memory_space<vmem>>, %arg12: memref<2x16x64xf32, #tpu.memory_space<vmem>>, %arg13: memref<2x64xf32, #tpu.memory_space<vmem>>, %arg14: memref<64x128xf32, #tpu.memory_space<vmem>>, %arg15: memref<32x64xf32, #tpu.memory_space<vmem>>, %arg16: memref<1x8x32xf32, #tpu.memory_space<vmem>>) attributes {dimension_semantics = [#tpu.dimension_semantics<parallel>], iteration_bounds = array<i64: 2>, scalar_prefetch = 0 : i64, scratch_operands = 0 : i64, tpu.core_type = #tpu.core_type<tc>, window_params = [{transform_indices = @transform_0, window_bounds = array<i64: 1, 8, 32>}, {pipeline_mode = #tpu.pipeline_mode<synchronous>, transform_indices = @transform_1, window_bounds = array<i64: 1, 32>}, {pipeline_mode = #tpu.pipeline_mode<synchronous>, transform_indices = @transform_2, window_bounds = array<i64: 64, 32>}, {pipeline_mode = #tpu.pipeline_mode<synchronous>, transform_indices = @transform_3, window_bounds = array<i64: 64, 32>}, {pipeline_mode = #tpu.pipeline_mode<synchronous>, transform_indices = @transform_4, window_bounds = array<i64: 2, 4, 64>}, {pipeline_mode = #tpu.pipeline_mode<synchronous>, transform_indices = @transform_5, window_bounds = array<i64: 2, 64>}, {pipeline_mode = #tpu.pipeline_mode<synchronous>, transform_indices = @transform_6, window_bounds = array<i64: 2, 64>}, {pipeline_mode = #tpu.pipeline_mode<synchronous>, transform_indices = @transform_7, window_bounds = array<i64: 16, 64>}, {pipeline_mode = #tpu.pipeline_mode<synchronous>, transform_indices = @transform_8, window_bounds = array<i64: 16, 64>}, {pipeline_mode = #tpu.pipeline_mode<synchronous>, transform_indices = @transform_9, window_bounds = array<i64: 2, 64, 2>}, {pipeline_mode = #tpu.pipeline_mode<synchronous>, transform_indices = @transform_10, window_bounds = array<i64: 2, 64>}, {pipeline_mode = #tpu.pipeline_mode<synchronous>, transform_indices = @transform_11, window_bounds = array<i64: 2, 16, 64>}, {pipeline_mode = #tpu.pipeline_mode<synchronous>, transform_indices = @transform_12, window_bounds = array<i64: 2, 64>}, {pipeline_mode = #tpu.pipeline_mode<synchronous>, transform_indices = @transform_13, window_bounds = array<i64: 64, 128>}, {pipeline_mode = #tpu.pipeline_mode<synchronous>, transform_indices = @transform_14, window_bounds = array<i64: 32, 64>}, {transform_indices = @transform_15, window_bounds = array<i64: 1, 8, 32>}]} {
    %c0 = arith.constant 0 : index
    %c0_0 = arith.constant 0 : index
    %c0_1 = arith.constant 0 : index
    %0 = vector.load %arg1[%c0, %c0_0, %c0_1] : memref<1x8x32xf32, #tpu.memory_space<vmem>>, vector<1x8x32xf32>
    %1 = vector.shape_cast %0 : vector<1x8x32xf32> to vector<8x32xf32>
    %2 = arith.mulf %1, %1 : vector<8x32xf32>
    %cst = arith.constant dense<0.000000e+00> : vector<8xf32>
    %3 = vector.multi_reduction <add>, %2, %cst [1] : vector<8x32xf32> to vector<8xf32>
    %4 = vector.shape_cast %3 : vector<8xf32> to vector<8x1xf32>
    %cst_2 = arith.constant 3.200000e+01 : f32
    %5 = vector.broadcast %cst_2 : f32 to vector<8x1xf32>
    %6 = arith.divf %4, %5 : vector<8x1xf32>
    %cst_3 = arith.constant 9.99999974E-6 : f32
    %7 = vector.broadcast %cst_3 : f32 to vector<8x1xf32>
    %8 = arith.addf %6, %7 : vector<8x1xf32>
    %9 = math.rsqrt %8 : vector<8x1xf32>
    %10 = vector.broadcast %9 : vector<8x1xf32> to vector<8x32xf32>
    %11 = arith.mulf %1, %10 : vector<8x32xf32>
    %c0_4 = arith.constant 0 : index
    %c0_5 = arith.constant 0 : index
    %12 = vector.load %arg2[%c0_4, %c0_5] : memref<1x32xf32, #tpu.memory_space<vmem>>, vector<1x32xf32>
    %13 = vector.broadcast %12 : vector<1x32xf32> to vector<8x32xf32>
    %14 = arith.mulf %11, %13 : vector<8x32xf32>
    %c0_6 = arith.constant 0 : index
    %c0_7 = arith.constant 0 : index
    %15 = vector.load %arg3[%c0_6, %c0_7] : memref<64x32xf32, #tpu.memory_space<vmem>>, vector<64x32xf32>
    %cst_8 = arith.constant dense<0.000000e+00> : vector<8x64xf32>
    %16 = tpu.matmul %14, %15, %cst_8 {dimension_numbers = #tpu.dot_dimension_numbers<[1], [1], [0], [0], [0, 0, 1, 0], [], []>} : vector<8x32xf32>, vector<64x32xf32>, vector<8x64xf32> -> vector<8x64xf32>
    %c0_9 = arith.constant 0 : index
    %c0_10 = arith.constant 0 : index
    %17 = vector.load %arg4[%c0_9, %c0_10] : memref<64x32xf32, #tpu.memory_space<vmem>>, vector<64x32xf32>
    %cst_11 = arith.constant dense<0.000000e+00> : vector<8x64xf32>
    %18 = tpu.matmul %14, %17, %cst_11 {dimension_numbers = #tpu.dot_dimension_numbers<[1], [1], [0], [0], [0, 0, 1, 0], [], []>} : vector<8x32xf32>, vector<64x32xf32>, vector<8x64xf32> -> vector<8x64xf32>
    %19 = arith.negf %18 : vector<8x64xf32>
    %20 = math.exp %19 : vector<8x64xf32>
    %cst_12 = arith.constant 1.000000e+00 : f32
    %21 = vector.broadcast %cst_12 : f32 to vector<8x64xf32>
    %22 = arith.addf %21, %20 : vector<8x64xf32>
    %23 = arith.divf %21, %22 : vector<8x64xf32>
    %24 = arith.mulf %18, %23 : vector<8x64xf32>
    %c0_13 = arith.constant 0 : index
    %c0_14 = arith.constant 0 : index
    %25 = vector.load %arg6[%c0_13, %c0_14] : memref<2x64xf32, #tpu.memory_space<vmem>>, vector<2x64xf32>
    %c0_15 = arith.constant 0 : index
    %c0_16 = arith.constant 0 : index
    %26 = vector.load %arg11[%c0_15, %c0_16] : memref<2x64xf32, #tpu.memory_space<vmem>>, vector<2x64xf32>
    %c0_17 = arith.constant 0 : index
    %c0_18 = arith.constant 0 : index
    %27 = vector.load %arg13[%c0_17, %c0_18] : memref<2x64xf32, #tpu.memory_space<vmem>>, vector<2x64xf32>
    %28 = tpu.iota {dimensions = array<i32: 0>} : vector<8x1xi32>
    %c8_i32 = arith.constant 8 : i32
    %c0_i32 = arith.constant 0 : i32
    %29 = arith.cmpi eq, %c8_i32, %c0_i32 : i32
    %c1_i32 = arith.constant 1 : i32
    %30 = arith.select %29, %c1_i32, %c8_i32 : i32
    %31 = vector.broadcast %30 : i32 to vector<8x1xi32>
    %32 = arith.remsi %28, %31 : vector<8x1xi32>
    %c0_i32_19 = arith.constant 0 : i32
    %33 = vector.broadcast %c0_i32_19 : i32 to vector<8x1xi32>
    %34 = arith.cmpi ne, %32, %33 : vector<8x1xi32>
    %c0_i32_20 = arith.constant 0 : i32
    %35 = vector.broadcast %c0_i32_20 : i32 to vector<8x1xi32>
    %36 = arith.cmpi slt, %32, %35 : vector<8x1xi32>
    %c0_i32_21 = arith.constant 0 : i32
    %37 = arith.cmpi slt, %30, %c0_i32_21 : i32
    %38 = vector.broadcast %37 : i1 to vector<8x1xi1>
    %39 = vector.broadcast %38 : vector<8x1xi1> to vector<8x1xi1>
    %40 = arith.xori %36, %39 : vector<8x1xi1>
    %41 = arith.andi %40, %34 : vector<8x1xi1>
    %42 = vector.broadcast %30 : i32 to vector<8x1xi32>
    %43 = arith.addi %32, %42 : vector<8x1xi32>
    %44 = arith.select %41, %43, %32 : vector<8x1xi1>, vector<8x1xi32>
    %c3_i32 = arith.constant 3 : i32
    %45 = tpu.dynamic_rotate %16 by %c3_i32 dim 0 : vector<8x64xf32>, i32 -> vector<8x64xf32>
    %c3_i32_22 = arith.constant 3 : i32
    %46 = vector.broadcast %c3_i32_22 : i32 to vector<8x1xi32>
    %47 = arith.cmpi sge, %44, %46 : vector<8x1xi32>
    %cst_23 = arith.constant 0.000000e+00 : f32
    %48 = vector.shape_cast %47 : vector<8x1xi1> to vector<8x1xi1>
    %49 = vector.broadcast %48 : vector<8x1xi1> to vector<8x64xi1>
    %50 = vector.broadcast %cst_23 : f32 to vector<8x64xf32>
    %51 = arith.select %49, %45, %50 : vector<8x64xi1>, vector<8x64xf32>
    %c2_i32 = arith.constant 2 : i32
    %52 = tpu.dynamic_rotate %16 by %c2_i32 dim 0 : vector<8x64xf32>, i32 -> vector<8x64xf32>
    %c2_i32_24 = arith.constant 2 : i32
    %53 = vector.broadcast %c2_i32_24 : i32 to vector<8x1xi32>
    %54 = arith.cmpi sge, %44, %53 : vector<8x1xi32>
    %cst_25 = arith.constant 0.000000e+00 : f32
    %55 = vector.shape_cast %54 : vector<8x1xi1> to vector<8x1xi1>
    %56 = vector.broadcast %55 : vector<8x1xi1> to vector<8x64xi1>
    %57 = vector.broadcast %cst_25 : f32 to vector<8x64xf32>
    %58 = arith.select %56, %52, %57 : vector<8x64xi1>, vector<8x64xf32>
    %c1_i32_26 = arith.constant 1 : i32
    %59 = tpu.dynamic_rotate %16 by %c1_i32_26 dim 0 : vector<8x64xf32>, i32 -> vector<8x64xf32>
    %c1_i32_27 = arith.constant 1 : i32
    %60 = vector.broadcast %c1_i32_27 : i32 to vector<8x1xi32>
    %61 = arith.cmpi sge, %44, %60 : vector<8x1xi32>
    %cst_28 = arith.constant 0.000000e+00 : f32
    %62 = vector.shape_cast %61 : vector<8x1xi1> to vector<8x1xi1>
    %63 = vector.broadcast %62 : vector<8x1xi1> to vector<8x64xi1>
    %64 = vector.broadcast %cst_28 : f32 to vector<8x64xf32>
    %65 = arith.select %63, %59, %64 : vector<8x64xi1>, vector<8x64xf32>
    %c0_29 = arith.constant 0 : index
    %c0_30 = arith.constant 0 : index
    %c0_31 = arith.constant 0 : index
    %66 = vector.load %arg5[%c0_29, %c0_30, %c0_31] : memref<2x4x64xf32, #tpu.memory_space<vmem>>, vector<1x4x64xf32>
    %67 = vector.shape_cast %66 : vector<1x4x64xf32> to vector<4x64xf32>
    %68 = vector.extract_strided_slice %25 {offsets = [0, 0], sizes = [1, 64], strides = [1, 1]} : vector<2x64xf32> to vector<1x64xf32>
    %69 = vector.extract_strided_slice %67 {offsets = [0, 0], sizes = [1, 64], strides = [1, 1]} : vector<4x64xf32> to vector<1x64xf32>
    %70 = vector.broadcast %69 : vector<1x64xf32> to vector<8x64xf32>
    %71 = arith.mulf %51, %70 : vector<8x64xf32>
    %72 = vector.broadcast %68 : vector<1x64xf32> to vector<8x64xf32>
    %73 = arith.addf %72, %71 : vector<8x64xf32>
    %74 = vector.extract_strided_slice %67 {offsets = [1, 0], sizes = [1, 64], strides = [1, 1]} : vector<4x64xf32> to vector<1x64xf32>
    %75 = vector.broadcast %74 : vector<1x64xf32> to vector<8x64xf32>
    %76 = arith.mulf %58, %75 : vector<8x64xf32>
    %77 = arith.addf %73, %76 : vector<8x64xf32>
    %78 = vector.extract_strided_slice %67 {offsets = [2, 0], sizes = [1, 64], strides = [1, 1]} : vector<4x64xf32> to vector<1x64xf32>
    %79 = vector.broadcast %78 : vector<1x64xf32> to vector<8x64xf32>
    %80 = arith.mulf %65, %79 : vector<8x64xf32>
    %81 = arith.addf %77, %80 : vector<8x64xf32>
    %82 = vector.extract_strided_slice %67 {offsets = [3, 0], sizes = [1, 64], strides = [1, 1]} : vector<4x64xf32> to vector<1x64xf32>
    %83 = vector.broadcast %82 : vector<1x64xf32> to vector<8x64xf32>
    %84 = arith.mulf %16, %83 : vector<8x64xf32>
    %85 = arith.addf %81, %84 : vector<8x64xf32>
    %86 = arith.negf %85 : vector<8x64xf32>
    %87 = math.exp %86 : vector<8x64xf32>
    %cst_32 = arith.constant 1.000000e+00 : f32
    %88 = vector.broadcast %cst_32 : f32 to vector<8x64xf32>
    %89 = arith.addf %88, %87 : vector<8x64xf32>
    %90 = arith.divf %88, %89 : vector<8x64xf32>
    %91 = arith.mulf %85, %90 : vector<8x64xf32>
    %c1 = arith.constant 1 : index
    %c0_33 = arith.constant 0 : index
    %c0_34 = arith.constant 0 : index
    %92 = vector.load %arg5[%c1, %c0_33, %c0_34] : memref<2x4x64xf32, #tpu.memory_space<vmem>>, vector<1x4x64xf32>
    %93 = vector.shape_cast %92 : vector<1x4x64xf32> to vector<4x64xf32>
    %94 = vector.extract_strided_slice %25 {offsets = [1, 0], sizes = [1, 64], strides = [1, 1]} : vector<2x64xf32> to vector<1x64xf32>
    %95 = vector.extract_strided_slice %93 {offsets = [0, 0], sizes = [1, 64], strides = [1, 1]} : vector<4x64xf32> to vector<1x64xf32>
    %96 = vector.broadcast %95 : vector<1x64xf32> to vector<8x64xf32>
    %97 = arith.mulf %51, %96 : vector<8x64xf32>
    %98 = vector.broadcast %94 : vector<1x64xf32> to vector<8x64xf32>
    %99 = arith.addf %98, %97 : vector<8x64xf32>
    %100 = vector.extract_strided_slice %93 {offsets = [1, 0], sizes = [1, 64], strides = [1, 1]} : vector<4x64xf32> to vector<1x64xf32>
    %101 = vector.broadcast %100 : vector<1x64xf32> to vector<8x64xf32>
    %102 = arith.mulf %58, %101 : vector<8x64xf32>
    %103 = arith.addf %99, %102 : vector<8x64xf32>
    %104 = vector.extract_strided_slice %93 {offsets = [2, 0], sizes = [1, 64], strides = [1, 1]} : vector<4x64xf32> to vector<1x64xf32>
    %105 = vector.broadcast %104 : vector<1x64xf32> to vector<8x64xf32>
    %106 = arith.mulf %65, %105 : vector<8x64xf32>
    %107 = arith.addf %103, %106 : vector<8x64xf32>
    %108 = vector.extract_strided_slice %93 {offsets = [3, 0], sizes = [1, 64], strides = [1, 1]} : vector<4x64xf32> to vector<1x64xf32>
    %109 = vector.broadcast %108 : vector<1x64xf32> to vector<8x64xf32>
    %110 = arith.mulf %16, %109 : vector<8x64xf32>
    %111 = arith.addf %107, %110 : vector<8x64xf32>
    %112 = arith.negf %111 : vector<8x64xf32>
    %113 = math.exp %112 : vector<8x64xf32>
    %cst_35 = arith.constant 1.000000e+00 : f32
    %114 = vector.broadcast %cst_35 : f32 to vector<8x64xf32>
    %115 = arith.addf %114, %113 : vector<8x64xf32>
    %116 = arith.divf %114, %115 : vector<8x64xf32>
    %117 = arith.mulf %111, %116 : vector<8x64xf32>
    %118 = tpu.concatenate %91, %117 in 0 : vector<8x64xf32>, vector<8x64xf32> -> vector<16x64xf32>
    %c0_36 = arith.constant 0 : index
    %c0_37 = arith.constant 0 : index
    %119 = vector.load %arg7[%c0_36, %c0_37] : memref<2x64xf32, #tpu.memory_space<vmem>>, vector<2x64xf32>
    %cst_38 = arith.constant dense<0.000000e+00> : vector<16x2xf32>
    %120 = tpu.matmul %118, %119, %cst_38 {dimension_numbers = #tpu.dot_dimension_numbers<[1], [1], [0], [0], [0, 0, 1, 0], [], []>} : vector<16x64xf32>, vector<2x64xf32>, vector<16x2xf32> -> vector<16x2xf32>
    %c0_39 = arith.constant 0 : index
    %c0_40 = arith.constant 0 : index
    %121 = vector.load %arg8[%c0_39, %c0_40] : memref<16x64xf32, #tpu.memory_space<vmem>>, vector<16x64xf32>
    %cst_41 = arith.constant dense<0.000000e+00> : vector<16x16xf32>
    %122 = tpu.matmul %118, %121, %cst_41 {dimension_numbers = #tpu.dot_dimension_numbers<[1], [1], [0], [0], [0, 0, 1, 0], [], []>} : vector<16x64xf32>, vector<16x64xf32>, vector<16x16xf32> -> vector<16x16xf32>
    %c0_42 = arith.constant 0 : index
    %c0_43 = arith.constant 0 : index
    %123 = vector.load %arg9[%c0_42, %c0_43] : memref<16x64xf32, #tpu.memory_space<vmem>>, vector<16x64xf32>
    %cst_44 = arith.constant dense<0.000000e+00> : vector<16x16xf32>
    %124 = tpu.matmul %118, %123, %cst_44 {dimension_numbers = #tpu.dot_dimension_numbers<[1], [1], [0], [0], [0, 0, 1, 0], [], []>} : vector<16x64xf32>, vector<16x64xf32>, vector<16x16xf32> -> vector<16x16xf32>
    %125 = vector.extract_strided_slice %120 {offsets = [0, 0], sizes = [8, 2], strides = [1, 1]} : vector<16x2xf32> to vector<8x2xf32>
    %c0_45 = arith.constant 0 : index
    %c0_46 = arith.constant 0 : index
    %c0_47 = arith.constant 0 : index
    %126 = vector.load %arg10[%c0_45, %c0_46, %c0_47] : memref<2x64x2xf32, #tpu.memory_space<vmem>>, vector<1x64x2xf32>
    %127 = vector.shape_cast %126 : vector<1x64x2xf32> to vector<64x2xf32>
    %cst_48 = arith.constant dense<0.000000e+00> : vector<8x64xf32>
    %128 = tpu.matmul %125, %127, %cst_48 {dimension_numbers = #tpu.dot_dimension_numbers<[1], [1], [0], [0], [0, 0, 1, 0], [], []>} : vector<8x2xf32>, vector<64x2xf32>, vector<8x64xf32> -> vector<8x64xf32>
    %129 = vector.extract_strided_slice %26 {offsets = [0, 0], sizes = [1, 64], strides = [1, 1]} : vector<2x64xf32> to vector<1x64xf32>
    %130 = vector.broadcast %129 : vector<1x64xf32> to vector<8x64xf32>
    %131 = arith.addf %128, %130 : vector<8x64xf32>
    %cst_49 = arith.constant 2.000000e+01 : f32
    %132 = vector.broadcast %cst_49 : f32 to vector<8x64xf32>
    %133 = arith.cmpf ogt, %131, %132 : vector<8x64xf32>
    %cst_50 = arith.constant 2.000000e+01 : f32
    %134 = vector.broadcast %cst_50 : f32 to vector<8x64xf32>
    %135 = arith.minimumf %131, %134 : vector<8x64xf32>
    %136 = math.exp %135 : vector<8x64xf32>
    %137 = math.log1p %136 : vector<8x64xf32>
    %138 = arith.select %133, %131, %137 : vector<8x64xi1>, vector<8x64xf32>
    %139 = vector.extract_strided_slice %122 {offsets = [0, 0], sizes = [8, 16], strides = [1, 1]} : vector<16x16xf32> to vector<8x16xf32>
    %140 = vector.extract_strided_slice %124 {offsets = [0, 0], sizes = [8, 16], strides = [1, 1]} : vector<16x16xf32> to vector<8x16xf32>
    %c0_51 = arith.constant 0 : index
    %c0_52 = arith.constant 0 : index
    %c0_53 = arith.constant 0 : index
    %141 = vector.load %arg12[%c0_51, %c0_52, %c0_53] : memref<2x16x64xf32, #tpu.memory_space<vmem>>, vector<1x16x64xf32>
    %142 = vector.shape_cast %141 : vector<1x16x64xf32> to vector<16x64xf32>
    %143 = math.exp %142 : vector<16x64xf32>
    %cst_54 = arith.constant 0.000000e+00 : f32
    %144 = vector.broadcast %cst_54 : f32 to vector<16x64xf32>
    %145 = arith.subf %144, %143 : vector<16x64xf32>
    %146 = vector.shape_cast %138 : vector<8x64xf32> to vector<8x1x64xf32>
    %147 = vector.shape_cast %145 : vector<16x64xf32> to vector<1x16x64xf32>
    %148 = vector.broadcast %146 : vector<8x1x64xf32> to vector<8x16x64xf32>
    %149 = vector.broadcast %147 : vector<1x16x64xf32> to vector<8x16x64xf32>
    %150 = arith.mulf %148, %149 : vector<8x16x64xf32>
    %151 = math.exp %150 : vector<8x16x64xf32>
    %152 = vector.shape_cast %139 : vector<8x16xf32> to vector<8x16x1xf32>
    %153 = arith.mulf %138, %91 : vector<8x64xf32>
    %154 = vector.shape_cast %153 : vector<8x64xf32> to vector<8x1x64xf32>
    %155 = vector.broadcast %152 : vector<8x16x1xf32> to vector<8x16x64xf32>
    %156 = vector.broadcast %154 : vector<8x1x64xf32> to vector<8x16x64xf32>
    %157 = arith.mulf %155, %156 : vector<8x16x64xf32>
    %158 = vector.shape_cast %151 : vector<8x16x64xf32> to vector<1x8x16x64xf32>
    %159 = vector.shape_cast %157 : vector<8x16x64xf32> to vector<1x8x16x64xf32>
    %160 = vector.shape_cast %140 : vector<8x16xf32> to vector<1x8x16xf32>
    %cst_55 = arith.constant 0.000000e+00 : f32
    %161 = vector.broadcast %cst_55 : f32 to vector<1x16x64xf32>
    %162 = vector.extract_strided_slice %158 {offsets = [0, 0, 0, 0], sizes = [1, 1, 16, 64], strides = [1, 1, 1, 1]} : vector<1x8x16x64xf32> to vector<1x1x16x64xf32>
    %163 = vector.shape_cast %162 : vector<1x1x16x64xf32> to vector<1x16x64xf32>
    %164 = arith.mulf %161, %163 : vector<1x16x64xf32>
    %165 = vector.extract_strided_slice %159 {offsets = [0, 0, 0, 0], sizes = [1, 1, 16, 64], strides = [1, 1, 1, 1]} : vector<1x8x16x64xf32> to vector<1x1x16x64xf32>
    %166 = vector.shape_cast %165 : vector<1x1x16x64xf32> to vector<1x16x64xf32>
    %167 = arith.addf %164, %166 : vector<1x16x64xf32>
    %168 = vector.extract_strided_slice %160 {offsets = [0, 0, 0], sizes = [1, 1, 16], strides = [1, 1, 1]} : vector<1x8x16xf32> to vector<1x1x16xf32>
    %169 = vector.shape_cast %168 : vector<1x1x16xf32> to vector<1x16xf32>
    %170 = vector.shape_cast %169 : vector<1x16xf32> to vector<1x16x1xf32>
    %171 = vector.broadcast %170 : vector<1x16x1xf32> to vector<1x16x64xf32>
    %172 = arith.mulf %167, %171 : vector<1x16x64xf32>
    %cst_56 = arith.constant dense<0.000000e+00> : vector<1x64xf32>
    %173 = vector.multi_reduction <add>, %172, %cst_56 [1] : vector<1x16x64xf32> to vector<1x64xf32>
    %174 = vector.extract_strided_slice %158 {offsets = [0, 1, 0, 0], sizes = [1, 1, 16, 64], strides = [1, 1, 1, 1]} : vector<1x8x16x64xf32> to vector<1x1x16x64xf32>
    %175 = vector.shape_cast %174 : vector<1x1x16x64xf32> to vector<1x16x64xf32>
    %176 = arith.mulf %167, %175 : vector<1x16x64xf32>
    %177 = vector.extract_strided_slice %159 {offsets = [0, 1, 0, 0], sizes = [1, 1, 16, 64], strides = [1, 1, 1, 1]} : vector<1x8x16x64xf32> to vector<1x1x16x64xf32>
    %178 = vector.shape_cast %177 : vector<1x1x16x64xf32> to vector<1x16x64xf32>
    %179 = arith.addf %176, %178 : vector<1x16x64xf32>
    %180 = vector.extract_strided_slice %160 {offsets = [0, 1, 0], sizes = [1, 1, 16], strides = [1, 1, 1]} : vector<1x8x16xf32> to vector<1x1x16xf32>
    %181 = vector.shape_cast %180 : vector<1x1x16xf32> to vector<1x16xf32>
    %182 = vector.shape_cast %181 : vector<1x16xf32> to vector<1x16x1xf32>
    %183 = vector.broadcast %182 : vector<1x16x1xf32> to vector<1x16x64xf32>
    %184 = arith.mulf %179, %183 : vector<1x16x64xf32>
    %cst_57 = arith.constant dense<0.000000e+00> : vector<1x64xf32>
    %185 = vector.multi_reduction <add>, %184, %cst_57 [1] : vector<1x16x64xf32> to vector<1x64xf32>
    %186 = vector.extract_strided_slice %158 {offsets = [0, 2, 0, 0], sizes = [1, 1, 16, 64], strides = [1, 1, 1, 1]} : vector<1x8x16x64xf32> to vector<1x1x16x64xf32>
    %187 = vector.shape_cast %186 : vector<1x1x16x64xf32> to vector<1x16x64xf32>
    %188 = arith.mulf %179, %187 : vector<1x16x64xf32>
    %189 = vector.extract_strided_slice %159 {offsets = [0, 2, 0, 0], sizes = [1, 1, 16, 64], strides = [1, 1, 1, 1]} : vector<1x8x16x64xf32> to vector<1x1x16x64xf32>
    %190 = vector.shape_cast %189 : vector<1x1x16x64xf32> to vector<1x16x64xf32>
    %191 = arith.addf %188, %190 : vector<1x16x64xf32>
    %192 = vector.extract_strided_slice %160 {offsets = [0, 2, 0], sizes = [1, 1, 16], strides = [1, 1, 1]} : vector<1x8x16xf32> to vector<1x1x16xf32>
    %193 = vector.shape_cast %192 : vector<1x1x16xf32> to vector<1x16xf32>
    %194 = vector.shape_cast %193 : vector<1x16xf32> to vector<1x16x1xf32>
    %195 = vector.broadcast %194 : vector<1x16x1xf32> to vector<1x16x64xf32>
    %196 = arith.mulf %191, %195 : vector<1x16x64xf32>
    %cst_58 = arith.constant dense<0.000000e+00> : vector<1x64xf32>
    %197 = vector.multi_reduction <add>, %196, %cst_58 [1] : vector<1x16x64xf32> to vector<1x64xf32>
    %198 = vector.extract_strided_slice %158 {offsets = [0, 3, 0, 0], sizes = [1, 1, 16, 64], strides = [1, 1, 1, 1]} : vector<1x8x16x64xf32> to vector<1x1x16x64xf32>
    %199 = vector.shape_cast %198 : vector<1x1x16x64xf32> to vector<1x16x64xf32>
    %200 = arith.mulf %191, %199 : vector<1x16x64xf32>
    %201 = vector.extract_strided_slice %159 {offsets = [0, 3, 0, 0], sizes = [1, 1, 16, 64], strides = [1, 1, 1, 1]} : vector<1x8x16x64xf32> to vector<1x1x16x64xf32>
    %202 = vector.shape_cast %201 : vector<1x1x16x64xf32> to vector<1x16x64xf32>
    %203 = arith.addf %200, %202 : vector<1x16x64xf32>
    %204 = vector.extract_strided_slice %160 {offsets = [0, 3, 0], sizes = [1, 1, 16], strides = [1, 1, 1]} : vector<1x8x16xf32> to vector<1x1x16xf32>
    %205 = vector.shape_cast %204 : vector<1x1x16xf32> to vector<1x16xf32>
    %206 = vector.shape_cast %205 : vector<1x16xf32> to vector<1x16x1xf32>
    %207 = vector.broadcast %206 : vector<1x16x1xf32> to vector<1x16x64xf32>
    %208 = arith.mulf %203, %207 : vector<1x16x64xf32>
    %cst_59 = arith.constant dense<0.000000e+00> : vector<1x64xf32>
    %209 = vector.multi_reduction <add>, %208, %cst_59 [1] : vector<1x16x64xf32> to vector<1x64xf32>
    %210 = vector.extract_strided_slice %158 {offsets = [0, 4, 0, 0], sizes = [1, 1, 16, 64], strides = [1, 1, 1, 1]} : vector<1x8x16x64xf32> to vector<1x1x16x64xf32>
    %211 = vector.shape_cast %210 : vector<1x1x16x64xf32> to vector<1x16x64xf32>
    %212 = arith.mulf %203, %211 : vector<1x16x64xf32>
    %213 = vector.extract_strided_slice %159 {offsets = [0, 4, 0, 0], sizes = [1, 1, 16, 64], strides = [1, 1, 1, 1]} : vector<1x8x16x64xf32> to vector<1x1x16x64xf32>
    %214 = vector.shape_cast %213 : vector<1x1x16x64xf32> to vector<1x16x64xf32>
    %215 = arith.addf %212, %214 : vector<1x16x64xf32>
    %216 = vector.extract_strided_slice %160 {offsets = [0, 4, 0], sizes = [1, 1, 16], strides = [1, 1, 1]} : vector<1x8x16xf32> to vector<1x1x16xf32>
    %217 = vector.shape_cast %216 : vector<1x1x16xf32> to vector<1x16xf32>
    %218 = vector.shape_cast %217 : vector<1x16xf32> to vector<1x16x1xf32>
    %219 = vector.broadcast %218 : vector<1x16x1xf32> to vector<1x16x64xf32>
    %220 = arith.mulf %215, %219 : vector<1x16x64xf32>
    %cst_60 = arith.constant dense<0.000000e+00> : vector<1x64xf32>
    %221 = vector.multi_reduction <add>, %220, %cst_60 [1] : vector<1x16x64xf32> to vector<1x64xf32>
    %222 = vector.extract_strided_slice %158 {offsets = [0, 5, 0, 0], sizes = [1, 1, 16, 64], strides = [1, 1, 1, 1]} : vector<1x8x16x64xf32> to vector<1x1x16x64xf32>
    %223 = vector.shape_cast %222 : vector<1x1x16x64xf32> to vector<1x16x64xf32>
    %224 = arith.mulf %215, %223 : vector<1x16x64xf32>
    %225 = vector.extract_strided_slice %159 {offsets = [0, 5, 0, 0], sizes = [1, 1, 16, 64], strides = [1, 1, 1, 1]} : vector<1x8x16x64xf32> to vector<1x1x16x64xf32>
    %226 = vector.shape_cast %225 : vector<1x1x16x64xf32> to vector<1x16x64xf32>
    %227 = arith.addf %224, %226 : vector<1x16x64xf32>
    %228 = vector.extract_strided_slice %160 {offsets = [0, 5, 0], sizes = [1, 1, 16], strides = [1, 1, 1]} : vector<1x8x16xf32> to vector<1x1x16xf32>
    %229 = vector.shape_cast %228 : vector<1x1x16xf32> to vector<1x16xf32>
    %230 = vector.shape_cast %229 : vector<1x16xf32> to vector<1x16x1xf32>
    %231 = vector.broadcast %230 : vector<1x16x1xf32> to vector<1x16x64xf32>
    %232 = arith.mulf %227, %231 : vector<1x16x64xf32>
    %cst_61 = arith.constant dense<0.000000e+00> : vector<1x64xf32>
    %233 = vector.multi_reduction <add>, %232, %cst_61 [1] : vector<1x16x64xf32> to vector<1x64xf32>
    %234 = vector.extract_strided_slice %158 {offsets = [0, 6, 0, 0], sizes = [1, 1, 16, 64], strides = [1, 1, 1, 1]} : vector<1x8x16x64xf32> to vector<1x1x16x64xf32>
    %235 = vector.shape_cast %234 : vector<1x1x16x64xf32> to vector<1x16x64xf32>
    %236 = arith.mulf %227, %235 : vector<1x16x64xf32>
    %237 = vector.extract_strided_slice %159 {offsets = [0, 6, 0, 0], sizes = [1, 1, 16, 64], strides = [1, 1, 1, 1]} : vector<1x8x16x64xf32> to vector<1x1x16x64xf32>
    %238 = vector.shape_cast %237 : vector<1x1x16x64xf32> to vector<1x16x64xf32>
    %239 = arith.addf %236, %238 : vector<1x16x64xf32>
    %240 = vector.extract_strided_slice %160 {offsets = [0, 6, 0], sizes = [1, 1, 16], strides = [1, 1, 1]} : vector<1x8x16xf32> to vector<1x1x16xf32>
    %241 = vector.shape_cast %240 : vector<1x1x16xf32> to vector<1x16xf32>
    %242 = vector.shape_cast %241 : vector<1x16xf32> to vector<1x16x1xf32>
    %243 = vector.broadcast %242 : vector<1x16x1xf32> to vector<1x16x64xf32>
    %244 = arith.mulf %239, %243 : vector<1x16x64xf32>
    %cst_62 = arith.constant dense<0.000000e+00> : vector<1x64xf32>
    %245 = vector.multi_reduction <add>, %244, %cst_62 [1] : vector<1x16x64xf32> to vector<1x64xf32>
    %246 = vector.extract_strided_slice %158 {offsets = [0, 7, 0, 0], sizes = [1, 1, 16, 64], strides = [1, 1, 1, 1]} : vector<1x8x16x64xf32> to vector<1x1x16x64xf32>
    %247 = vector.shape_cast %246 : vector<1x1x16x64xf32> to vector<1x16x64xf32>
    %248 = arith.mulf %239, %247 : vector<1x16x64xf32>
    %249 = vector.extract_strided_slice %159 {offsets = [0, 7, 0, 0], sizes = [1, 1, 16, 64], strides = [1, 1, 1, 1]} : vector<1x8x16x64xf32> to vector<1x1x16x64xf32>
    %250 = vector.shape_cast %249 : vector<1x1x16x64xf32> to vector<1x16x64xf32>
    %251 = arith.addf %248, %250 : vector<1x16x64xf32>
    %252 = vector.extract_strided_slice %160 {offsets = [0, 7, 0], sizes = [1, 1, 16], strides = [1, 1, 1]} : vector<1x8x16xf32> to vector<1x1x16xf32>
    %253 = vector.shape_cast %252 : vector<1x1x16xf32> to vector<1x16xf32>
    %254 = vector.shape_cast %253 : vector<1x16xf32> to vector<1x16x1xf32>
    %255 = vector.broadcast %254 : vector<1x16x1xf32> to vector<1x16x64xf32>
    %256 = arith.mulf %251, %255 : vector<1x16x64xf32>
    %cst_63 = arith.constant dense<0.000000e+00> : vector<1x64xf32>
    %257 = vector.multi_reduction <add>, %256, %cst_63 [1] : vector<1x16x64xf32> to vector<1x64xf32>
    %258 = vector.shape_cast %173 : vector<1x64xf32> to vector<1x1x64xf32>
    %259 = vector.shape_cast %185 : vector<1x64xf32> to vector<1x1x64xf32>
    %260 = vector.shape_cast %197 : vector<1x64xf32> to vector<1x1x64xf32>
    %261 = vector.shape_cast %209 : vector<1x64xf32> to vector<1x1x64xf32>
    %262 = vector.shape_cast %221 : vector<1x64xf32> to vector<1x1x64xf32>
    %263 = vector.shape_cast %233 : vector<1x64xf32> to vector<1x1x64xf32>
    %264 = vector.shape_cast %245 : vector<1x64xf32> to vector<1x1x64xf32>
    %265 = vector.shape_cast %257 : vector<1x64xf32> to vector<1x1x64xf32>
    %266 = tpu.concatenate %258, %259, %260, %261, %262, %263, %264, %265 in 1 : vector<1x1x64xf32>, vector<1x1x64xf32>, vector<1x1x64xf32>, vector<1x1x64xf32>, vector<1x1x64xf32>, vector<1x1x64xf32>, vector<1x1x64xf32>, vector<1x1x64xf32> -> vector<1x8x64xf32>
    %267 = vector.shape_cast %266 : vector<1x8x64xf32> to vector<8x64xf32>
    %268 = vector.extract_strided_slice %27 {offsets = [0, 0], sizes = [1, 64], strides = [1, 1]} : vector<2x64xf32> to vector<1x64xf32>
    %269 = vector.broadcast %268 : vector<1x64xf32> to vector<8x64xf32>
    %270 = arith.mulf %91, %269 : vector<8x64xf32>
    %271 = arith.addf %267, %270 : vector<8x64xf32>
    %272 = arith.mulf %271, %24 : vector<8x64xf32>
    %273 = vector.extract_strided_slice %120 {offsets = [8, 0], sizes = [8, 2], strides = [1, 1]} : vector<16x2xf32> to vector<8x2xf32>
    %c1_64 = arith.constant 1 : index
    %c0_65 = arith.constant 0 : index
    %c0_66 = arith.constant 0 : index
    %274 = vector.load %arg10[%c1_64, %c0_65, %c0_66] : memref<2x64x2xf32, #tpu.memory_space<vmem>>, vector<1x64x2xf32>
    %275 = vector.shape_cast %274 : vector<1x64x2xf32> to vector<64x2xf32>
    %cst_67 = arith.constant dense<0.000000e+00> : vector<8x64xf32>
    %276 = tpu.matmul %273, %275, %cst_67 {dimension_numbers = #tpu.dot_dimension_numbers<[1], [1], [0], [0], [0, 0, 1, 0], [], []>} : vector<8x2xf32>, vector<64x2xf32>, vector<8x64xf32> -> vector<8x64xf32>
    %277 = vector.extract_strided_slice %26 {offsets = [1, 0], sizes = [1, 64], strides = [1, 1]} : vector<2x64xf32> to vector<1x64xf32>
    %278 = vector.broadcast %277 : vector<1x64xf32> to vector<8x64xf32>
    %279 = arith.addf %276, %278 : vector<8x64xf32>
    %cst_68 = arith.constant 2.000000e+01 : f32
    %280 = vector.broadcast %cst_68 : f32 to vector<8x64xf32>
    %281 = arith.cmpf ogt, %279, %280 : vector<8x64xf32>
    %cst_69 = arith.constant 2.000000e+01 : f32
    %282 = vector.broadcast %cst_69 : f32 to vector<8x64xf32>
    %283 = arith.minimumf %279, %282 : vector<8x64xf32>
    %284 = math.exp %283 : vector<8x64xf32>
    %285 = math.log1p %284 : vector<8x64xf32>
    %286 = arith.select %281, %279, %285 : vector<8x64xi1>, vector<8x64xf32>
    %287 = vector.extract_strided_slice %122 {offsets = [8, 0], sizes = [8, 16], strides = [1, 1]} : vector<16x16xf32> to vector<8x16xf32>
    %288 = vector.extract_strided_slice %124 {offsets = [8, 0], sizes = [8, 16], strides = [1, 1]} : vector<16x16xf32> to vector<8x16xf32>
    %c1_70 = arith.constant 1 : index
    %c0_71 = arith.constant 0 : index
    %c0_72 = arith.constant 0 : index
    %289 = vector.load %arg12[%c1_70, %c0_71, %c0_72] : memref<2x16x64xf32, #tpu.memory_space<vmem>>, vector<1x16x64xf32>
    %290 = vector.shape_cast %289 : vector<1x16x64xf32> to vector<16x64xf32>
    %291 = math.exp %290 : vector<16x64xf32>
    %cst_73 = arith.constant 0.000000e+00 : f32
    %292 = vector.broadcast %cst_73 : f32 to vector<16x64xf32>
    %293 = arith.subf %292, %291 : vector<16x64xf32>
    %294 = vector.shape_cast %286 : vector<8x64xf32> to vector<8x1x64xf32>
    %295 = vector.shape_cast %293 : vector<16x64xf32> to vector<1x16x64xf32>
    %296 = vector.broadcast %294 : vector<8x1x64xf32> to vector<8x16x64xf32>
    %297 = vector.broadcast %295 : vector<1x16x64xf32> to vector<8x16x64xf32>
    %298 = arith.mulf %296, %297 : vector<8x16x64xf32>
    %299 = math.exp %298 : vector<8x16x64xf32>
    %300 = vector.shape_cast %287 : vector<8x16xf32> to vector<8x16x1xf32>
    %301 = arith.mulf %286, %117 : vector<8x64xf32>
    %302 = vector.shape_cast %301 : vector<8x64xf32> to vector<8x1x64xf32>
    %303 = vector.broadcast %300 : vector<8x16x1xf32> to vector<8x16x64xf32>
    %304 = vector.broadcast %302 : vector<8x1x64xf32> to vector<8x16x64xf32>
    %305 = arith.mulf %303, %304 : vector<8x16x64xf32>
    %306 = vector.shape_cast %299 : vector<8x16x64xf32> to vector<1x8x16x64xf32>
    %307 = vector.shape_cast %305 : vector<8x16x64xf32> to vector<1x8x16x64xf32>
    %308 = vector.shape_cast %288 : vector<8x16xf32> to vector<1x8x16xf32>
    %cst_74 = arith.constant 0.000000e+00 : f32
    %309 = vector.broadcast %cst_74 : f32 to vector<1x16x64xf32>
    %310 = vector.extract_strided_slice %306 {offsets = [0, 0, 0, 0], sizes = [1, 1, 16, 64], strides = [1, 1, 1, 1]} : vector<1x8x16x64xf32> to vector<1x1x16x64xf32>
    %311 = vector.shape_cast %310 : vector<1x1x16x64xf32> to vector<1x16x64xf32>
    %312 = arith.mulf %309, %311 : vector<1x16x64xf32>
    %313 = vector.extract_strided_slice %307 {offsets = [0, 0, 0, 0], sizes = [1, 1, 16, 64], strides = [1, 1, 1, 1]} : vector<1x8x16x64xf32> to vector<1x1x16x64xf32>
    %314 = vector.shape_cast %313 : vector<1x1x16x64xf32> to vector<1x16x64xf32>
    %315 = arith.addf %312, %314 : vector<1x16x64xf32>
    %316 = vector.extract_strided_slice %308 {offsets = [0, 0, 0], sizes = [1, 1, 16], strides = [1, 1, 1]} : vector<1x8x16xf32> to vector<1x1x16xf32>
    %317 = vector.shape_cast %316 : vector<1x1x16xf32> to vector<1x16xf32>
    %318 = vector.shape_cast %317 : vector<1x16xf32> to vector<1x16x1xf32>
    %319 = vector.broadcast %318 : vector<1x16x1xf32> to vector<1x16x64xf32>
    %320 = arith.mulf %315, %319 : vector<1x16x64xf32>
    %cst_75 = arith.constant dense<0.000000e+00> : vector<1x64xf32>
    %321 = vector.multi_reduction <add>, %320, %cst_75 [1] : vector<1x16x64xf32> to vector<1x64xf32>
    %322 = vector.extract_strided_slice %306 {offsets = [0, 1, 0, 0], sizes = [1, 1, 16, 64], strides = [1, 1, 1, 1]} : vector<1x8x16x64xf32> to vector<1x1x16x64xf32>
    %323 = vector.shape_cast %322 : vector<1x1x16x64xf32> to vector<1x16x64xf32>
    %324 = arith.mulf %315, %323 : vector<1x16x64xf32>
    %325 = vector.extract_strided_slice %307 {offsets = [0, 1, 0, 0], sizes = [1, 1, 16, 64], strides = [1, 1, 1, 1]} : vector<1x8x16x64xf32> to vector<1x1x16x64xf32>
    %326 = vector.shape_cast %325 : vector<1x1x16x64xf32> to vector<1x16x64xf32>
    %327 = arith.addf %324, %326 : vector<1x16x64xf32>
    %328 = vector.extract_strided_slice %308 {offsets = [0, 1, 0], sizes = [1, 1, 16], strides = [1, 1, 1]} : vector<1x8x16xf32> to vector<1x1x16xf32>
    %329 = vector.shape_cast %328 : vector<1x1x16xf32> to vector<1x16xf32>
    %330 = vector.shape_cast %329 : vector<1x16xf32> to vector<1x16x1xf32>
    %331 = vector.broadcast %330 : vector<1x16x1xf32> to vector<1x16x64xf32>
    %332 = arith.mulf %327, %331 : vector<1x16x64xf32>
    %cst_76 = arith.constant dense<0.000000e+00> : vector<1x64xf32>
    %333 = vector.multi_reduction <add>, %332, %cst_76 [1] : vector<1x16x64xf32> to vector<1x64xf32>
    %334 = vector.extract_strided_slice %306 {offsets = [0, 2, 0, 0], sizes = [1, 1, 16, 64], strides = [1, 1, 1, 1]} : vector<1x8x16x64xf32> to vector<1x1x16x64xf32>
    %335 = vector.shape_cast %334 : vector<1x1x16x64xf32> to vector<1x16x64xf32>
    %336 = arith.mulf %327, %335 : vector<1x16x64xf32>
    %337 = vector.extract_strided_slice %307 {offsets = [0, 2, 0, 0], sizes = [1, 1, 16, 64], strides = [1, 1, 1, 1]} : vector<1x8x16x64xf32> to vector<1x1x16x64xf32>
    %338 = vector.shape_cast %337 : vector<1x1x16x64xf32> to vector<1x16x64xf32>
    %339 = arith.addf %336, %338 : vector<1x16x64xf32>
    %340 = vector.extract_strided_slice %308 {offsets = [0, 2, 0], sizes = [1, 1, 16], strides = [1, 1, 1]} : vector<1x8x16xf32> to vector<1x1x16xf32>
    %341 = vector.shape_cast %340 : vector<1x1x16xf32> to vector<1x16xf32>
    %342 = vector.shape_cast %341 : vector<1x16xf32> to vector<1x16x1xf32>
    %343 = vector.broadcast %342 : vector<1x16x1xf32> to vector<1x16x64xf32>
    %344 = arith.mulf %339, %343 : vector<1x16x64xf32>
    %cst_77 = arith.constant dense<0.000000e+00> : vector<1x64xf32>
    %345 = vector.multi_reduction <add>, %344, %cst_77 [1] : vector<1x16x64xf32> to vector<1x64xf32>
    %346 = vector.extract_strided_slice %306 {offsets = [0, 3, 0, 0], sizes = [1, 1, 16, 64], strides = [1, 1, 1, 1]} : vector<1x8x16x64xf32> to vector<1x1x16x64xf32>
    %347 = vector.shape_cast %346 : vector<1x1x16x64xf32> to vector<1x16x64xf32>
    %348 = arith.mulf %339, %347 : vector<1x16x64xf32>
    %349 = vector.extract_strided_slice %307 {offsets = [0, 3, 0, 0], sizes = [1, 1, 16, 64], strides = [1, 1, 1, 1]} : vector<1x8x16x64xf32> to vector<1x1x16x64xf32>
    %350 = vector.shape_cast %349 : vector<1x1x16x64xf32> to vector<1x16x64xf32>
    %351 = arith.addf %348, %350 : vector<1x16x64xf32>
    %352 = vector.extract_strided_slice %308 {offsets = [0, 3, 0], sizes = [1, 1, 16], strides = [1, 1, 1]} : vector<1x8x16xf32> to vector<1x1x16xf32>
    %353 = vector.shape_cast %352 : vector<1x1x16xf32> to vector<1x16xf32>
    %354 = vector.shape_cast %353 : vector<1x16xf32> to vector<1x16x1xf32>
    %355 = vector.broadcast %354 : vector<1x16x1xf32> to vector<1x16x64xf32>
    %356 = arith.mulf %351, %355 : vector<1x16x64xf32>
    %cst_78 = arith.constant dense<0.000000e+00> : vector<1x64xf32>
    %357 = vector.multi_reduction <add>, %356, %cst_78 [1] : vector<1x16x64xf32> to vector<1x64xf32>
    %358 = vector.extract_strided_slice %306 {offsets = [0, 4, 0, 0], sizes = [1, 1, 16, 64], strides = [1, 1, 1, 1]} : vector<1x8x16x64xf32> to vector<1x1x16x64xf32>
    %359 = vector.shape_cast %358 : vector<1x1x16x64xf32> to vector<1x16x64xf32>
    %360 = arith.mulf %351, %359 : vector<1x16x64xf32>
    %361 = vector.extract_strided_slice %307 {offsets = [0, 4, 0, 0], sizes = [1, 1, 16, 64], strides = [1, 1, 1, 1]} : vector<1x8x16x64xf32> to vector<1x1x16x64xf32>
    %362 = vector.shape_cast %361 : vector<1x1x16x64xf32> to vector<1x16x64xf32>
    %363 = arith.addf %360, %362 : vector<1x16x64xf32>
    %364 = vector.extract_strided_slice %308 {offsets = [0, 4, 0], sizes = [1, 1, 16], strides = [1, 1, 1]} : vector<1x8x16xf32> to vector<1x1x16xf32>
    %365 = vector.shape_cast %364 : vector<1x1x16xf32> to vector<1x16xf32>
    %366 = vector.shape_cast %365 : vector<1x16xf32> to vector<1x16x1xf32>
    %367 = vector.broadcast %366 : vector<1x16x1xf32> to vector<1x16x64xf32>
    %368 = arith.mulf %363, %367 : vector<1x16x64xf32>
    %cst_79 = arith.constant dense<0.000000e+00> : vector<1x64xf32>
    %369 = vector.multi_reduction <add>, %368, %cst_79 [1] : vector<1x16x64xf32> to vector<1x64xf32>
    %370 = vector.extract_strided_slice %306 {offsets = [0, 5, 0, 0], sizes = [1, 1, 16, 64], strides = [1, 1, 1, 1]} : vector<1x8x16x64xf32> to vector<1x1x16x64xf32>
    %371 = vector.shape_cast %370 : vector<1x1x16x64xf32> to vector<1x16x64xf32>
    %372 = arith.mulf %363, %371 : vector<1x16x64xf32>
    %373 = vector.extract_strided_slice %307 {offsets = [0, 5, 0, 0], sizes = [1, 1, 16, 64], strides = [1, 1, 1, 1]} : vector<1x8x16x64xf32> to vector<1x1x16x64xf32>
    %374 = vector.shape_cast %373 : vector<1x1x16x64xf32> to vector<1x16x64xf32>
    %375 = arith.addf %372, %374 : vector<1x16x64xf32>
    %376 = vector.extract_strided_slice %308 {offsets = [0, 5, 0], sizes = [1, 1, 16], strides = [1, 1, 1]} : vector<1x8x16xf32> to vector<1x1x16xf32>
    %377 = vector.shape_cast %376 : vector<1x1x16xf32> to vector<1x16xf32>
    %378 = vector.shape_cast %377 : vector<1x16xf32> to vector<1x16x1xf32>
    %379 = vector.broadcast %378 : vector<1x16x1xf32> to vector<1x16x64xf32>
    %380 = arith.mulf %375, %379 : vector<1x16x64xf32>
    %cst_80 = arith.constant dense<0.000000e+00> : vector<1x64xf32>
    %381 = vector.multi_reduction <add>, %380, %cst_80 [1] : vector<1x16x64xf32> to vector<1x64xf32>
    %382 = vector.extract_strided_slice %306 {offsets = [0, 6, 0, 0], sizes = [1, 1, 16, 64], strides = [1, 1, 1, 1]} : vector<1x8x16x64xf32> to vector<1x1x16x64xf32>
    %383 = vector.shape_cast %382 : vector<1x1x16x64xf32> to vector<1x16x64xf32>
    %384 = arith.mulf %375, %383 : vector<1x16x64xf32>
    %385 = vector.extract_strided_slice %307 {offsets = [0, 6, 0, 0], sizes = [1, 1, 16, 64], strides = [1, 1, 1, 1]} : vector<1x8x16x64xf32> to vector<1x1x16x64xf32>
    %386 = vector.shape_cast %385 : vector<1x1x16x64xf32> to vector<1x16x64xf32>
    %387 = arith.addf %384, %386 : vector<1x16x64xf32>
    %388 = vector.extract_strided_slice %308 {offsets = [0, 6, 0], sizes = [1, 1, 16], strides = [1, 1, 1]} : vector<1x8x16xf32> to vector<1x1x16xf32>
    %389 = vector.shape_cast %388 : vector<1x1x16xf32> to vector<1x16xf32>
    %390 = vector.shape_cast %389 : vector<1x16xf32> to vector<1x16x1xf32>
    %391 = vector.broadcast %390 : vector<1x16x1xf32> to vector<1x16x64xf32>
    %392 = arith.mulf %387, %391 : vector<1x16x64xf32>
    %cst_81 = arith.constant dense<0.000000e+00> : vector<1x64xf32>
    %393 = vector.multi_reduction <add>, %392, %cst_81 [1] : vector<1x16x64xf32> to vector<1x64xf32>
    %394 = vector.extract_strided_slice %306 {offsets = [0, 7, 0, 0], sizes = [1, 1, 16, 64], strides = [1, 1, 1, 1]} : vector<1x8x16x64xf32> to vector<1x1x16x64xf32>
    %395 = vector.shape_cast %394 : vector<1x1x16x64xf32> to vector<1x16x64xf32>
    %396 = arith.mulf %387, %395 : vector<1x16x64xf32>
    %397 = vector.extract_strided_slice %307 {offsets = [0, 7, 0, 0], sizes = [1, 1, 16, 64], strides = [1, 1, 1, 1]} : vector<1x8x16x64xf32> to vector<1x1x16x64xf32>
    %398 = vector.shape_cast %397 : vector<1x1x16x64xf32> to vector<1x16x64xf32>
    %399 = arith.addf %396, %398 : vector<1x16x64xf32>
    %400 = vector.extract_strided_slice %308 {offsets = [0, 7, 0], sizes = [1, 1, 16], strides = [1, 1, 1]} : vector<1x8x16xf32> to vector<1x1x16xf32>
    %401 = vector.shape_cast %400 : vector<1x1x16xf32> to vector<1x16xf32>
    %402 = vector.shape_cast %401 : vector<1x16xf32> to vector<1x16x1xf32>
    %403 = vector.broadcast %402 : vector<1x16x1xf32> to vector<1x16x64xf32>
    %404 = arith.mulf %399, %403 : vector<1x16x64xf32>
    %cst_82 = arith.constant dense<0.000000e+00> : vector<1x64xf32>
    %405 = vector.multi_reduction <add>, %404, %cst_82 [1] : vector<1x16x64xf32> to vector<1x64xf32>
    %406 = vector.shape_cast %321 : vector<1x64xf32> to vector<1x1x64xf32>
    %407 = vector.shape_cast %333 : vector<1x64xf32> to vector<1x1x64xf32>
    %408 = vector.shape_cast %345 : vector<1x64xf32> to vector<1x1x64xf32>
    %409 = vector.shape_cast %357 : vector<1x64xf32> to vector<1x1x64xf32>
    %410 = vector.shape_cast %369 : vector<1x64xf32> to vector<1x1x64xf32>
    %411 = vector.shape_cast %381 : vector<1x64xf32> to vector<1x1x64xf32>
    %412 = vector.shape_cast %393 : vector<1x64xf32> to vector<1x1x64xf32>
    %413 = vector.shape_cast %405 : vector<1x64xf32> to vector<1x1x64xf32>
    %414 = tpu.concatenate %406, %407, %408, %409, %410, %411, %412, %413 in 1 : vector<1x1x64xf32>, vector<1x1x64xf32>, vector<1x1x64xf32>, vector<1x1x64xf32>, vector<1x1x64xf32>, vector<1x1x64xf32>, vector<1x1x64xf32>, vector<1x1x64xf32> -> vector<1x8x64xf32>
    %415 = vector.shape_cast %414 : vector<1x8x64xf32> to vector<8x64xf32>
    %416 = vector.extract_strided_slice %27 {offsets = [1, 0], sizes = [1, 64], strides = [1, 1]} : vector<2x64xf32> to vector<1x64xf32>
    %417 = vector.broadcast %416 : vector<1x64xf32> to vector<8x64xf32>
    %418 = arith.mulf %117, %417 : vector<8x64xf32>
    %419 = arith.addf %415, %418 : vector<8x64xf32>
    %420 = arith.mulf %419, %24 : vector<8x64xf32>
    %421 = tpu.concatenate %272, %420 in 1 : vector<8x64xf32>, vector<8x64xf32> -> vector<8x128xf32>
    %c0_83 = arith.constant 0 : index
    %c0_84 = arith.constant 0 : index
    %422 = vector.load %arg14[%c0_83, %c0_84] : memref<64x128xf32, #tpu.memory_space<vmem>>, vector<64x128xf32>
    %cst_85 = arith.constant dense<0.000000e+00> : vector<8x64xf32>
    %423 = tpu.matmul %421, %422, %cst_85 {dimension_numbers = #tpu.dot_dimension_numbers<[1], [1], [0], [0], [0, 0, 1, 0], [], []>} : vector<8x128xf32>, vector<64x128xf32>, vector<8x64xf32> -> vector<8x64xf32>
    %c0_86 = arith.constant 0 : index
    %c0_87 = arith.constant 0 : index
    %424 = vector.load %arg15[%c0_86, %c0_87] : memref<32x64xf32, #tpu.memory_space<vmem>>, vector<32x64xf32>
    %cst_88 = arith.constant dense<0.000000e+00> : vector<8x32xf32>
    %425 = tpu.matmul %423, %424, %cst_88 {dimension_numbers = #tpu.dot_dimension_numbers<[1], [1], [0], [0], [0, 0, 1, 0], [], []>} : vector<8x64xf32>, vector<32x64xf32>, vector<8x32xf32> -> vector<8x32xf32>
    %426 = vector.shape_cast %425 : vector<8x32xf32> to vector<1x8x32xf32>
    %c0_89 = arith.constant 0 : index
    %c0_90 = arith.constant 0 : index
    %c0_91 = arith.constant 0 : index
    %427 = vector.load %arg16[%c0_89, %c0_90, %c0_91] : memref<1x8x32xf32, #tpu.memory_space<vmem>>, vector<1x8x32xf32>
    tpu.vector_store %arg16[%c0_89, %c0_90, %c0_91], %426 {strides = array<i32>} : memref<1x8x32xf32, #tpu.memory_space<vmem>>, vector<1x8x32xf32>,
    return
  }
  func.func @transform_0(%arg0: i32) -> (i32, i32, i32) {
    %c0_i32 = arith.constant 0 : i32
    %c0_i32_0 = arith.constant 0 : i32
    %c0_i32_1 = arith.constant 0 : i32
    return %arg0, %c0_i32, %c0_i32_0 : i32, i32, i32
  }
  func.func @transform_1(%arg0: i32) -> (i32, i32) {
    %c0_i32 = arith.constant 0 : i32
    %c0_i32_0 = arith.constant 0 : i32
    %c0_i32_1 = arith.constant 0 : i32
    return %c0_i32, %c0_i32_0 : i32, i32
  }
  func.func @transform_2(%arg0: i32) -> (i32, i32) {
    %c0_i32 = arith.constant 0 : i32
    %c0_i32_0 = arith.constant 0 : i32
    %c0_i32_1 = arith.constant 0 : i32
    return %c0_i32, %c0_i32_0 : i32, i32
  }
  func.func @transform_3(%arg0: i32) -> (i32, i32) {
    %c0_i32 = arith.constant 0 : i32
    %c0_i32_0 = arith.constant 0 : i32
    %c0_i32_1 = arith.constant 0 : i32
    return %c0_i32, %c0_i32_0 : i32, i32
  }
  func.func @transform_4(%arg0: i32) -> (i32, i32, i32) {
    %c0_i32 = arith.constant 0 : i32
    %c0_i32_0 = arith.constant 0 : i32
    %c0_i32_1 = arith.constant 0 : i32
    %c0_i32_2 = arith.constant 0 : i32
    return %c0_i32, %c0_i32_0, %c0_i32_1 : i32, i32, i32
  }
  func.func @transform_5(%arg0: i32) -> (i32, i32) {
    %c0_i32 = arith.constant 0 : i32
    %c0_i32_0 = arith.constant 0 : i32
    %c0_i32_1 = arith.constant 0 : i32
    return %c0_i32, %c0_i32_0 : i32, i32
  }
  func.func @transform_6(%arg0: i32) -> (i32, i32) {
    %c0_i32 = arith.constant 0 : i32
    %c0_i32_0 = arith.constant 0 : i32
    %c0_i32_1 = arith.constant 0 : i32
    return %c0_i32, %c0_i32_0 : i32, i32
  }
  func.func @transform_7(%arg0: i32) -> (i32, i32) {
    %c0_i32 = arith.constant 0 : i32
    %c0_i32_0 = arith.constant 0 : i32
    %c0_i32_1 = arith.constant 0 : i32
    return %c0_i32, %c0_i32_0 : i32, i32
  }
  func.func @transform_8(%arg0: i32) -> (i32, i32) {
    %c0_i32 = arith.constant 0 : i32
    %c0_i32_0 = arith.constant 0 : i32
    %c0_i32_1 = arith.constant 0 : i32
    return %c0_i32, %c0_i32_0 : i32, i32
  }
  func.func @transform_9(%arg0: i32) -> (i32, i32, i32) {
    %c0_i32 = arith.constant 0 : i32
    %c0_i32_0 = arith.constant 0 : i32
    %c0_i32_1 = arith.constant 0 : i32
    %c0_i32_2 = arith.constant 0 : i32
    return %c0_i32, %c0_i32_0, %c0_i32_1 : i32, i32, i32
  }
  func.func @transform_10(%arg0: i32) -> (i32, i32) {
    %c0_i32 = arith.constant 0 : i32
    %c0_i32_0 = arith.constant 0 : i32
    %c0_i32_1 = arith.constant 0 : i32
    return %c0_i32, %c0_i32_0 : i32, i32
  }
  func.func @transform_11(%arg0: i32) -> (i32, i32, i32) {
    %c0_i32 = arith.constant 0 : i32
    %c0_i32_0 = arith.constant 0 : i32
    %c0_i32_1 = arith.constant 0 : i32
    %c0_i32_2 = arith.constant 0 : i32
    return %c0_i32, %c0_i32_0, %c0_i32_1 : i32, i32, i32
  }
  func.func @transform_12(%arg0: i32) -> (i32, i32) {
    %c0_i32 = arith.constant 0 : i32
    %c0_i32_0 = arith.constant 0 : i32
    %c0_i32_1 = arith.constant 0 : i32
    return %c0_i32, %c0_i32_0 : i32, i32
  }
  func.func @transform_13(%arg0: i32) -> (i32, i32) {
    %c0_i32 = arith.constant 0 : i32
    %c0_i32_0 = arith.constant 0 : i32
    %c0_i32_1 = arith.constant 0 : i32
    return %c0_i32, %c0_i32_0 : i32, i32
  }
  func.func @transform_14(%arg0: i32) -> (i32, i32) {
    %c0_i32 = arith.constant 0 : i32
    %c0_i32_0 = arith.constant 0 : i32
    %c0_i32_1 = arith.constant 0 : i32
    return %c0_i32, %c0_i32_0 : i32, i32
  }
  func.func @transform_15(%arg0: i32) -> (i32, i32, i32) {
    %c0_i32 = arith.constant 0 : i32
    %c0_i32_0 = arith.constant 0 : i32
    %c0_i32_1 = arith.constant 0 : i32
    return %arg0, %c0_i32, %c0_i32_0 : i32, i32, i32
  }
}

</mosaic_0001>

<llo_original>
// kernel: tpu_custom_call.1
$region0: #{tpu_custom_call.1}
  #allocation0 [shape = 'u32[]', space=smem, size = 0x4, offset = 0x4, fixed_abs, tag = 'smem constant byte address 0x4 - core index']
  #allocation1 [shape = 'u32[144,128]{1,0:T(1,128)}', space=vmem, size = 0x12000, scoped, tag = 'internal scratch']
  %s0 = inlined_call_operand.vmem [shape: f32[2,8,32], index: 0, kind: input, shape index: {}]
  %s1 = inlined_call_operand.vmem [shape: f32[1,32], index: 1, kind: input, shape index: {}]
  %s2 = inlined_call_operand.vmem [shape: f32[64,32], index: 2, kind: input, shape index: {}]
  %s3 = inlined_call_operand.vmem [shape: f32[64,32], index: 3, kind: input, shape index: {}]
  %s4 = inlined_call_operand.vmem [shape: f32[2,4,64], index: 4, kind: input, shape index: {}]
  %s5 = inlined_call_operand.vmem [shape: f32[2,64], index: 5, kind: input, shape index: {}]
  %s6 = inlined_call_operand.vmem [shape: f32[2,64], index: 6, kind: input, shape index: {}]
  %s7 = inlined_call_operand.vmem [shape: f32[16,64], index: 7, kind: input, shape index: {}]
  %s8 = inlined_call_operand.vmem [shape: f32[16,64], index: 8, kind: input, shape index: {}]
  %s9 = inlined_call_operand.vmem [shape: f32[2,64,2], index: 9, kind: input, shape index: {}]
  %s10 = inlined_call_operand.vmem [shape: f32[2,64], index: 10, kind: input, shape index: {}]
  %s11 = inlined_call_operand.vmem [shape: f32[2,16,64], index: 11, kind: input, shape index: {}]
  %s12 = inlined_call_operand.vmem [shape: f32[2,64], index: 12, kind: input, shape index: {}]
  %s13 = inlined_call_operand.vmem [shape: f32[64,128], index: 13, kind: input, shape index: {}]
  %s14 = inlined_call_operand.vmem [shape: f32[32,64], index: 14, kind: input, shape index: {}]
  %s15 = inlined_call_operand.hbm [shape: f32[2,8,32], index: 15, kind: output, shape index: {}]
  %s16 = sld [smem:[#allocation0]]
  $region93: #{tpu_custom_call.1} parent=0
    _
  %s18 = ssub.s32 1, %s16
  %s19 = scalar_select 0, %s18, %s16
  $region1: #{tpu_custom_call.1} parent=0
    #allocation2 [shape = 'u8[8192]{0}', space=vmem, size = 0x2000, scoped, tag = 'output window, operand 0']
    #allocation3 [shape = 's32[2]{0}', space=sflag, size = 0x8, scoped, tag = 'scoped memory for tpu_custom_call.1']
    %20 = vsyncpa [#allocation3], 0
    %s21 = scalar_lea.sflag [#allocation3], 1
    %22 = vsyncpa %s21, 0
    loop: start=0, step=1, limit=4
    $region2: #{tpu_custom_call.1} parent=1 // loop_pre_header
      _
    $region3: #{tpu_custom_call.1} parent=1 // loop_header
      %s24 = sphi 0, %s28
      %p25 = scmp.ge.s32.totalorder %s24, 4
      %s34 = sphi 0, %s36
      %s37 = sphi 0, %s34
      %s38 = sphi 0, %s37
      %s54 = sphi 0, %s38
      %s58 = sphi 0, %s58
      %s60 = sphi 0, %s58
      %s61 = sphi 0, %s60
      %s75 = sphi 0, %s61
      %s79 = sphi 0, %s79
      %s81 = sphi 0, %s79
      %s82 = sphi 0, %s81
      %s96 = sphi 0, %s82
      %s100 = sphi 0, %s100
      %s102 = sphi 0, %s100
      %s103 = sphi 0, %s102
      %s117 = sphi 0, %s103
      %s121 = sphi 0, %s121
      %s123 = sphi 0, %s121
      %s124 = sphi 0, %s123
      %s138 = sphi 0, %s124
      %s142 = sphi 0, %s142
      %s144 = sphi 0, %s142
      %s145 = sphi 0, %s144
      %s159 = sphi 0, %s145
      %s163 = sphi 0, %s163
      %s165 = sphi 0, %s163
      %s166 = sphi 0, %s165
      %s180 = sphi 0, %s166
      %s184 = sphi 0, %s184
      %s186 = sphi 0, %s184
      %s187 = sphi 0, %s186
      %s201 = sphi 0, %s187
      %s205 = sphi 0, %s205
      %s207 = sphi 0, %s205
      %s208 = sphi 0, %s207
      %s222 = sphi 0, %s208
      %s226 = sphi 0, %s226
      %s228 = sphi 0, %s226
      %s229 = sphi 0, %s228
      %s243 = sphi 0, %s229
      %s247 = sphi 0, %s247
      %s249 = sphi 0, %s247
      %s250 = sphi 0, %s249
      %s264 = sphi 0, %s250
      %s268 = sphi 0, %s268
      %s270 = sphi 0, %s268
      %s271 = sphi 0, %s270
      %s285 = sphi 0, %s271
      %s289 = sphi 0, %s289
      %s291 = sphi 0, %s289
      %s292 = sphi 0, %s291
      %s306 = sphi 0, %s292
      %s310 = sphi 0, %s310
      %s312 = sphi 0, %s310
      %s313 = sphi 0, %s312
      %s327 = sphi 0, %s313
      %s331 = sphi 0, %s331
      %s333 = sphi 0, %s331
      %s334 = sphi 0, %s333
      %s348 = sphi 0, %s334
      %s354 = sphi 0, %s356
      %s357 = sphi 0, %s354
      %s358 = sphi 0, %s357
      %s374 = sphi 0, %s358
    $region4: #{tpu_custom_call.1} parent=1 // loop_header_branch
      %27 = sbr.rel (%p25) target = $region8
    $region5: #{tpu_custom_call.1} parent=1 // loop_body
      %s29 = ssub.s32 %s24, 1
      %s30 = ssub.s32 %s24, 2
      %s31 = sadd.s32 %s24, 1
      %s32 = ssub.s32 %s24, %s31
      %p33 = scmp.eq.s32.totalorder %s32, 0
      %s35 = sadd.s32 %s34, 1
      %s36 = scalar_select %p33, %s34, %s35
      %p39 = pneg %p33
      %p40 = scmp.eq.s32.totalorder %s24, 1
      %p41 = por %p39, %p40
      %p42 = scmp.ne.s32.totalorder %s34, %s37
      %p43 = scmp.eq.s32.totalorder %s24, 0
      %p44 = por %p42, %p43
      %p45 = scmp.ne.s32.totalorder %s34, %s37
      %p46 = scmp.eq.s32.totalorder %s29, 1
      %p47 = por %p45, %p46
      %p48 = scmp.ne.s32.totalorder %s37, %s38
      %p49 = scmp.eq.s32.totalorder %s29, 0
      %p50 = por %p48, %p49
      %p51 = scmp.ne.s32.totalorder %s37, %s38
      %p52 = scmp.eq.s32.totalorder %s30, 1
      %p53 = por %p51, %p52
      %p55 = scmp.ne.s32.totalorder %s38, %s54
      %p56 = scmp.eq.s32.totalorder %s30, 0
      %p57 = por %p55, %p56
      %s59 = sadd.s32 %s58, 1
      %p62 = scmp.eq.s32.totalorder %s24, 1
      %p63 = scmp.ne.s32.totalorder %s58, %s60
      %p64 = scmp.eq.s32.totalorder %s24, 0
      %p65 = por %p63, %p64
      %p66 = scmp.ne.s32.totalorder %s58, %s60
      %p67 = scmp.eq.s32.totalorder %s29, 1
      %p68 = por %p66, %p67
      %p69 = scmp.ne.s32.totalorder %s60, %s61
      %p70 = scmp.eq.s32.totalorder %s29, 0
      %p71 = por %p69, %p70
      %p72 = scmp.ne.s32.totalorder %s60, %s61
      %p73 = scmp.eq.s32.totalorder %s30, 1
      %p74 = por %p72, %p73
      %p76 = scmp.ne.s32.totalorder %s61, %s75
      %p77 = scmp.eq.s32.totalorder %s30, 0
      %p78 = por %p76, %p77
      %s80 = sadd.s32 %s79, 1
      %p83 = scmp.eq.s32.totalorder %s24, 1
      %p84 = scmp.ne.s32.totalorder %s79, %s81
      %p85 = scmp.eq.s32.totalorder %s24, 0
      %p86 = por %p84, %p85
      %p87 = scmp.ne.s32.totalorder %s79, %s81
      %p88 = scmp.eq.s32.totalorder %s29, 1
      %p89 = por %p87, %p88
      %p90 = scmp.ne.s32.totalorder %s81, %s82
      %p91 = scmp.eq.s32.totalorder %s29, 0
      %p92 = por %p90, %p91
      %p93 = scmp.ne.s32.totalorder %s81, %s82
      %p94 = scmp.eq.s32.totalorder %s30, 1
      %p95 = por %p93, %p94
      %p97 = scmp.ne.s32.totalorder %s82, %s96
      %p98 = scmp.eq.s32.totalorder %s30, 0
      %p99 = por %p97, %p98
      %s101 = sadd.s32 %s100, 1
      %p104 = scmp.eq.s32.totalorder %s24, 1
      %p105 = scmp.ne.s32.totalorder %s100, %s102
      %p106 = scmp.eq.s32.totalorder %s24, 0
      %p107 = por %p105, %p106
      %p108 = scmp.ne.s32.totalorder %s100, %s102
      %p109 = scmp.eq.s32.totalorder %s29, 1
      %p110 = por %p108, %p109
      %p111 = scmp.ne.s32.totalorder %s102, %s103
      %p112 = scmp.eq.s32.totalorder %s29, 0
      %p113 = por %p111, %p112
      %p114 = scmp.ne.s32.totalorder %s102, %s103
      %p115 = scmp.eq.s32.totalorder %s30, 1
      %p116 = por %p114, %p115
      %p118 = scmp.ne.s32.totalorder %s103, %s117
      %p119 = scmp.eq.s32.totalorder %s30, 0
      %p120 = por %p118, %p119
      %s122 = sadd.s32 %s121, 1
      %p125 = scmp.eq.s32.totalorder %s24, 1
      %p126 = scmp.ne.s32.totalorder %s121, %s123
      %p127 = scmp.eq.s32.totalorder %s24, 0
      %p128 = por %p126, %p127
      %p129 = scmp.ne.s32.totalorder %s121, %s123
      %p130 = scmp.eq.s32.totalorder %s29, 1
      %p131 = por %p129, %p130
      %p132 = scmp.ne.s32.totalorder %s123, %s124
      %p133 = scmp.eq.s32.totalorder %s29, 0
      %p134 = por %p132, %p133
      %p135 = scmp.ne.s32.totalorder %s123, %s124
      %p136 = scmp.eq.s32.totalorder %s30, 1
      %p137 = por %p135, %p136
      %p139 = scmp.ne.s32.totalorder %s124, %s138
      %p140 = scmp.eq.s32.totalorder %s30, 0
      %p141 = por %p139, %p140
      %s143 = sadd.s32 %s142, 1
      %p146 = scmp.eq.s32.totalorder %s24, 1
      %p147 = scmp.ne.s32.totalorder %s142, %s144
      %p148 = scmp.eq.s32.totalorder %s24, 0
      %p149 = por %p147, %p148
      %p150 = scmp.ne.s32.totalorder %s142, %s144
      %p151 = scmp.eq.s32.totalorder %s29, 1
      %p152 = por %p150, %p151
      %p153 = scmp.ne.s32.totalorder %s144, %s145
      %p154 = scmp.eq.s32.totalorder %s29, 0
      %p155 = por %p153, %p154
      %p156 = scmp.ne.s32.totalorder %s144, %s145
      %p157 = scmp.eq.s32.totalorder %s30, 1
      %p158 = por %p156, %p157
      %p160 = scmp.ne.s32.totalorder %s145, %s159
      %p161 = scmp.eq.s32.totalorder %s30, 0
      %p162 = por %p160, %p161
      %s164 = sadd.s32 %s163, 1
      %p167 = scmp.eq.s32.totalorder %s24, 1
      %p168 = scmp.ne.s32.totalorder %s163, %s165
      %p169 = scmp.eq.s32.totalorder %s24, 0
      %p170 = por %p168, %p169
      %p171 = scmp.ne.s32.totalorder %s163, %s165
      %p172 = scmp.eq.s32.totalorder %s29, 1
      %p173 = por %p171, %p172
      %p174 = scmp.ne.s32.totalorder %s165, %s166
      %p175 = scmp.eq.s32.totalorder %s29, 0
      %p176 = por %p174, %p175
      %p177 = scmp.ne.s32.totalorder %s165, %s166
      %p178 = scmp.eq.s32.totalorder %s30, 1
      %p179 = por %p177, %p178
      %p181 = scmp.ne.s32.totalorder %s166, %s180
      %p182 = scmp.eq.s32.totalorder %s30, 0
      %p183 = por %p181, %p182
      %s185 = sadd.s32 %s184, 1
      %p188 = scmp.eq.s32.totalorder %s24, 1
      %p189 = scmp.ne.s32.totalorder %s184, %s186
      %p190 = scmp.eq.s32.totalorder %s24, 0
      %p191 = por %p189, %p190
      %p192 = scmp.ne.s32.totalorder %s184, %s186
      %p193 = scmp.eq.s32.totalorder %s29, 1
      %p194 = por %p192, %p193
      %p195 = scmp.ne.s32.totalorder %s186, %s187
      %p196 = scmp.eq.s32.totalorder %s29, 0
      %p197 = por %p195, %p196
      %p198 = scmp.ne.s32.totalorder %s186, %s187
      %p199 = scmp.eq.s32.totalorder %s30, 1
      %p200 = por %p198, %p199
      %p202 = scmp.ne.s32.totalorder %s187, %s201
      %p203 = scmp.eq.s32.totalorder %s30, 0
      %p204 = por %p202, %p203
      %s206 = sadd.s32 %s205, 1
      %p209 = scmp.eq.s32.totalorder %s24, 1
      %p210 = scmp.ne.s32.totalorder %s205, %s207
      %p211 = scmp.eq.s32.totalorder %s24, 0
      %p212 = por %p210, %p211
      %p213 = scmp.ne.s32.totalorder %s205, %s207
      %p214 = scmp.eq.s32.totalorder %s29, 1
      %p215 = por %p213, %p214
      %p216 = scmp.ne.s32.totalorder %s207, %s208
      %p217 = scmp.eq.s32.totalorder %s29, 0
      %p218 = por %p216, %p217
      %p219 = scmp.ne.s32.totalorder %s207, %s208
      %p220 = scmp.eq.s32.totalorder %s30, 1
      %p221 = por %p219, %p220
      %p223 = scmp.ne.s32.totalorder %s208, %s222
      %p224 = scmp.eq.s32.totalorder %s30, 0
      %p225 = por %p223, %p224
      %s227 = sadd.s32 %s226, 1
      %p230 = scmp.eq.s32.totalorder %s24, 1
      %p231 = scmp.ne.s32.totalorder %s226, %s228
      %p232 = scmp.eq.s32.totalorder %s24, 0
      %p233 = por %p231, %p232
      %p234 = scmp.ne.s32.totalorder %s226, %s228
      %p235 = scmp.eq.s32.totalorder %s29, 1
      %p236 = por %p234, %p235
      %p237 = scmp.ne.s32.totalorder %s228, %s229
      %p238 = scmp.eq.s32.totalorder %s29, 0
      %p239 = por %p237, %p238
      %p240 = scmp.ne.s32.totalorder %s228, %s229
      %p241 = scmp.eq.s32.totalorder %s30, 1
      %p242 = por %p240, %p241
      %p244 = scmp.ne.s32.totalorder %s229, %s243
      %p245 = scmp.eq.s32.totalorder %s30, 0
      %p246 = por %p244, %p245
      %s248 = sadd.s32 %s247, 1
      %p251 = scmp.eq.s32.totalorder %s24, 1
      %p252 = scmp.ne.s32.totalorder %s247, %s249
      %p253 = scmp.eq.s32.totalorder %s24, 0
      %p254 = por %p252, %p253
      %p255 = scmp.ne.s32.totalorder %s247, %s249
      %p256 = scmp.eq.s32.totalorder %s29, 1
      %p257 = por %p255, %p256
      %p258 = scmp.ne.s32.totalorder %s249, %s250
      %p259 = scmp.eq.s32.totalorder %s29, 0
      %p260 = por %p258, %p259
      %p261 = scmp.ne.s32.totalorder %s249, %s250
      %p262 = scmp.eq.s32.totalorder %s30, 1
      %p263 = por %p261, %p262
      %p265 = scmp.ne.s32.totalorder %s250, %s264
      %p266 = scmp.eq.s32.totalorder %s30, 0
      %p267 = por %p265, %p266
      %s269 = sadd.s32 %s268, 1
      %p272 = scmp.eq.s32.totalorder %s24, 1
      %p273 = scmp.ne.s32.totalorder %s268, %s270
      %p274 = scmp.eq.s32.totalorder %s24, 0
      %p275 = por %p273, %p274
      %p276 = scmp.ne.s32.totalorder %s268, %s270
      %p277 = scmp.eq.s32.totalorder %s29, 1
      %p278 = por %p276, %p277
      %p279 = scmp.ne.s32.totalorder %s270, %s271
      %p280 = scmp.eq.s32.totalorder %s29, 0
      %p281 = por %p279, %p280
      %p282 = scmp.ne.s32.totalorder %s270, %s271
      %p283 = scmp.eq.s32.totalorder %s30, 1
      %p284 = por %p282, %p283
      %p286 = scmp.ne.s32.totalorder %s271, %s285
      %p287 = scmp.eq.s32.totalorder %s30, 0
      %p288 = por %p286, %p287
      %s290 = sadd.s32 %s289, 1
      %p293 = scmp.eq.s32.totalorder %s24, 1
      %p294 = scmp.ne.s32.totalorder %s289, %s291
      %p295 = scmp.eq.s32.totalorder %s24, 0
      %p296 = por %p294, %p295
      %p297 = scmp.ne.s32.totalorder %s289, %s291
      %p298 = scmp.eq.s32.totalorder %s29, 1
      %p299 = por %p297, %p298
      %p300 = scmp.ne.s32.totalorder %s291, %s292
      %p301 = scmp.eq.s32.totalorder %s29, 0
      %p302 = por %p300, %p301
      %p303 = scmp.ne.s32.totalorder %s291, %s292
      %p304 = scmp.eq.s32.totalorder %s30, 1
      %p305 = por %p303, %p304
      %p307 = scmp.ne.s32.totalorder %s292, %s306
      %p308 = scmp.eq.s32.totalorder %s30, 0
      %p309 = por %p307, %p308
      %s311 = sadd.s32 %s310, 1
      %p314 = scmp.eq.s32.totalorder %s24, 1
      %p315 = scmp.ne.s32.totalorder %s310, %s312
      %p316 = scmp.eq.s32.totalorder %s24, 0
      %p317 = por %p315, %p316
      %p318 = scmp.ne.s32.totalorder %s310, %s312
      %p319 = scmp.eq.s32.totalorder %s29, 1
      %p320 = por %p318, %p319
      %p321 = scmp.ne.s32.totalorder %s312, %s313
      %p322 = scmp.eq.s32.totalorder %s29, 0
      %p323 = por %p321, %p322
      %p324 = scmp.ne.s32.totalorder %s312, %s313
      %p325 = scmp.eq.s32.totalorder %s30, 1
      %p326 = por %p324, %p325
      %p328 = scmp.ne.s32.totalorder %s313, %s327
      %p329 = scmp.eq.s32.totalorder %s30, 0
      %p330 = por %p328, %p329
      %s332 = sadd.s32 %s331, 1
      %p335 = scmp.eq.s32.totalorder %s24, 1
      %p336 = scmp.ne.s32.totalorder %s331, %s333
      %p337 = scmp.eq.s32.totalorder %s24, 0
      %p338 = por %p336, %p337
      %p339 = scmp.ne.s32.totalorder %s331, %s333
      %p340 = scmp.eq.s32.totalorder %s29, 1
      %p341 = por %p339, %p340
      %p342 = scmp.ne.s32.totalorder %s333, %s334
      %p343 = scmp.eq.s32.totalorder %s29, 0
      %p344 = por %p342, %p343
      %p345 = scmp.ne.s32.totalorder %s333, %s334
      %p346 = scmp.eq.s32.totalorder %s30, 1
      %p347 = por %p345, %p346
      %p349 = scmp.ne.s32.totalorder %s334, %s348
      %p350 = scmp.eq.s32.totalorder %s30, 0
      %p351 = por %p349, %p350
      %s352 = ssub.s32 %s24, %s31
      %p353 = scmp.eq.s32.totalorder %s352, 0
      %s355 = sadd.s32 %s354, 1
      %s356 = scalar_select %p353, %s354, %s355
      %p359 = pneg %p353
      %p360 = scmp.eq.s32.totalorder %s24, 1
      %p361 = por %p359, %p360
      %p362 = scmp.ne.s32.totalorder %s354, %s357
      %p363 = scmp.eq.s32.totalorder %s24, 0
      %p364 = por %p362, %p363
      %p365 = scmp.ne.s32.totalorder %s354, %s357
      %p366 = scmp.eq.s32.totalorder %s29, 1
      %p367 = por %p365, %p366
      %p368 = scmp.ne.s32.totalorder %s357, %s358
      %p369 = scmp.eq.s32.totalorder %s29, 0
      %p370 = por %p368, %p369
      %p371 = scmp.ne.s32.totalorder %s357, %s358
      %p372 = scmp.eq.s32.totalorder %s30, 1
      %p373 = por %p371, %p372
      %p375 = scmp.ne.s32.totalorder %s358, %s374
      %p376 = scmp.eq.s32.totalorder %s30, 0
      %p377 = por %p375, %p376
      %p378 = scmp.le.s32.totalorder 1, %s24
      %p379 = scmp.lt.s32.totalorder %s24, 3
      %p380 = pnand %p378, %p379
      %p381 = pneg %p380
      // Predicated region
      $region9: #{tpu_custom_call.1} parent=5 // pred_check
        _
      $region10: #{tpu_custom_call.1} parent=5 // pred_check_branch
        %383 = sbr.rel (%p380) target = $region12
      $region11: #{tpu_custom_call.1} parent=5 // pred_region
        %s384 = ssub.s32 %s24, 1
        // Predicated region
        $region13: #{tpu_custom_call.1} parent=11 // pred_check
          %p385 = pneg %p71
        $region14: #{tpu_custom_call.1} parent=11 // pred_check_branch
          %387 = sbr.rel (%p385) target = $region16
        $region15: #{tpu_custom_call.1} parent=11 // pred_region
          _
        $region16: #{tpu_custom_call.1} parent=11 // pred_fallthru
          _
        // Predicated region
        $region17: #{tpu_custom_call.1} parent=11 // pred_check
          %p388 = pneg %p92
        $region18: #{tpu_custom_call.1} parent=11 // pred_check_branch
          %390 = sbr.rel (%p388) target = $region20
        $region19: #{tpu_custom_call.1} parent=11 // pred_region
          _
        $region20: #{tpu_custom_call.1} parent=11 // pred_fallthru
          _
        // Predicated region
        $region21: #{tpu_custom_call.1} parent=11 // pred_check
          %p391 = pneg %p113
        $region22: #{tpu_custom_call.1} parent=11 // pred_check_branch
          %393 = sbr.rel (%p391) target = $region24
        $region23: #{tpu_custom_call.1} parent=11 // pred_region
          _
        $region24: #{tpu_custom_call.1} parent=11 // pred_fallthru
          _
        // Predicated region
        $region25: #{tpu_custom_call.1} parent=11 // pred_check
          %p394 = pneg %p134
        $region26: #{tpu_custom_call.1} parent=11 // pred_check_branch
          %396 = sbr.rel (%p394) target = $region28
        $region27: #{tpu_custom_call.1} parent=11 // pred_region
          _
        $region28: #{tpu_custom_call.1} parent=11 // pred_fallthru
          _
        // Predicated region
        $region29: #{tpu_custom_call.1} parent=11 // pred_check
          %p397 = pneg %p155
        $region30: #{tpu_custom_call.1} parent=11 // pred_check_branch
          %399 = sbr.rel (%p397) target = $region32
        $region31: #{tpu_custom_call.1} parent=11 // pred_region
          _
        $region32: #{tpu_custom_call.1} parent=11 // pred_fallthru
          _
        // Predicated region
        $region33: #{tpu_custom_call.1} parent=11 // pred_check
          %p400 = pneg %p176
        $region34: #{tpu_custom_call.1} parent=11 // pred_check_branch
          %402 = sbr.rel (%p400) target = $region36
        $region35: #{tpu_custom_call.1} parent=11 // pred_region
          _
        $region36: #{tpu_custom_call.1} parent=11 // pred_fallthru
          _
        // Predicated region
        $region37: #{tpu_custom_call.1} parent=11 // pred_check
          %p403 = pneg %p197
        $region38: #{tpu_custom_call.1} parent=11 // pred_check_branch
          %405 = sbr.rel (%p403) target = $region40
        $region39: #{tpu_custom_call.1} parent=11 // pred_region
          _
        $region40: #{tpu_custom_call.1} parent=11 // pred_fallthru
          _
        // Predicated region
        $region41: #{tpu_custom_call.1} parent=11 // pred_check
          %p406 = pneg %p218
        $region42: #{tpu_custom_call.1} parent=11 // pred_check_branch
          %408 = sbr.rel (%p406) target = $region44
        $region43: #{tpu_custom_call.1} parent=11 // pred_region
          _
        $region44: #{tpu_custom_call.1} parent=11 // pred_fallthru
          _
        // Predicated region
        $region45: #{tpu_custom_call.1} parent=11 // pred_check
          %p409 = pneg %p239
        $region46: #{tpu_custom_call.1} parent=11 // pred_check_branch
          %411 = sbr.rel (%p409) target = $region48
        $region47: #{tpu_custom_call.1} parent=11 // pred_region
          _
        $region48: #{tpu_custom_call.1} parent=11 // pred_fallthru
          _
        // Predicated region
        $region49: #{tpu_custom_call.1} parent=11 // pred_check
          %p412 = pneg %p260
        $region50: #{tpu_custom_call.1} parent=11 // pred_check_branch
          %414 = sbr.rel (%p412) target = $region52
        $region51: #{tpu_custom_call.1} parent=11 // pred_region
          _
        $region52: #{tpu_custom_call.1} parent=11 // pred_fallthru
          _
        // Predicated region
        $region53: #{tpu_custom_call.1} parent=11 // pred_check
          %p415 = pneg %p281
        $region54: #{tpu_custom_call.1} parent=11 // pred_check_branch
          %417 = sbr.rel (%p415) target = $region56
        $region55: #{tpu_custom_call.1} parent=11 // pred_region
          _
        $region56: #{tpu_custom_call.1} parent=11 // pred_fallthru
          _
        // Predicated region
        $region57: #{tpu_custom_call.1} parent=11 // pred_check
          %p418 = pneg %p302
        $region58: #{tpu_custom_call.1} parent=11 // pred_check_branch
          %420 = sbr.rel (%p418) target = $region60
        $region59: #{tpu_custom_call.1} parent=11 // pred_region
          _
        $region60: #{tpu_custom_call.1} parent=11 // pred_fallthru
          _
        // Predicated region
        $region61: #{tpu_custom_call.1} parent=11 // pred_check
          %p421 = pneg %p323
        $region62: #{tpu_custom_call.1} parent=11 // pred_check_branch
          %423 = sbr.rel (%p421) target = $region64
        $region63: #{tpu_custom_call.1} parent=11 // pred_region
          _
        $region64: #{tpu_custom_call.1} parent=11 // pred_fallthru
          _
        // Predicated region
        $region65: #{tpu_custom_call.1} parent=11 // pred_check
          %p424 = pneg %p344
        $region66: #{tpu_custom_call.1} parent=11 // pred_check_branch
          %426 = sbr.rel (%p424) target = $region68
        $region67: #{tpu_custom_call.1} parent=11 // pred_region
          _
        $region68: #{tpu_custom_call.1} parent=11 // pred_fallthru
          _
      $region12: #{tpu_custom_call.1} parent=5 // pred_fallthru
        _
      %p427 = scmp.lt.s32.totalorder %s24, 2
      // Predicated region
      $region69: #{tpu_custom_call.1} parent=5 // pred_check
        %p428 = pneg %p427
      $region70: #{tpu_custom_call.1} parent=5 // pred_check_branch
        %430 = sbr.rel (%p428) target = $region72
      $region71: #{tpu_custom_call.1} parent=5 // pred_region
        // Predicated region
        $region73: #{tpu_custom_call.1} parent=71 // pred_check
          %p431 = pneg %p44
        $region74: #{tpu_custom_call.1} parent=71 // pred_check_branch
          %433 = sbr.rel (%p431) target = $region76
        $region75: #{tpu_custom_call.1} parent=71 // pred_region
          %p434 = scmp.lt.s32.totalorder %s24, 1
          %s435 = scalar_select %p434, %s24, 1
          %s436 = smul.addr %s435, 8
          %s437 = scalar_lea.vmem %s0, %s436
        $region76: #{tpu_custom_call.1} parent=71 // pred_fallthru
          _
      $region72: #{tpu_custom_call.1} parent=5 // pred_fallthru
        _
      %p438 = scmp.le.s32.totalorder 1, %s24
      %p439 = scmp.lt.s32.totalorder %s24, 3
      %p440 = pnand %p438, %p439
      %p441 = pneg %p440
      // Predicated region
      $region77: #{tpu_custom_call.1} parent=5 // pred_check
        _
      $region78: #{tpu_custom_call.1} parent=5 // pred_check_branch
        %443 = sbr.rel (%p440) target = $region80
      $region79: #{tpu_custom_call.1} parent=5 // pred_region
        %s444 = ssub.s32 %s24, 1
        %p445 = scmp.lt.s32.totalorder %s29, 1
        %s446 = scalar_select %p445, %s29, 1
        %s447 = smul.addr %s446, 8
        %s448 = scalar_lea.vmem %s0, %s447
        %p449 = pneg %p50
        %p450 = pneg %p47
        %p451 = pneg %p71
        %p452 = pneg %p68
        %p453 = pneg %p92
        %p454 = pneg %p89
        %p455 = pneg %p113
        %p456 = pneg %p110
        %p457 = pneg %p134
        %p458 = pneg %p131
        %p459 = pneg %p155
        %p460 = pneg %p152
        %p461 = pneg %p176
        %p462 = pneg %p173
        %p463 = pneg %p197
        %p464 = pneg %p194
        %p465 = pneg %p218
        %p466 = pneg %p215
        %p467 = pneg %p239
        %p468 = pneg %p236
        %p469 = pneg %p260
        %p470 = pneg %p257
        %p471 = pneg %p281
        %p472 = pneg %p278
        %p473 = pneg %p302
        %p474 = pneg %p299
        %p475 = pneg %p323
        %p476 = pneg %p320
        %p477 = pneg %p344
        %p478 = pneg %p341
        %p479 = pneg %p370
        %p480 = pneg %p367
        %s481 = sand.u32 %s357, 1
        %s482 = scalar_lea.sflag [#allocation3], %s481
        %s483 = sand.u32 %s357, 1
        %s484 = smul.addr %s483, 8
        %s485 = scalar_lea.vmem [#allocation2], %s484
        %p486 = scmp.lt.s32.totalorder %s29, 1
        %s487 = scalar_select %p486, %s29, 1
        %s488 = smul.addr %s487, 8
        %s489 = scalar_lea.vmem %s0, %s488
        %v490 = vld [vmem:[%s489] sm:$0xff]
        %v491 = vmul.f32 %v490, %v490
        %vm492 = vcmask 261120
        %v493 = vsel %vm492, %v491, 0.0
        %494 = vadd.xlane.f32.xlu0 %v493
        %v495 = vpop.xlane.xlu0 %494
        %v496 = vrcp.pop 32.0
        %v497 = vmul.f32 %v495, %v496
        %v498 = vadd.f32 %v497, 1e-05
        %v499 = vrsqrt.pop %v498
        %v500 = vmul.f32 %v490, %v499
        %v501 = vld [vmem:[%s1] sm:$0x1]
        %v503 = vlaneseq
        %v504 = vshrl.u32 %v503, 7
        %v505 = vsub.s32 0, %v504
        %v506 = vrot.slane %v501, %v505
        %v508 = vmul.f32 %v500, %v506
        %v509 = vld [vmem:[%s2] sm:$0xff]
        %v510 = vld [vmem:[%s2 + $0x8] sm:$0xff]
        %v511 = vld [vmem:[%s2 + $0x10] sm:$0xff]
        %v512 = vld [vmem:[%s2 + $0x18] sm:$0xff]
        %v513 = vld [vmem:[%s2 + $0x20] sm:$0xff]
        %v514 = vld [vmem:[%s2 + $0x28] sm:$0xff]
        %v515 = vld [vmem:[%s2 + $0x30] sm:$0xff]
        %v516 = vld [vmem:[%s2 + $0x38] sm:$0xff]
        %v518 = vsel %vm492, %v508, 0
        %v521 = vsel %vm492, %v509, 0
        %v524 = vsel %vm492, %v510, 0
        %v527 = vsel %vm492, %v511, 0
        %v530 = vsel %vm492, %v512, 0
        %v533 = vsel %vm492, %v513, 0
        %v536 = vsel %vm492, %v514, 0
        %v539 = vsel %vm492, %v515, 0
        %v542 = vsel %vm492, %v516, 0
        %544 = vmatprep.subr.mxu0 0.0
        %545 = vmatpush1.xpose.msra.mxu0 %v521
        %546 = vmatprep.subr.mxu0 0.0
        %547 = vmatpush1.xpose.msra.mxu0 %v524
        %548 = vmatprep.subr.mxu0 0.0
        %549 = vmatpush1.xpose.msra.mxu0 %v527
        %550 = vmatprep.subr.mxu0 0.0
        %551 = vmatpush1.xpose.msra.mxu0 %v530
        %552 = vmatprep.subr.mxu0 0.0
        %553 = vmatpush1.xpose.msra.mxu0 %v533
        %554 = vmatprep.subr.mxu0 0.0
        %555 = vmatpush1.xpose.msra.mxu0 %v536
        %556 = vmatprep.subr.mxu0 0.0
        %557 = vmatpush1.xpose.msra.mxu0 %v539
        %558 = vmatprep.subr.mxu0 0.0
        %559 = vmatpush1.xpose.msra.mxu0 %v542
        %560 = vmatprep.subr.mxu0 0.0
        %561 = vmatpush1.xpose.msra.mxu0 0.0
        %562 = vmatprep.subr.mxu0 0.0
        %563 = vmatpush1.xpose.msra.mxu0 0.0
        %564 = vmatprep.subr.mxu0 0.0
        %565 = vmatpush1.xpose.msra.mxu0 0.0
        %566 = vmatprep.subr.mxu0 0.0
        %567 = vmatpush1.xpose.msra.mxu0 0.0
        %568 = vmatprep.subr.mxu0 0.0
        %569 = vmatpush1.xpose.msra.mxu0 0.0
        %570 = vmatprep.subr.mxu0 0.0
        %571 = vmatpush1.xpose.msra.mxu0 0.0
        %572 = vmatprep.subr.mxu0 0.0
        %573 = vmatpush1.xpose.msra.mxu0 0.0
        %574 = vmatprep.subr.mxu0 0.0
        %575 = vmatpush1.xpose.msra.mxu0 0.0
        %576 = vmatprep.subr.mxu0 0.0
        %577 = vmatpush1.xpose.msra.mxu0 0.0
        %578 = vmatprep.subr.mxu0 0.0
        %579 = vmatpush1.xpose.msra.mxu0 0.0
        %580 = vmatprep.subr.mxu0 0.0
        %581 = vmatpush1.xpose.msra.mxu0 0.0
        %582 = vmatprep.subr.mxu0 0.0
        %583 = vmatpush1.xpose.msra.mxu0 0.0
        %584 = vmatprep.subr.mxu0 0.0
        %585 = vmatpush1.xpose.msra.mxu0 0.0
        %586 = vmatprep.subr.mxu0 0.0
        %587 = vmatpush1.xpose.msra.mxu0 0.0
        %588 = vmatprep.subr.mxu0 0.0
        %589 = vmatpush1.xpose.msra.mxu0 0.0
        %590 = vmatprep.subr.mxu0 0.0
        %591 = vmatpush1.xpose.msra.mxu0 0.0
        %592 = vmatprep.subr.mxu0 0.0
        %593 = vmatpush1.xpose.msra.mxu0 0.0
        %594 = vmatprep.subr.mxu0 0.0
        %595 = vmatpush1.xpose.msra.mxu0 0.0
        %596 = vmatprep.subr.mxu0 0.0
        %597 = vmatpush1.xpose.msra.mxu0 0.0
        %598 = vmatprep.subr.mxu0 0.0
        %599 = vmatpush1.xpose.msra.mxu0 0.0
        %600 = vmatprep.subr.mxu0 0.0
        %601 = vmatpush1.xpose.msra.mxu0 0.0
        %602 = vmatprep.subr.mxu0 0.0
        %603 = vmatpush1.xpose.msra.mxu0 0.0
        %604 = vmatprep.subr.mxu0 0.0
        %605 = vmatpush1.xpose.msra.mxu0 0.0
        %606 = vmatprep.subr.mxu0 0.0
        %607 = vmatpush1.xpose.msra.mxu0 0.0
        %608 = vmatprep.mubr.f32.mxu0 0.0
        %609 = vmatmul.mubr.f32.gmra.mrb[0].mxu0 %v518
        %v610 = vpop.f32.mrb[0].mxu0
        %v611 = vadd.f32 0.0, %v610
        %v612 = vpop.f32.mrb[0].mxu0
        %613 = vdwg.mxu0
        %v614 = vld [vmem:[%s3] sm:$0xff]
        %v615 = vld [vmem:[%s3 + $0x8] sm:$0xff]
        %v616 = vld [vmem:[%s3 + $0x10] sm:$0xff]
        %v617 = vld [vmem:[%s3 + $0x18] sm:$0xff]
        %v618 = vld [vmem:[%s3 + $0x20] sm:$0xff]
        %v619 = vld [vmem:[%s3 + $0x28] sm:$0xff]
        %v620 = vld [vmem:[%s3 + $0x30] sm:$0xff]
        %v621 = vld [vmem:[%s3 + $0x38] sm:$0xff]
        %v623 = vsel %vm492, %v614, 0
        %v626 = vsel %vm492, %v615, 0
        %v629 = vsel %vm492, %v616, 0
        %v632 = vsel %vm492, %v617, 0
        %v635 = vsel %vm492, %v618, 0
        %v638 = vsel %vm492, %v619, 0
        %v641 = vsel %vm492, %v620, 0
        %v644 = vsel %vm492, %v621, 0
        %646 = vmatprep.subr.mxu0 0.0
        %647 = vmatpush1.xpose.msra.mxu0 %v623
        %648 = vmatprep.subr.mxu0 0.0
        %649 = vmatpush1.xpose.msra.mxu0 %v626
        %650 = vmatprep.subr.mxu0 0.0
        %651 = vmatpush1.xpose.msra.mxu0 %v629
        %652 = vmatprep.subr.mxu0 0.0
        %653 = vmatpush1.xpose.msra.mxu0 %v632
        %654 = vmatprep.subr.mxu0 0.0
        %655 = vmatpush1.xpose.msra.mxu0 %v635
        %656 = vmatprep.subr.mxu0 0.0
        %657 = vmatpush1.xpose.msra.mxu0 %v638
        %658 = vmatprep.subr.mxu0 0.0
        %659 = vmatpush1.xpose.msra.mxu0 %v641
        %660 = vmatprep.subr.mxu0 0.0
        %661 = vmatpush1.xpose.msra.mxu0 %v644
        %662 = vmatprep.subr.mxu0 0.0
        %663 = vmatpush1.xpose.msra.mxu0 0.0
        %664 = vmatprep.subr.mxu0 0.0
        %665 = vmatpush1.xpose.msra.mxu0 0.0
        %666 = vmatprep.subr.mxu0 0.0
        %667 = vmatpush1.xpose.msra.mxu0 0.0
        %668 = vmatprep.subr.mxu0 0.0
        %669 = vmatpush1.xpose.msra.mxu0 0.0
        %670 = vmatprep.subr.mxu0 0.0
        %671 = vmatpush1.xpose.msra.mxu0 0.0
        %672 = vmatprep.subr.mxu0 0.0
        %673 = vmatpush1.xpose.msra.mxu0 0.0
        %674 = vmatprep.subr.mxu0 0.0
        %675 = vmatpush1.xpose.msra.mxu0 0.0
        %676 = vmatprep.subr.mxu0 0.0
        %677 = vmatpush1.xpose.msra.mxu0 0.0
        %678 = vmatprep.subr.mxu0 0.0
        %679 = vmatpush1.xpose.msra.mxu0 0.0
        %680 = vmatprep.subr.mxu0 0.0
        %681 = vmatpush1.xpose.msra.mxu0 0.0
        %682 = vmatprep.subr.mxu0 0.0
        %683 = vmatpush1.xpose.msra.mxu0 0.0
        %684 = vmatprep.subr.mxu0 0.0
        %685 = vmatpush1.xpose.msra.mxu0 0.0
        %686 = vmatprep.subr.mxu0 0.0
        %687 = vmatpush1.xpose.msra.mxu0 0.0
        %688 = vmatprep.subr.mxu0 0.0
        %689 = vmatpush1.xpose.msra.mxu0 0.0
        %690 = vmatprep.subr.mxu0 0.0
        %691 = vmatpush1.xpose.msra.mxu0 0.0
        %692 = vmatprep.subr.mxu0 0.0
        %693 = vmatpush1.xpose.msra.mxu0 0.0
        %694 = vmatprep.subr.mxu0 0.0
        %695 = vmatpush1.xpose.msra.mxu0 0.0
        %696 = vmatprep.subr.mxu0 0.0
        %697 = vmatpush1.xpose.msra.mxu0 0.0
        %698 = vmatprep.subr.mxu0 0.0
        %699 = vmatpush1.xpose.msra.mxu0 0.0
        %700 = vmatprep.subr.mxu0 0.0
        %701 = vmatpush1.xpose.msra.mxu0 0.0
        %702 = vmatprep.subr.mxu0 0.0
        %703 = vmatpush1.xpose.msra.mxu0 0.0
        %704 = vmatprep.subr.mxu0 0.0
        %705 = vmatpush1.xpose.msra.mxu0 0.0
        %706 = vmatprep.subr.mxu0 0.0
        %707 = vmatpush1.xpose.msra.mxu0 0.0
        %708 = vmatprep.subr.mxu0 0.0
        %709 = vmatpush1.xpose.msra.mxu0 0.0
        %710 = vmatprep.mubr.f32.mxu0 0.0
        %711 = vmatmul.mubr.f32.gmra.mrb[0].mxu0 %v518
        %v712 = vpop.f32.mrb[0].mxu0
        %v713 = vadd.f32 0.0, %v712
        %v714 = vpop.f32.mrb[0].mxu0
        %715 = vdwg.mxu0
        %v716 = vxor.u32 %v713, 2147483648
        %v717 = vmul.f32 %v716, 1.442695
        %v718 = vpow.pop %v717
        %v719 = vadd.f32 %v718, 1.0
        %v720 = vrcp.pop %v719
        %v721 = vmul.f32 1.0, %v720
        %v722 = vmul.f32 %v713, %v721
        %v723 = vld [vmem:[%s5] sm:$0x3]
        %v724 = vld [vmem:[%s10] sm:$0x3]
        %v725 = vld [vmem:[%s12] sm:$0x3]
        %v726 = vlaneseq
        %v727 = vshrl.u32 %v726, 7
        %vm728 = vcmp.lt.s32.totalorder %v727, 0
        %v729 = vsub.s32 0, %v727
        %v730 = vsel %vm728, %v729, %v727
        %v731 = vshrl.u32 %v730, 3
        %v732 = vand.u32 %v730, 7
        %v733 = vsub.s32 0, %v732
        %v734 = vsel %vm728, %v733, %v732
        %vm735 = vcmp.ne.s32.totalorder %v734, 0
        %vm736 = vcmp.lt.s32.totalorder %v734, 0
        %vm737 = vmand %vm736, %vm735
        %v738 = vadd.s32 %v734, 8
        %v739 = vsel %vm737, %v738, %v734
        %v740 = vrot.slane %v611, 5
        %vm741 = vcmp.ge.s32.totalorder %v739, 3
        %v742 = vsel %vm741, 1, 0
        %vm743 = vcmp.eq.s32.totalorder %v742, 1
        %v744 = vsel %vm743, %v740, 0.0
        %v745 = vrot.slane %v611, 6
        %vm746 = vcmp.ge.s32.totalorder %v739, 2
        %v747 = vsel %vm746, 1, 0
        %vm748 = vcmp.eq.s32.totalorder %v747, 1
        %v749 = vsel %vm748, %v745, 0.0
        %v750 = vrot.slane %v611, 7
        %vm751 = vcmp.ge.s32.totalorder %v739, 1
        %v752 = vsel %vm751, 1, 0
        %vm753 = vcmp.eq.s32.totalorder %v752, 1
        %v754 = vsel %vm753, %v750, 0.0
        %v755 = vld [vmem:[%s4] sm:$0xf]
        %v756 = vlaneseq
        %v757 = vshrl.u32 %v756, 7
        %v758 = vsub.s32 0, %v757
        %v759 = vrot.slane %v755, %v758
        %v760 = vmul.f32 %v744, %v759
        %v761 = vlaneseq
        %v762 = vshrl.u32 %v761, 7
        %v763 = vsub.s32 0, %v762
        %v764 = vrot.slane %v723, %v763
        %v765 = vadd.f32 %v764, %v760
        %v766 = vlaneseq
        %v767 = vshrl.u32 %v766, 7
        %v768 = vsub.s32 1, %v767
        %v769 = vrot.slane %v755, %v768
        %v770 = vmul.f32 %v749, %v769
        %v771 = vadd.f32 %v765, %v770
        %v772 = vlaneseq
        %v773 = vshrl.u32 %v772, 7
        %v774 = vsub.s32 2, %v773
        %v775 = vrot.slane %v755, %v774
        %v776 = vmul.f32 %v754, %v775
        %v777 = vadd.f32 %v771, %v776
        %v778 = vlaneseq
        %v779 = vshrl.u32 %v778, 7
        %v780 = vsub.s32 3, %v779
        %v781 = vrot.slane %v755, %v780
        %v782 = vmul.f32 %v611, %v781
        %v783 = vadd.f32 %v777, %v782
        %v784 = vxor.u32 %v783, 2147483648
        %v785 = vmul.f32 %v784, 1.442695
        %v786 = vpow.pop %v785
        %v787 = vadd.f32 %v786, 1.0
        %v788 = vrcp.pop %v787
        %v789 = vmul.f32 1.0, %v788
        %v790 = vmul.f32 %v783, %v789
        %s791 = scalar_lea.vmem %s4, 4
        %v792 = vld [vmem:[%s791] sm:$0xf]
        %v793 = vlaneseq
        %v794 = vshrl.u32 %v793, 7
        %v795 = vsub.s32 0, %v794
        %v796 = vrot.slane %v792, %v795
        %v797 = vmul.f32 %v744, %v796
        %v798 = vlaneseq
        %v799 = vshrl.u32 %v798, 7
        %v800 = vsub.s32 1, %v799
        %v801 = vrot.slane %v723, %v800
        %v802 = vadd.f32 %v801, %v797
        %v803 = vlaneseq
        %v804 = vshrl.u32 %v803, 7
        %v805 = vsub.s32 1, %v804
        %v806 = vrot.slane %v792, %v805
        %v807 = vmul.f32 %v749, %v806
        %v808 = vadd.f32 %v802, %v807
        %v809 = vlaneseq
        %v810 = vshrl.u32 %v809, 7
        %v811 = vsub.s32 2, %v810
        %v812 = vrot.slane %v792, %v811
        %v813 = vmul.f32 %v754, %v812
        %v814 = vadd.f32 %v808, %v813
        %v815 = vlaneseq
        %v816 = vshrl.u32 %v815, 7
        %v817 = vsub.s32 3, %v816
        %v818 = vrot.slane %v792, %v817
        %v819 = vmul.f32 %v611, %v818
        %v820 = vadd.f32 %v814, %v819
        %v821 = vxor.u32 %v820, 2147483648
        %v822 = vmul.f32 %v821, 1.442695
        %v823 = vpow.pop %v822
        %v824 = vadd.f32 %v823, 1.0
        %v825 = vrcp.pop %v824
        %v826 = vmul.f32 1.0, %v825
        %v827 = vmul.f32 %v820, %v826
        %v828 = vld [vmem:[%s6] sm:$0x3]
        %vm829 = vcmask 523264
        %v831 = vsel %vm829, %v790, 0
        %v834 = vsel %vm829, %v827, 0
        %v837 = vsel %vm829, %v828, 0
        %839 = vmatprep.subr.mxu0 0.0
        %840 = vmatpush1.xpose.msra.mxu0 %v837
        %841 = vmatprep.subr.mxu0 0.0
        %842 = vmatpush1.xpose.msra.mxu0 0.0
        %843 = vmatprep.subr.mxu0 0.0
        %844 = vmatpush1.xpose.msra.mxu0 0.0
        %845 = vmatprep.subr.mxu0 0.0
        %846 = vmatpush1.xpose.msra.mxu0 0.0
        %847 = vmatprep.subr.mxu0 0.0
        %848 = vmatpush1.xpose.msra.mxu0 0.0
        %849 = vmatprep.subr.mxu0 0.0
        %850 = vmatpush1.xpose.msra.mxu0 0.0
        %851 = vmatprep.subr.mxu0 0.0
        %852 = vmatpush1.xpose.msra.mxu0 0.0
        %853 = vmatprep.subr.mxu0 0.0
        %854 = vmatpush1.xpose.msra.mxu0 0.0
        %855 = vmatprep.subr.mxu0 0.0
        %856 = vmatpush1.xpose.msra.mxu0 0.0
        %857 = vmatprep.subr.mxu0 0.0
        %858 = vmatpush1.xpose.msra.mxu0 0.0
        %859 = vmatprep.subr.mxu0 0.0
        %860 = vmatpush1.xpose.msra.mxu0 0.0
        %861 = vmatprep.subr.mxu0 0.0
        %862 = vmatpush1.xpose.msra.mxu0 0.0
        %863 = vmatprep.subr.mxu0 0.0
        %864 = vmatpush1.xpose.msra.mxu0 0.0
        %865 = vmatprep.subr.mxu0 0.0
        %866 = vmatpush1.xpose.msra.mxu0 0.0
        %867 = vmatprep.subr.mxu0 0.0
        %868 = vmatpush1.xpose.msra.mxu0 0.0
        %869 = vmatprep.subr.mxu0 0.0
        %870 = vmatpush1.xpose.msra.mxu0 0.0
        %871 = vmatprep.subr.mxu0 0.0
        %872 = vmatpush1.xpose.msra.mxu0 0.0
        %873 = vmatprep.subr.mxu0 0.0
        %874 = vmatpush1.xpose.msra.mxu0 0.0
        %875 = vmatprep.subr.mxu0 0.0
        %876 = vmatpush1.xpose.msra.mxu0 0.0
        %877 = vmatprep.subr.mxu0 0.0
        %878 = vmatpush1.xpose.msra.mxu0 0.0
        %879 = vmatprep.subr.mxu0 0.0
        %880 = vmatpush1.xpose.msra.mxu0 0.0
        %881 = vmatprep.subr.mxu0 0.0
        %882 = vmatpush1.xpose.msra.mxu0 0.0
        %883 = vmatprep.subr.mxu0 0.0
        %884 = vmatpush1.xpose.msra.mxu0 0.0
        %885 = vmatprep.subr.mxu0 0.0
        %886 = vmatpush1.xpose.msra.mxu0 0.0
        %887 = vmatprep.subr.mxu0 0.0
        %888 = vmatpush1.xpose.msra.mxu0 0.0
        %889 = vmatprep.subr.mxu0 0.0
        %890 = vmatpush1.xpose.msra.mxu0 0.0
        %891 = vmatprep.subr.mxu0 0.0
        %892 = vmatpush1.xpose.msra.mxu0 0.0
        %893 = vmatprep.subr.mxu0 0.0
        %894 = vmatpush1.xpose.msra.mxu0 0.0
        %895 = vmatprep.subr.mxu0 0.0
        %896 = vmatpush1.xpose.msra.mxu0 0.0
        %897 = vmatprep.subr.mxu0 0.0
        %898 = vmatpush1.xpose.msra.mxu0 0.0
        %899 = vmatprep.subr.mxu0 0.0
        %900 = vmatpush1.xpose.msra.mxu0 0.0
        %901 = vmatprep.subr.mxu0 0.0
        %902 = vmatpush1.xpose.msra.mxu0 0.0
        %903 = vmatprep.mubr.f32.mxu0 0.0
        %904 = vmatmul.mubr.f32.gmra.mrb[0].mxu0 %v831
        %v905 = vpop.f32.mrb[0].mxu0
        %v906 = vadd.f32 0.0, %v905
        %v907 = vpop.f32.mrb[0].mxu0
        %908 = vmatprep.mubr.f32.mxu0 0.0
        %909 = vmatmul.mubr.f32.gmra.mrb[0].mxu0 %v834
        %v910 = vpop.f32.mrb[0].mxu0
        %v911 = vadd.f32 0.0, %v910
        %v912 = vpop.f32.mrb[0].mxu0
        %913 = vdwg.mxu0
        %v914 = vld [vmem:[%s7] sm:$0xff]
        %v915 = vld [vmem:[%s7 + $0x8] sm:$0xff]
        %v917 = vsel %vm829, %v914, 0
        %v920 = vsel %vm829, %v915, 0
        %922 = vmatprep.subr.mxu0 0.0
        %923 = vmatpush1.xpose.msra.mxu0 %v917
        %924 = vmatprep.subr.mxu0 0.0
        %925 = vmatpush1.xpose.msra.mxu0 %v920
        %926 = vmatprep.subr.mxu0 0.0
        %927 = vmatpush1.xpose.msra.mxu0 0.0
        %928 = vmatprep.subr.mxu0 0.0
        %929 = vmatpush1.xpose.msra.mxu0 0.0
        %930 = vmatprep.subr.mxu0 0.0
        %931 = vmatpush1.xpose.msra.mxu0 0.0
        %932 = vmatprep.subr.mxu0 0.0
        %933 = vmatpush1.xpose.msra.mxu0 0.0
        %934 = vmatprep.subr.mxu0 0.0
        %935 = vmatpush1.xpose.msra.mxu0 0.0
        %936 = vmatprep.subr.mxu0 0.0
        %937 = vmatpush1.xpose.msra.mxu0 0.0
        %938 = vmatprep.subr.mxu0 0.0
        %939 = vmatpush1.xpose.msra.mxu0 0.0
        %940 = vmatprep.subr.mxu0 0.0
        %941 = vmatpush1.xpose.msra.mxu0 0.0
        %942 = vmatprep.subr.mxu0 0.0
        %943 = vmatpush1.xpose.msra.mxu0 0.0
        %944 = vmatprep.subr.mxu0 0.0
        %945 = vmatpush1.xpose.msra.mxu0 0.0
        %946 = vmatprep.subr.mxu0 0.0
        %947 = vmatpush1.xpose.msra.mxu0 0.0
        %948 = vmatprep.subr.mxu0 0.0
        %949 = vmatpush1.xpose.msra.mxu0 0.0
        %950 = vmatprep.subr.mxu0 0.0
        %951 = vmatpush1.xpose.msra.mxu0 0.0
        %952 = vmatprep.subr.mxu0 0.0
        %953 = vmatpush1.xpose.msra.mxu0 0.0
        %954 = vmatprep.subr.mxu0 0.0
        %955 = vmatpush1.xpose.msra.mxu0 0.0
        %956 = vmatprep.subr.mxu0 0.0
        %957 = vmatpush1.xpose.msra.mxu0 0.0
        %958 = vmatprep.subr.mxu0 0.0
        %959 = vmatpush1.xpose.msra.mxu0 0.0
        %960 = vmatprep.subr.mxu0 0.0
        %961 = vmatpush1.xpose.msra.mxu0 0.0
        %962 = vmatprep.subr.mxu0 0.0
        %963 = vmatpush1.xpose.msra.mxu0 0.0
        %964 = vmatprep.subr.mxu0 0.0
        %965 = vmatpush1.xpose.msra.mxu0 0.0
        %966 = vmatprep.subr.mxu0 0.0
        %967 = vmatpush1.xpose.msra.mxu0 0.0
        %968 = vmatprep.subr.mxu0 0.0
        %969 = vmatpush1.xpose.msra.mxu0 0.0
        %970 = vmatprep.subr.mxu0 0.0
        %971 = vmatpush1.xpose.msra.mxu0 0.0
        %972 = vmatprep.subr.mxu0 0.0
        %973 = vmatpush1.xpose.msra.mxu0 0.0
        %974 = vmatprep.subr.mxu0 0.0
        %975 = vmatpush1.xpose.msra.mxu0 0.0
        %976 = vmatprep.subr.mxu0 0.0
        %977 = vmatpush1.xpose.msra.mxu0 0.0
        %978 = vmatprep.subr.mxu0 0.0
        %979 = vmatpush1.xpose.msra.mxu0 0.0
        %980 = vmatprep.subr.mxu0 0.0
        %981 = vmatpush1.xpose.msra.mxu0 0.0
        %982 = vmatprep.subr.mxu0 0.0
        %983 = vmatpush1.xpose.msra.mxu0 0.0
        %984 = vmatprep.subr.mxu0 0.0
        %985 = vmatpush1.xpose.msra.mxu0 0.0
        %986 = vmatprep.mubr.f32.mxu0 0.0
        %987 = vmatmul.mubr.f32.gmra.mrb[0].mxu0 %v831
        %v988 = vpop.f32.mrb[0].mxu0
        %v989 = vadd.f32 0.0, %v988
        %v990 = vpop.f32.mrb[0].mxu0
        %991 = vmatprep.mubr.f32.mxu0 0.0
        %992 = vmatmul.mubr.f32.gmra.mrb[0].mxu0 %v834
        %v993 = vpop.f32.mrb[0].mxu0
        %v994 = vadd.f32 0.0, %v993
        %v995 = vpop.f32.mrb[0].mxu0
        %996 = vdwg.mxu0
        %v997 = vld [vmem:[%s8] sm:$0xff]
        %v998 = vld [vmem:[%s8 + $0x8] sm:$0xff]
        %v1000 = vsel %vm829, %v997, 0
        %v1003 = vsel %vm829, %v998, 0
        %1005 = vmatprep.subr.mxu0 0.0
        %1006 = vmatpush1.xpose.msra.mxu0 %v1000
        %1007 = vmatprep.subr.mxu0 0.0
        %1008 = vmatpush1.xpose.msra.mxu0 %v1003
        %1009 = vmatprep.subr.mxu0 0.0
        %1010 = vmatpush1.xpose.msra.mxu0 0.0
        %1011 = vmatprep.subr.mxu0 0.0
        %1012 = vmatpush1.xpose.msra.mxu0 0.0
        %1013 = vmatprep.subr.mxu0 0.0
        %1014 = vmatpush1.xpose.msra.mxu0 0.0
        %1015 = vmatprep.subr.mxu0 0.0
        %1016 = vmatpush1.xpose.msra.mxu0 0.0
        %1017 = vmatprep.subr.mxu0 0.0
        %1018 = vmatpush1.xpose.msra.mxu0 0.0
        %1019 = vmatprep.subr.mxu0 0.0
        %1020 = vmatpush1.xpose.msra.mxu0 0.0
        %1021 = vmatprep.subr.mxu0 0.0
        %1022 = vmatpush1.xpose.msra.mxu0 0.0
        %1023 = vmatprep.subr.mxu0 0.0
        %1024 = vmatpush1.xpose.msra.mxu0 0.0
        %1025 = vmatprep.subr.mxu0 0.0
        %1026 = vmatpush1.xpose.msra.mxu0 0.0
        %1027 = vmatprep.subr.mxu0 0.0
        %1028 = vmatpush1.xpose.msra.mxu0 0.0
        %1029 = vmatprep.subr.mxu0 0.0
        %1030 = vmatpush1.xpose.msra.mxu0 0.0
        %1031 = vmatprep.subr.mxu0 0.0
        %1032 = vmatpush1.xpose.msra.mxu0 0.0
        %1033 = vmatprep.subr.mxu0 0.0
        %1034 = vmatpush1.xpose.msra.mxu0 0.0
        %1035 = vmatprep.subr.mxu0 0.0
        %1036 = vmatpush1.xpose.msra.mxu0 0.0
        %1037 = vmatprep.subr.mxu0 0.0
        %1038 = vmatpush1.xpose.msra.mxu0 0.0
        %1039 = vmatprep.subr.mxu0 0.0
        %1040 = vmatpush1.xpose.msra.mxu0 0.0
        %1041 = vmatprep.subr.mxu0 0.0
        %1042 = vmatpush1.xpose.msra.mxu0 0.0
        %1043 = vmatprep.subr.mxu0 0.0
        %1044 = vmatpush1.xpose.msra.mxu0 0.0
        %1045 = vmatprep.subr.mxu0 0.0
        %1046 = vmatpush1.xpose.msra.mxu0 0.0
        %1047 = vmatprep.subr.mxu0 0.0
        %1048 = vmatpush1.xpose.msra.mxu0 0.0
        %1049 = vmatprep.subr.mxu0 0.0
        %1050 = vmatpush1.xpose.msra.mxu0 0.0
        %1051 = vmatprep.subr.mxu0 0.0
        %1052 = vmatpush1.xpose.msra.mxu0 0.0
        %1053 = vmatprep.subr.mxu0 0.0
        %1054 = vmatpush1.xpose.msra.mxu0 0.0
        %1055 = vmatprep.subr.mxu0 0.0
        %1056 = vmatpush1.xpose.msra.mxu0 0.0
        %1057 = vmatprep.subr.mxu0 0.0
        %1058 = vmatpush1.xpose.msra.mxu0 0.0
        %1059 = vmatprep.subr.mxu0 0.0
        %1060 = vmatpush1.xpose.msra.mxu0 0.0
        %1061 = vmatprep.subr.mxu0 0.0
        %1062 = vmatpush1.xpose.msra.mxu0 0.0
        %1063 = vmatprep.subr.mxu0 0.0
        %1064 = vmatpush1.xpose.msra.mxu0 0.0
        %1065 = vmatprep.subr.mxu0 0.0
        %1066 = vmatpush1.xpose.msra.mxu0 0.0
        %1067 = vmatprep.subr.mxu0 0.0
        %1068 = vmatpush1.xpose.msra.mxu0 0.0
        %1069 = vmatprep.mubr.f32.mxu0 0.0
        %1070 = vmatmul.mubr.f32.gmra.mrb[0].mxu0 %v831
        %v1071 = vpop.f32.mrb[0].mxu0
        %v1072 = vadd.f32 0.0, %v1071
        %v1073 = vpop.f32.mrb[0].mxu0
        %1074 = vmatprep.mubr.f32.mxu0 0.0
        %1075 = vmatmul.mubr.f32.gmra.mrb[0].mxu0 %v834
        %v1076 = vpop.f32.mrb[0].mxu0
        %v1077 = vadd.f32 0.0, %v1076
        %v1078 = vpop.f32.mrb[0].mxu0
        %1079 = vdwg.mxu0
        %v1080 = vld [vmem:[%s9] sm:$0xff]
        %v1081 = vld [vmem:[%s9 + $0x8] sm:$0xff]
        %v1082 = vld [vmem:[%s9 + $0x10] sm:$0xff]
        %v1083 = vld [vmem:[%s9 + $0x18] sm:$0xff]
        %v1084 = vld [vmem:[%s9 + $0x20] sm:$0xff]
        %v1085 = vld [vmem:[%s9 + $0x28] sm:$0xff]
        %v1086 = vld [vmem:[%s9 + $0x30] sm:$0xff]
        %v1087 = vld [vmem:[%s9 + $0x38] sm:$0xff]
        %v1088 = vlaneseq
        %v1089 = vshrl.u32 %v1088, 7
        %v1090 = vsub.s32 0, %v1089
        %v1091 = vrot.slane %v724, %v1090
        %vm1092 = vcmask 15360
        %v1094 = vsel %vm1092, %v906, 0
        %v1097 = vsel %vm1092, %v1080, 0
        %v1100 = vsel %vm1092, %v1081, 0
        %v1103 = vsel %vm1092, %v1082, 0
        %v1106 = vsel %vm1092, %v1083, 0
        %v1109 = vsel %vm1092, %v1084, 0
        %v1112 = vsel %vm1092, %v1085, 0
        %v1115 = vsel %vm1092, %v1086, 0
        %v1118 = vsel %vm1092, %v1087, 0
        %1120 = vmatprep.subr.mxu0 0.0
        %1121 = vmatpush1.xpose.msra.mxu0 %v1097
        %1122 = vmatprep.subr.mxu0 0.0
        %1123 = vmatpush1.xpose.msra.mxu0 %v1100
        %1124 = vmatprep.subr.mxu0 0.0
        %1125 = vmatpush1.xpose.msra.mxu0 %v1103
        %1126 = vmatprep.subr.mxu0 0.0
        %1127 = vmatpush1.xpose.msra.mxu0 %v1106
        %1128 = vmatprep.subr.mxu0 0.0
        %1129 = vmatpush1.xpose.msra.mxu0 %v1109
        %1130 = vmatprep.subr.mxu0 0.0
        %1131 = vmatpush1.xpose.msra.mxu0 %v1112
        %1132 = vmatprep.subr.mxu0 0.0
        %1133 = vmatpush1.xpose.msra.mxu0 %v1115
        %1134 = vmatprep.subr.mxu0 0.0
        %1135 = vmatpush1.xpose.msra.mxu0 %v1118
        %1136 = vmatprep.subr.mxu0 0.0
        %1137 = vmatpush1.xpose.msra.mxu0 0.0
        %1138 = vmatprep.subr.mxu0 0.0
        %1139 = vmatpush1.xpose.msra.mxu0 0.0
        %1140 = vmatprep.subr.mxu0 0.0
        %1141 = vmatpush1.xpose.msra.mxu0 0.0
        %1142 = vmatprep.subr.mxu0 0.0
        %1143 = vmatpush1.xpose.msra.mxu0 0.0
        %1144 = vmatprep.subr.mxu0 0.0
        %1145 = vmatpush1.xpose.msra.mxu0 0.0
        %1146 = vmatprep.subr.mxu0 0.0
        %1147 = vmatpush1.xpose.msra.mxu0 0.0
        %1148 = vmatprep.subr.mxu0 0.0
        %1149 = vmatpush1.xpose.msra.mxu0 0.0
        %1150 = vmatprep.subr.mxu0 0.0
        %1151 = vmatpush1.xpose.msra.mxu0 0.0
        %1152 = vmatprep.subr.mxu0 0.0
        %1153 = vmatpush1.xpose.msra.mxu0 0.0
        %1154 = vmatprep.subr.mxu0 0.0
        %1155 = vmatpush1.xpose.msra.mxu0 0.0
        %1156 = vmatprep.subr.mxu0 0.0
        %1157 = vmatpush1.xpose.msra.mxu0 0.0
        %1158 = vmatprep.subr.mxu0 0.0
        %1159 = vmatpush1.xpose.msra.mxu0 0.0
        %1160 = vmatprep.subr.mxu0 0.0
        %1161 = vmatpush1.xpose.msra.mxu0 0.0
        %1162 = vmatprep.subr.mxu0 0.0
        %1163 = vmatpush1.xpose.msra.mxu0 0.0
        %1164 = vmatprep.subr.mxu0 0.0
        %1165 = vmatpush1.xpose.msra.mxu0 0.0
        %1166 = vmatprep.subr.mxu0 0.0
        %1167 = vmatpush1.xpose.msra.mxu0 0.0
        %1168 = vmatprep.subr.mxu0 0.0
        %1169 = vmatpush1.xpose.msra.mxu0 0.0
        %1170 = vmatprep.subr.mxu0 0.0
        %1171 = vmatpush1.xpose.msra.mxu0 0.0
        %1172 = vmatprep.subr.mxu0 0.0
        %1173 = vmatpush1.xpose.msra.mxu0 0.0
        %1174 = vmatprep.subr.mxu0 0.0
        %1175 = vmatpush1.xpose.msra.mxu0 0.0
        %1176 = vmatprep.subr.mxu0 0.0
        %1177 = vmatpush1.xpose.msra.mxu0 0.0
        %1178 = vmatprep.subr.mxu0 0.0
        %1179 = vmatpush1.xpose.msra.mxu0 0.0
        %1180 = vmatprep.subr.mxu0 0.0
        %1181 = vmatpush1.xpose.msra.mxu0 0.0
        %1182 = vmatprep.subr.mxu0 0.0
        %1183 = vmatpush1.xpose.msra.mxu0 0.0
        %1184 = vmatprep.mubr.f32.mxu0 0.0
        %1185 = vmatmul.mubr.f32.gmra.mrb[0].mxu0 %v1094
        %v1186 = vpop.f32.mrb[0].mxu0
        %v1187 = vadd.f32 %v1091, %v1186
        %v1188 = vpop.f32.mrb[0].mxu0
        %1189 = vdwg.mxu0
        %vm1190 = vcmp.gt.f32.partialorder %v1187, 20.0
        %v1191 = vmin.f32 %v1187, 20.0
        %v1192 = vmul.f32 %v1191, 1.442695
        %v1193 = vpow.pop %v1192
        %v1194 = vadd.f32 %v1193, 1.0
        %v1195 = vlog2.pop %v1194
        %v1196 = vmul.f32 %v1195, 0.6931472
        %v1197 = vmul.f32 -0.5, %v1193
        %v1198 = vadd.f32 %v1197, 1.0
        %v1199 = vmul.f32 %v1198, %v1193
        %v1200 = vand.u32 2147483647, %v1193
        %vm1201 = vcmp.lt.f32.partialorder %v1200, 0.0004427343
        %v1202 = vsel %vm1201, %v1199, %v1196
        %v1203 = vsel %vm1190, %v1187, %v1202
        %v1204 = vld [vmem:[%s11] sm:$0xff]
        %v1205 = vld [vmem:[%s11 + $0x8] sm:$0xff]
        %v1206 = vmul.f32 %v1204, 1.442695
        %v1207 = vpow.pop %v1206
        %v1208 = vmul.f32 %v1205, 1.442695
        %v1209 = vpow.pop %v1208
        %v1210 = vsub.f32 0.0, %v1207
        %v1211 = vsub.f32 0.0, %v1209
        %v1213 = vcombine.high %v1203, %v1203
        %v1215 = vunpack.c.l.s4 1966171168
        %v1216 = vunpack.c.0.s8 %v1215
        %v1217 = vlaneseq
        %v1218 = vshrl.u32 %v1217, 7
        %v1219 = vsub.s32 %v1216, %v1218
        %v1220 = vrot.slane %v1203, %v1219
        %v1222 = vunpack.c.l.s4 1966171168
        %v1223 = vunpack.c.0.s8 %v1222
        %v1224 = vlaneseq
        %v1225 = vshrl.u32 %v1224, 7
        %v1226 = vsub.s32 %v1223, %v1225
        %v1227 = vrot.slane %v1213, %v1226
        %v1228 = vcombine.high %v1220, %v1220
        %v1229 = vcombine.high %v1227, %v1227
        %v1231 = vunpack.c.l.s4 1966171168
        %v1232 = vunpack.c.0.s8 %v1231
        %v1233 = vlaneseq
        %v1234 = vshrl.u32 %v1233, 7
        %v1235 = vsub.s32 %v1232, %v1234
        %v1236 = vrot.slane %v1220, %v1235
        %v1238 = vunpack.c.l.s4 1966171168
        %v1239 = vunpack.c.0.s8 %v1238
        %v1240 = vlaneseq
        %v1241 = vshrl.u32 %v1240, 7
        %v1242 = vsub.s32 %v1239, %v1241
        %v1243 = vrot.slane %v1227, %v1242
        %v1245 = vunpack.c.l.s4 1966171168
        %v1246 = vunpack.c.0.s8 %v1245
        %v1247 = vlaneseq
        %v1248 = vshrl.u32 %v1247, 7
        %v1249 = vsub.s32 %v1246, %v1248
        %v1250 = vrot.slane %v1228, %v1249
        %v1252 = vunpack.c.l.s4 1966171168
        %v1253 = vunpack.c.0.s8 %v1252
        %v1254 = vlaneseq
        %v1255 = vshrl.u32 %v1254, 7
        %v1256 = vsub.s32 %v1253, %v1255
        %v1257 = vrot.slane %v1229, %v1256
        %v1258 = vcombine.high %v1236, %v1236
        %v1259 = vcombine.high %v1243, %v1243
        %v1260 = vcombine.high %v1250, %v1250
        %v1261 = vcombine.high %v1257, %v1257
        %v1262 = vlaneseq
        %v1263 = vshrl.u32 %v1262, 7
        %v1264 = vsub.s32 0, %v1263
        %v1265 = vrot.slane %v1236, %v1264
        %v1266 = vlaneseq
        %v1267 = vshrl.u32 %v1266, 7
        %v1268 = vsub.s32 0, %v1267
        %v1269 = vrot.slane %v1250, %v1268
        %v1270 = vlaneseq
        %v1271 = vshrl.u32 %v1270, 7
        %v1272 = vsub.s32 0, %v1271
        %v1273 = vrot.slane %v1258, %v1272
        %v1274 = vlaneseq
        %v1275 = vshrl.u32 %v1274, 7
        %v1276 = vsub.s32 0, %v1275
        %v1277 = vrot.slane %v1260, %v1276
        %v1278 = vlaneseq
        %v1279 = vshrl.u32 %v1278, 7
        %v1280 = vsub.s32 0, %v1279
        %v1281 = vrot.slane %v1243, %v1280
        %v1282 = vlaneseq
        %v1283 = vshrl.u32 %v1282, 7
        %v1284 = vsub.s32 0, %v1283
        %v1285 = vrot.slane %v1257, %v1284
        %v1286 = vlaneseq
        %v1287 = vshrl.u32 %v1286, 7
        %v1288 = vsub.s32 0, %v1287
        %v1289 = vrot.slane %v1259, %v1288
        %v1290 = vlaneseq
        %v1291 = vshrl.u32 %v1290, 7
        %v1292 = vsub.s32 0, %v1291
        %v1293 = vrot.slane %v1261, %v1292
        %v1302 = vmul.f32 %v1265, %v1210
        %v1303 = vmul.f32 %v1265, %v1211
        %v1304 = vmul.f32 %v1269, %v1210
        %v1305 = vmul.f32 %v1269, %v1211
        %v1306 = vmul.f32 %v1273, %v1210
        %v1307 = vmul.f32 %v1273, %v1211
        %v1308 = vmul.f32 %v1277, %v1210
        %v1309 = vmul.f32 %v1277, %v1211
        %v1310 = vmul.f32 %v1281, %v1210
        %v1311 = vmul.f32 %v1281, %v1211
        %v1312 = vmul.f32 %v1285, %v1210
        %v1313 = vmul.f32 %v1285, %v1211
        %v1314 = vmul.f32 %v1289, %v1210
        %v1315 = vmul.f32 %v1289, %v1211
        %v1316 = vmul.f32 %v1293, %v1210
        %v1317 = vmul.f32 %v1293, %v1211
        %v1318 = vmul.f32 %v1302, 1.442695
        %v1319 = vpow.pop %v1318
        %v1320 = vmul.f32 %v1303, 1.442695
        %v1321 = vpow.pop %v1320
        %v1322 = vmul.f32 %v1304, 1.442695
        %v1323 = vpow.pop %v1322
        %v1324 = vmul.f32 %v1305, 1.442695
        %v1325 = vpow.pop %v1324
        %v1326 = vmul.f32 %v1306, 1.442695
        %v1327 = vpow.pop %v1326
        %v1328 = vmul.f32 %v1307, 1.442695
        %v1329 = vpow.pop %v1328
        %v1330 = vmul.f32 %v1308, 1.442695
        %v1331 = vpow.pop %v1330
        %v1332 = vmul.f32 %v1309, 1.442695
        %v1333 = vpow.pop %v1332
        %v1334 = vmul.f32 %v1310, 1.442695
        %v1335 = vpow.pop %v1334
        %v1336 = vmul.f32 %v1311, 1.442695
        %v1337 = vpow.pop %v1336
        %v1338 = vmul.f32 %v1312, 1.442695
        %v1339 = vpow.pop %v1338
        %v1340 = vmul.f32 %v1313, 1.442695
        %v1341 = vpow.pop %v1340
        %v1342 = vmul.f32 %v1314, 1.442695
        %v1343 = vpow.pop %v1342
        %v1344 = vmul.f32 %v1315, 1.442695
        %v1345 = vpow.pop %v1344
        %v1346 = vmul.f32 %v1316, 1.442695
        %v1347 = vpow.pop %v1346
        %v1348 = vmul.f32 %v1317, 1.442695
        %v1349 = vpow.pop %v1348
        %v1350 = vlaneseq
        %v1351 = vshrl.u32 %v1350, 7
        %v1352 = vsub.s32 0, %v1351
        %v1353 = vrot.slane %v989, %v1352
        %1355 = vbcast.lane.b32.xlu0 %v1353, 256
        %v1356 = vpop.permute.xlu0 %1355
        %s1358 = sor.u32 256, 8
        %1359 = vbcast.lane.b32.xlu0 %v1353, %s1358
        %v1360 = vpop.permute.xlu0 %1359
        %v1361 = vlaneseq
        %v1362 = vshrl.u32 %v1361, 7
        %v1363 = vsub.s32 1, %v1362
        %v1364 = vrot.slane %v989, %v1363
        %1366 = vbcast.lane.b32.xlu0 %v1364, 256
        %v1367 = vpop.permute.xlu0 %1366
        %s1369 = sor.u32 256, 8
        %1370 = vbcast.lane.b32.xlu0 %v1364, %s1369
        %v1371 = vpop.permute.xlu0 %1370
        %v1372 = vlaneseq
        %v1373 = vshrl.u32 %v1372, 7
        %v1374 = vsub.s32 2, %v1373
        %v1375 = vrot.slane %v989, %v1374
        %1377 = vbcast.lane.b32.xlu0 %v1375, 256
        %v1378 = vpop.permute.xlu0 %1377
        %s1380 = sor.u32 256, 8
        %1381 = vbcast.lane.b32.xlu0 %v1375, %s1380
        %v1382 = vpop.permute.xlu0 %1381
        %v1383 = vlaneseq
        %v1384 = vshrl.u32 %v1383, 7
        %v1385 = vsub.s32 3, %v1384
        %v1386 = vrot.slane %v989, %v1385
        %1388 = vbcast.lane.b32.xlu0 %v1386, 256
        %v1389 = vpop.permute.xlu0 %1388
        %s1391 = sor.u32 256, 8
        %1392 = vbcast.lane.b32.xlu0 %v1386, %s1391
        %v1393 = vpop.permute.xlu0 %1392
        %v1394 = vlaneseq
        %v1395 = vshrl.u32 %v1394, 7
        %v1396 = vsub.s32 4, %v1395
        %v1397 = vrot.slane %v989, %v1396
        %1399 = vbcast.lane.b32.xlu0 %v1397, 256
        %v1400 = vpop.permute.xlu0 %1399
        %s1402 = sor.u32 256, 8
        %1403 = vbcast.lane.b32.xlu0 %v1397, %s1402
        %v1404 = vpop.permute.xlu0 %1403
        %v1405 = vlaneseq
        %v1406 = vshrl.u32 %v1405, 7
        %v1407 = vsub.s32 5, %v1406
        %v1408 = vrot.slane %v989, %v1407
        %1410 = vbcast.lane.b32.xlu0 %v1408, 256
        %v1411 = vpop.permute.xlu0 %1410
        %s1413 = sor.u32 256, 8
        %1414 = vbcast.lane.b32.xlu0 %v1408, %s1413
        %v1415 = vpop.permute.xlu0 %1414
        %v1416 = vlaneseq
        %v1417 = vshrl.u32 %v1416, 7
        %v1418 = vsub.s32 6, %v1417
        %v1419 = vrot.slane %v989, %v1418
        %1421 = vbcast.lane.b32.xlu0 %v1419, 256
        %v1422 = vpop.permute.xlu0 %1421
        %s1424 = sor.u32 256, 8
        %1425 = vbcast.lane.b32.xlu0 %v1419, %s1424
        %v1426 = vpop.permute.xlu0 %1425
        %v1427 = vlaneseq
        %v1428 = vshrl.u32 %v1427, 7
        %v1429 = vsub.s32 7, %v1428
        %v1430 = vrot.slane %v989, %v1429
        %1432 = vbcast.lane.b32.xlu0 %v1430, 256
        %v1433 = vpop.permute.xlu0 %1432
        %s1435 = sor.u32 256, 8
        %1436 = vbcast.lane.b32.xlu0 %v1430, %s1435
        %v1437 = vpop.permute.xlu0 %1436
        %v1438 = vmul.f32 %v1203, %v790
        %v1440 = vcombine.high %v1438, %v1438
        %v1442 = vunpack.c.l.s4 1966171168
        %v1443 = vunpack.c.0.s8 %v1442
        %v1444 = vlaneseq
        %v1445 = vshrl.u32 %v1444, 7
        %v1446 = vsub.s32 %v1443, %v1445
        %v1447 = vrot.slane %v1438, %v1446
        %v1449 = vunpack.c.l.s4 1966171168
        %v1450 = vunpack.c.0.s8 %v1449
        %v1451 = vlaneseq
        %v1452 = vshrl.u32 %v1451, 7
        %v1453 = vsub.s32 %v1450, %v1452
        %v1454 = vrot.slane %v1440, %v1453
        %v1455 = vcombine.high %v1447, %v1447
        %v1456 = vcombine.high %v1454, %v1454
        %v1458 = vunpack.c.l.s4 1966171168
        %v1459 = vunpack.c.0.s8 %v1458
        %v1460 = vlaneseq
        %v1461 = vshrl.u32 %v1460, 7
        %v1462 = vsub.s32 %v1459, %v1461
        %v1463 = vrot.slane %v1447, %v1462
        %v1465 = vunpack.c.l.s4 1966171168
        %v1466 = vunpack.c.0.s8 %v1465
        %v1467 = vlaneseq
        %v1468 = vshrl.u32 %v1467, 7
        %v1469 = vsub.s32 %v1466, %v1468
        %v1470 = vrot.slane %v1454, %v1469
        %v1472 = vunpack.c.l.s4 1966171168
        %v1473 = vunpack.c.0.s8 %v1472
        %v1474 = vlaneseq
        %v1475 = vshrl.u32 %v1474, 7
        %v1476 = vsub.s32 %v1473, %v1475
        %v1477 = vrot.slane %v1455, %v1476
        %v1479 = vunpack.c.l.s4 1966171168
        %v1480 = vunpack.c.0.s8 %v1479
        %v1481 = vlaneseq
        %v1482 = vshrl.u32 %v1481, 7
        %v1483 = vsub.s32 %v1480, %v1482
        %v1484 = vrot.slane %v1456, %v1483
        %v1485 = vcombine.high %v1463, %v1463
        %v1486 = vcombine.high %v1470, %v1470
        %v1487 = vcombine.high %v1477, %v1477
        %v1488 = vcombine.high %v1484, %v1484
        %v1489 = vlaneseq
        %v1490 = vshrl.u32 %v1489, 7
        %v1491 = vsub.s32 0, %v1490
        %v1492 = vrot.slane %v1463, %v1491
        %v1493 = vlaneseq
        %v1494 = vshrl.u32 %v1493, 7
        %v1495 = vsub.s32 0, %v1494
        %v1496 = vrot.slane %v1477, %v1495
        %v1497 = vlaneseq
        %v1498 = vshrl.u32 %v1497, 7
        %v1499 = vsub.s32 0, %v1498
        %v1500 = vrot.slane %v1485, %v1499
        %v1501 = vlaneseq
        %v1502 = vshrl.u32 %v1501, 7
        %v1503 = vsub.s32 0, %v1502
        %v1504 = vrot.slane %v1487, %v1503
        %v1505 = vlaneseq
        %v1506 = vshrl.u32 %v1505, 7
        %v1507 = vsub.s32 0, %v1506
        %v1508 = vrot.slane %v1470, %v1507
        %v1509 = vlaneseq
        %v1510 = vshrl.u32 %v1509, 7
        %v1511 = vsub.s32 0, %v1510
        %v1512 = vrot.slane %v1484, %v1511
        %v1513 = vlaneseq
        %v1514 = vshrl.u32 %v1513, 7
        %v1515 = vsub.s32 0, %v1514
        %v1516 = vrot.slane %v1486, %v1515
        %v1517 = vlaneseq
        %v1518 = vshrl.u32 %v1517, 7
        %v1519 = vsub.s32 0, %v1518
        %v1520 = vrot.slane %v1488, %v1519
        %v1529 = vmul.f32 %v1356, %v1492
        %v1530 = vmul.f32 %v1360, %v1492
        %v1531 = vmul.f32 %v1367, %v1496
        %v1532 = vmul.f32 %v1371, %v1496
        %v1533 = vmul.f32 %v1378, %v1500
        %v1534 = vmul.f32 %v1382, %v1500
        %v1535 = vmul.f32 %v1389, %v1504
        %v1536 = vmul.f32 %v1393, %v1504
        %v1537 = vmul.f32 %v1400, %v1508
        %v1538 = vmul.f32 %v1404, %v1508
        %v1539 = vmul.f32 %v1411, %v1512
        %v1540 = vmul.f32 %v1415, %v1512
        %v1541 = vmul.f32 %v1422, %v1516
        %v1542 = vmul.f32 %v1426, %v1516
        %v1543 = vmul.f32 %v1433, %v1520
        %v1544 = vmul.f32 %v1437, %v1520
        %v1545 = vmul.f32 %v1319, 0.0
        %v1546 = vmul.f32 %v1321, 0.0
        %v1547 = vadd.f32 %v1545, %v1529
        %v1548 = vadd.f32 %v1546, %v1530
        %v1549 = vlaneseq
        %v1550 = vshrl.u32 %v1549, 7
        %v1551 = vsub.s32 0, %v1550
        %v1552 = vrot.slane %v1072, %v1551
        %1554 = vbcast.lane.b32.xlu0 %v1552, 256
        %v1555 = vpop.permute.xlu0 %1554
        %s1557 = sor.u32 256, 8
        %1558 = vbcast.lane.b32.xlu0 %v1552, %s1557
        %v1559 = vpop.permute.xlu0 %1558
        %v1560 = vmul.f32 %v1547, %v1555
        %v1561 = vmul.f32 %v1548, %v1559
        %v1562 = vsel %vm829, %v1560, 0.0
        %v1563 = vsel %vm829, %v1561, 0.0
        %v1564 = vadd.f32 %v1562, %v1563
        %v1565 = vrot.slane %v1564, 4
        %v1566 = vadd.f32 %v1564, %v1565
        %v1567 = vrot.slane %v1566, 2
        %v1568 = vadd.f32 %v1566, %v1567
        %v1569 = vrot.slane %v1568, 1
        %v1570 = vadd.f32 %v1568, %v1569
        %v1571 = vmul.f32 %v1547, %v1323
        %v1572 = vmul.f32 %v1548, %v1325
        %v1573 = vadd.f32 %v1571, %v1531
        %v1574 = vadd.f32 %v1572, %v1532
        %v1575 = vlaneseq
        %v1576 = vshrl.u32 %v1575, 7
        %v1577 = vsub.s32 1, %v1576
        %v1578 = vrot.slane %v1072, %v1577
        %1580 = vbcast.lane.b32.xlu0 %v1578, 256
        %v1581 = vpop.permute.xlu0 %1580
        %s1583 = sor.u32 256, 8
        %1584 = vbcast.lane.b32.xlu0 %v1578, %s1583
        %v1585 = vpop.permute.xlu0 %1584
        %v1586 = vmul.f32 %v1573, %v1581
        %v1587 = vmul.f32 %v1574, %v1585
        %v1588 = vsel %vm829, %v1586, 0.0
        %v1589 = vsel %vm829, %v1587, 0.0
        %v1590 = vadd.f32 %v1588, %v1589
        %v1591 = vrot.slane %v1590, 4
        %v1592 = vadd.f32 %v1590, %v1591
        %v1593 = vrot.slane %v1592, 2
        %v1594 = vadd.f32 %v1592, %v1593
        %v1595 = vrot.slane %v1594, 1
        %v1596 = vadd.f32 %v1594, %v1595
        %v1597 = vmul.f32 %v1573, %v1327
        %v1598 = vmul.f32 %v1574, %v1329
        %v1599 = vadd.f32 %v1597, %v1533
        %v1600 = vadd.f32 %v1598, %v1534
        %v1601 = vlaneseq
        %v1602 = vshrl.u32 %v1601, 7
        %v1603 = vsub.s32 2, %v1602
        %v1604 = vrot.slane %v1072, %v1603
        %1606 = vbcast.lane.b32.xlu0 %v1604, 256
        %v1607 = vpop.permute.xlu0 %1606
        %s1609 = sor.u32 256, 8
        %1610 = vbcast.lane.b32.xlu0 %v1604, %s1609
        %v1611 = vpop.permute.xlu0 %1610
        %v1612 = vmul.f32 %v1599, %v1607
        %v1613 = vmul.f32 %v1600, %v1611
        %v1614 = vsel %vm829, %v1612, 0.0
        %v1615 = vsel %vm829, %v1613, 0.0
        %v1616 = vadd.f32 %v1614, %v1615
        %v1617 = vrot.slane %v1616, 4
        %v1618 = vadd.f32 %v1616, %v1617
        %v1619 = vrot.slane %v1618, 2
        %v1620 = vadd.f32 %v1618, %v1619
        %v1621 = vrot.slane %v1620, 1
        %v1622 = vadd.f32 %v1620, %v1621
        %v1623 = vmul.f32 %v1599, %v1331
        %v1624 = vmul.f32 %v1600, %v1333
        %v1625 = vadd.f32 %v1623, %v1535
        %v1626 = vadd.f32 %v1624, %v1536
        %v1627 = vlaneseq
        %v1628 = vshrl.u32 %v1627, 7
        %v1629 = vsub.s32 3, %v1628
        %v1630 = vrot.slane %v1072, %v1629
        %1632 = vbcast.lane.b32.xlu0 %v1630, 256
        %v1633 = vpop.permute.xlu0 %1632
        %s1635 = sor.u32 256, 8
        %1636 = vbcast.lane.b32.xlu0 %v1630, %s1635
        %v1637 = vpop.permute.xlu0 %1636
        %v1638 = vmul.f32 %v1625, %v1633
        %v1639 = vmul.f32 %v1626, %v1637
        %v1640 = vsel %vm829, %v1638, 0.0
        %v1641 = vsel %vm829, %v1639, 0.0
        %v1642 = vadd.f32 %v1640, %v1641
        %v1643 = vrot.slane %v1642, 4
        %v1644 = vadd.f32 %v1642, %v1643
        %v1645 = vrot.slane %v1644, 2
        %v1646 = vadd.f32 %v1644, %v1645
        %v1647 = vrot.slane %v1646, 1
        %v1648 = vadd.f32 %v1646, %v1647
        %v1649 = vmul.f32 %v1625, %v1335
        %v1650 = vmul.f32 %v1626, %v1337
        %v1651 = vadd.f32 %v1649, %v1537
        %v1652 = vadd.f32 %v1650, %v1538
        %v1653 = vlaneseq
        %v1654 = vshrl.u32 %v1653, 7
        %v1655 = vsub.s32 4, %v1654
        %v1656 = vrot.slane %v1072, %v1655
        %1658 = vbcast.lane.b32.xlu0 %v1656, 256
        %v1659 = vpop.permute.xlu0 %1658
        %s1661 = sor.u32 256, 8
        %1662 = vbcast.lane.b32.xlu0 %v1656, %s1661
        %v1663 = vpop.permute.xlu0 %1662
        %v1664 = vmul.f32 %v1651, %v1659
        %v1665 = vmul.f32 %v1652, %v1663
        %v1666 = vsel %vm829, %v1664, 0.0
        %v1667 = vsel %vm829, %v1665, 0.0
        %v1668 = vadd.f32 %v1666, %v1667
        %v1669 = vrot.slane %v1668, 4
        %v1670 = vadd.f32 %v1668, %v1669
        %v1671 = vrot.slane %v1670, 2
        %v1672 = vadd.f32 %v1670, %v1671
        %v1673 = vrot.slane %v1672, 1
        %v1674 = vadd.f32 %v1672, %v1673
        %v1675 = vmul.f32 %v1651, %v1339
        %v1676 = vmul.f32 %v1652, %v1341
        %v1677 = vadd.f32 %v1675, %v1539
        %v1678 = vadd.f32 %v1676, %v1540
        %v1679 = vlaneseq
        %v1680 = vshrl.u32 %v1679, 7
        %v1681 = vsub.s32 5, %v1680
        %v1682 = vrot.slane %v1072, %v1681
        %1684 = vbcast.lane.b32.xlu0 %v1682, 256
        %v1685 = vpop.permute.xlu0 %1684
        %s1687 = sor.u32 256, 8
        %1688 = vbcast.lane.b32.xlu0 %v1682, %s1687
        %v1689 = vpop.permute.xlu0 %1688
        %v1690 = vmul.f32 %v1677, %v1685
        %v1691 = vmul.f32 %v1678, %v1689
        %v1692 = vsel %vm829, %v1690, 0.0
        %v1693 = vsel %vm829, %v1691, 0.0
        %v1694 = vadd.f32 %v1692, %v1693
        %v1695 = vrot.slane %v1694, 4
        %v1696 = vadd.f32 %v1694, %v1695
        %v1697 = vrot.slane %v1696, 2
        %v1698 = vadd.f32 %v1696, %v1697
        %v1699 = vrot.slane %v1698, 1
        %v1700 = vadd.f32 %v1698, %v1699
        %v1701 = vmul.f32 %v1677, %v1343
        %v1702 = vmul.f32 %v1678, %v1345
        %v1703 = vadd.f32 %v1701, %v1541
        %v1704 = vadd.f32 %v1702, %v1542
        %v1705 = vlaneseq
        %v1706 = vshrl.u32 %v1705, 7
        %v1707 = vsub.s32 6, %v1706
        %v1708 = vrot.slane %v1072, %v1707
        %1710 = vbcast.lane.b32.xlu0 %v1708, 256
        %v1711 = vpop.permute.xlu0 %1710
        %s1713 = sor.u32 256, 8
        %1714 = vbcast.lane.b32.xlu0 %v1708, %s1713
        %v1715 = vpop.permute.xlu0 %1714
        %v1716 = vmul.f32 %v1703, %v1711
        %v1717 = vmul.f32 %v1704, %v1715
        %v1718 = vsel %vm829, %v1716, 0.0
        %v1719 = vsel %vm829, %v1717, 0.0
        %v1720 = vadd.f32 %v1718, %v1719
        %v1721 = vrot.slane %v1720, 4
        %v1722 = vadd.f32 %v1720, %v1721
        %v1723 = vrot.slane %v1722, 2
        %v1724 = vadd.f32 %v1722, %v1723
        %v1725 = vrot.slane %v1724, 1
        %v1726 = vadd.f32 %v1724, %v1725
        %v1727 = vmul.f32 %v1703, %v1347
        %v1728 = vmul.f32 %v1704, %v1349
        %v1729 = vadd.f32 %v1727, %v1543
        %v1730 = vadd.f32 %v1728, %v1544
        %v1731 = vlaneseq
        %v1732 = vshrl.u32 %v1731, 7
        %v1733 = vsub.s32 7, %v1732
        %v1734 = vrot.slane %v1072, %v1733
        %1736 = vbcast.lane.b32.xlu0 %v1734, 256
        %v1737 = vpop.permute.xlu0 %1736
        %s1739 = sor.u32 256, 8
        %1740 = vbcast.lane.b32.xlu0 %v1734, %s1739
        %v1741 = vpop.permute.xlu0 %1740
        %v1742 = vmul.f32 %v1729, %v1737
        %v1743 = vmul.f32 %v1730, %v1741
        %v1744 = vsel %vm829, %v1742, 0.0
        %v1745 = vsel %vm829, %v1743, 0.0
        %v1746 = vadd.f32 %v1744, %v1745
        %v1747 = vrot.slane %v1746, 4
        %v1748 = vadd.f32 %v1746, %v1747
        %v1749 = vrot.slane %v1748, 2
        %v1750 = vadd.f32 %v1748, %v1749
        %v1751 = vrot.slane %v1750, 1
        %v1752 = vadd.f32 %v1750, %v1751
        %vm1753 = vcmask 1040384
        %v1754 = vsel %vm1753, %v1570, %v1596
        %vm1755 = vcmask 1041408
        %v1756 = vsel %vm1755, %v1754, %v1622
        %vm1757 = vcmask 1042432
        %v1758 = vsel %vm1757, %v1756, %v1648
        %vm1759 = vcmask 1043456
        %v1760 = vsel %vm1759, %v1758, %v1674
        %vm1761 = vcmask 1044480
        %v1762 = vsel %vm1761, %v1760, %v1700
        %vm1763 = vcmask 1045504
        %v1764 = vsel %vm1763, %v1762, %v1726
        %vm1765 = vcmask 1046528
        %v1766 = vsel %vm1765, %v1764, %v1752
        %v1767 = vlaneseq
        %v1768 = vshrl.u32 %v1767, 7
        %v1769 = vsub.s32 0, %v1768
        %v1770 = vrot.slane %v725, %v1769
        %v1771 = vmul.f32 %v790, %v1770
        %v1772 = vadd.f32 %v1766, %v1771
        %v1773 = vmul.f32 %v1772, %v722
        %s1774 = scalar_lea.vmem %s9, 64
        %v1775 = vld [vmem:[%s1774] sm:$0xff]
        %v1776 = vld [vmem:[%s1774 + $0x8] sm:$0xff]
        %v1777 = vld [vmem:[%s1774 + $0x10] sm:$0xff]
        %v1778 = vld [vmem:[%s1774 + $0x18] sm:$0xff]
        %v1779 = vld [vmem:[%s1774 + $0x20] sm:$0xff]
        %v1780 = vld [vmem:[%s1774 + $0x28] sm:$0xff]
        %v1781 = vld [vmem:[%s1774 + $0x30] sm:$0xff]
        %v1782 = vld [vmem:[%s1774 + $0x38] sm:$0xff]
        %v1783 = vlaneseq
        %v1784 = vshrl.u32 %v1783, 7
        %v1785 = vsub.s32 1, %v1784
        %v1786 = vrot.slane %v724, %v1785
        %v1788 = vsel %vm1092, %v911, 0
        %v1791 = vsel %vm1092, %v1775, 0
        %v1794 = vsel %vm1092, %v1776, 0
        %v1797 = vsel %vm1092, %v1777, 0
        %v1800 = vsel %vm1092, %v1778, 0
        %v1803 = vsel %vm1092, %v1779, 0
        %v1806 = vsel %vm1092, %v1780, 0
        %v1809 = vsel %vm1092, %v1781, 0
        %v1812 = vsel %vm1092, %v1782, 0
        %1814 = vmatprep.subr.mxu0 0.0
        %1815 = vmatpush1.xpose.msra.mxu0 %v1791
        %1816 = vmatprep.subr.mxu0 0.0
        %1817 = vmatpush1.xpose.msra.mxu0 %v1794
        %1818 = vmatprep.subr.mxu0 0.0
        %1819 = vmatpush1.xpose.msra.mxu0 %v1797
        %1820 = vmatprep.subr.mxu0 0.0
        %1821 = vmatpush1.xpose.msra.mxu0 %v1800
        %1822 = vmatprep.subr.mxu0 0.0
        %1823 = vmatpush1.xpose.msra.mxu0 %v1803
        %1824 = vmatprep.subr.mxu0 0.0
        %1825 = vmatpush1.xpose.msra.mxu0 %v1806
        %1826 = vmatprep.subr.mxu0 0.0
        %1827 = vmatpush1.xpose.msra.mxu0 %v1809
        %1828 = vmatprep.subr.mxu0 0.0
        %1829 = vmatpush1.xpose.msra.mxu0 %v1812
        %1830 = vmatprep.subr.mxu0 0.0
        %1831 = vmatpush1.xpose.msra.mxu0 0.0
        %1832 = vmatprep.subr.mxu0 0.0
        %1833 = vmatpush1.xpose.msra.mxu0 0.0
        %1834 = vmatprep.subr.mxu0 0.0
        %1835 = vmatpush1.xpose.msra.mxu0 0.0
        %1836 = vmatprep.subr.mxu0 0.0
        %1837 = vmatpush1.xpose.msra.mxu0 0.0
        %1838 = vmatprep.subr.mxu0 0.0
        %1839 = vmatpush1.xpose.msra.mxu0 0.0
        %1840 = vmatprep.subr.mxu0 0.0
        %1841 = vmatpush1.xpose.msra.mxu0 0.0
        %1842 = vmatprep.subr.mxu0 0.0
        %1843 = vmatpush1.xpose.msra.mxu0 0.0
        %1844 = vmatprep.subr.mxu0 0.0
        %1845 = vmatpush1.xpose.msra.mxu0 0.0
        %1846 = vmatprep.subr.mxu0 0.0
        %1847 = vmatpush1.xpose.msra.mxu0 0.0
        %1848 = vmatprep.subr.mxu0 0.0
        %1849 = vmatpush1.xpose.msra.mxu0 0.0
        %1850 = vmatprep.subr.mxu0 0.0
        %1851 = vmatpush1.xpose.msra.mxu0 0.0
        %1852 = vmatprep.subr.mxu0 0.0
        %1853 = vmatpush1.xpose.msra.mxu0 0.0
        %1854 = vmatprep.subr.mxu0 0.0
        %1855 = vmatpush1.xpose.msra.mxu0 0.0
        %1856 = vmatprep.subr.mxu0 0.0
        %1857 = vmatpush1.xpose.msra.mxu0 0.0
        %1858 = vmatprep.subr.mxu0 0.0
        %1859 = vmatpush1.xpose.msra.mxu0 0.0
        %1860 = vmatprep.subr.mxu0 0.0
        %1861 = vmatpush1.xpose.msra.mxu0 0.0
        %1862 = vmatprep.subr.mxu0 0.0
        %1863 = vmatpush1.xpose.msra.mxu0 0.0
        %1864 = vmatprep.subr.mxu0 0.0
        %1865 = vmatpush1.xpose.msra.mxu0 0.0
        %1866 = vmatprep.subr.mxu0 0.0
        %1867 = vmatpush1.xpose.msra.mxu0 0.0
        %1868 = vmatprep.subr.mxu0 0.0
        %1869 = vmatpush1.xpose.msra.mxu0 0.0
        %1870 = vmatprep.subr.mxu0 0.0
        %1871 = vmatpush1.xpose.msra.mxu0 0.0
        %1872 = vmatprep.subr.mxu0 0.0
        %1873 = vmatpush1.xpose.msra.mxu0 0.0
        %1874 = vmatprep.subr.mxu0 0.0
        %1875 = vmatpush1.xpose.msra.mxu0 0.0
        %1876 = vmatprep.subr.mxu0 0.0
        %1877 = vmatpush1.xpose.msra.mxu0 0.0
        %1878 = vmatprep.mubr.f32.mxu0 0.0
        %1879 = vmatmul.mubr.f32.gmra.mrb[0].mxu0 %v1788
        %v1880 = vpop.f32.mrb[0].mxu0
        %v1881 = vadd.f32 %v1786, %v1880
        %v1882 = vpop.f32.mrb[0].mxu0
        %1883 = vdwg.mxu0
        %vm1884 = vcmp.gt.f32.partialorder %v1881, 20.0
        %v1885 = vmin.f32 %v1881, 20.0
        %v1886 = vmul.f32 %v1885, 1.442695
        %v1887 = vpow.pop %v1886
        %v1888 = vadd.f32 %v1887, 1.0
        %v1889 = vlog2.pop %v1888
        %v1890 = vmul.f32 %v1889, 0.6931472
        %v1891 = vmul.f32 -0.5, %v1887
        %v1892 = vadd.f32 %v1891, 1.0
        %v1893 = vmul.f32 %v1892, %v1887
        %v1894 = vand.u32 2147483647, %v1887
        %vm1895 = vcmp.lt.f32.partialorder %v1894, 0.0004427343
        %v1896 = vsel %vm1895, %v1893, %v1890
        %v1897 = vsel %vm1884, %v1881, %v1896
        %s1898 = scalar_lea.vmem %s11, 16
        %v1899 = vld [vmem:[%s1898] sm:$0xff]
        %v1900 = vld [vmem:[%s1898 + $0x8] sm:$0xff]
        %v1901 = vmul.f32 %v1899, 1.442695
        %v1902 = vpow.pop %v1901
        %v1903 = vmul.f32 %v1900, 1.442695
        %v1904 = vpow.pop %v1903
        %v1905 = vsub.f32 0.0, %v1902
        %v1906 = vsub.f32 0.0, %v1904
        %v1908 = vcombine.high %v1897, %v1897
        %v1910 = vunpack.c.l.s4 1966171168
        %v1911 = vunpack.c.0.s8 %v1910
        %v1912 = vlaneseq
        %v1913 = vshrl.u32 %v1912, 7
        %v1914 = vsub.s32 %v1911, %v1913
        %v1915 = vrot.slane %v1897, %v1914
        %v1917 = vunpack.c.l.s4 1966171168
        %v1918 = vunpack.c.0.s8 %v1917
        %v1919 = vlaneseq
        %v1920 = vshrl.u32 %v1919, 7
        %v1921 = vsub.s32 %v1918, %v1920
        %v1922 = vrot.slane %v1908, %v1921
        %v1923 = vcombine.high %v1915, %v1915
        %v1924 = vcombine.high %v1922, %v1922
        %v1926 = vunpack.c.l.s4 1966171168
        %v1927 = vunpack.c.0.s8 %v1926
        %v1928 = vlaneseq
        %v1929 = vshrl.u32 %v1928, 7
        %v1930 = vsub.s32 %v1927, %v1929
        %v1931 = vrot.slane %v1915, %v1930
        %v1933 = vunpack.c.l.s4 1966171168
        %v1934 = vunpack.c.0.s8 %v1933
        %v1935 = vlaneseq
        %v1936 = vshrl.u32 %v1935, 7
        %v1937 = vsub.s32 %v1934, %v1936
        %v1938 = vrot.slane %v1922, %v1937
        %v1940 = vunpack.c.l.s4 1966171168
        %v1941 = vunpack.c.0.s8 %v1940
        %v1942 = vlaneseq
        %v1943 = vshrl.u32 %v1942, 7
        %v1944 = vsub.s32 %v1941, %v1943
        %v1945 = vrot.slane %v1923, %v1944
        %v1947 = vunpack.c.l.s4 1966171168
        %v1948 = vunpack.c.0.s8 %v1947
        %v1949 = vlaneseq
        %v1950 = vshrl.u32 %v1949, 7
        %v1951 = vsub.s32 %v1948, %v1950
        %v1952 = vrot.slane %v1924, %v1951
        %v1953 = vcombine.high %v1931, %v1931
        %v1954 = vcombine.high %v1938, %v1938
        %v1955 = vcombine.high %v1945, %v1945
        %v1956 = vcombine.high %v1952, %v1952
        %v1957 = vlaneseq
        %v1958 = vshrl.u32 %v1957, 7
        %v1959 = vsub.s32 0, %v1958
        %v1960 = vrot.slane %v1931, %v1959
        %v1961 = vlaneseq
        %v1962 = vshrl.u32 %v1961, 7
        %v1963 = vsub.s32 0, %v1962
        %v1964 = vrot.slane %v1945, %v1963
        %v1965 = vlaneseq
        %v1966 = vshrl.u32 %v1965, 7
        %v1967 = vsub.s32 0, %v1966
        %v1968 = vrot.slane %v1953, %v1967
        %v1969 = vlaneseq
        %v1970 = vshrl.u32 %v1969, 7
        %v1971 = vsub.s32 0, %v1970
        %v1972 = vrot.slane %v1955, %v1971
        %v1973 = vlaneseq
        %v1974 = vshrl.u32 %v1973, 7
        %v1975 = vsub.s32 0, %v1974
        %v1976 = vrot.slane %v1938, %v1975
        %v1977 = vlaneseq
        %v1978 = vshrl.u32 %v1977, 7
        %v1979 = vsub.s32 0, %v1978
        %v1980 = vrot.slane %v1952, %v1979
        %v1981 = vlaneseq
        %v1982 = vshrl.u32 %v1981, 7
        %v1983 = vsub.s32 0, %v1982
        %v1984 = vrot.slane %v1954, %v1983
        %v1985 = vlaneseq
        %v1986 = vshrl.u32 %v1985, 7
        %v1987 = vsub.s32 0, %v1986
        %v1988 = vrot.slane %v1956, %v1987
        %v1997 = vmul.f32 %v1960, %v1905
        %v1998 = vmul.f32 %v1960, %v1906
        %v1999 = vmul.f32 %v1964, %v1905
        %v2000 = vmul.f32 %v1964, %v1906
        %v2001 = vmul.f32 %v1968, %v1905
        %v2002 = vmul.f32 %v1968, %v1906
        %v2003 = vmul.f32 %v1972, %v1905
        %v2004 = vmul.f32 %v1972, %v1906
        %v2005 = vmul.f32 %v1976, %v1905
        %v2006 = vmul.f32 %v1976, %v1906
        %v2007 = vmul.f32 %v1980, %v1905
        %v2008 = vmul.f32 %v1980, %v1906
        %v2009 = vmul.f32 %v1984, %v1905
        %v2010 = vmul.f32 %v1984, %v1906
        %v2011 = vmul.f32 %v1988, %v1905
        %v2012 = vmul.f32 %v1988, %v1906
        %v2013 = vmul.f32 %v1997, 1.442695
        %v2014 = vpow.pop %v2013
        %v2015 = vmul.f32 %v1998, 1.442695
        %v2016 = vpow.pop %v2015
        %v2017 = vmul.f32 %v1999, 1.442695
        %v2018 = vpow.pop %v2017
        %v2019 = vmul.f32 %v2000, 1.442695
        %v2020 = vpow.pop %v2019
        %v2021 = vmul.f32 %v2001, 1.442695
        %v2022 = vpow.pop %v2021
        %v2023 = vmul.f32 %v2002, 1.442695
        %v2024 = vpow.pop %v2023
        %v2025 = vmul.f32 %v2003, 1.442695
        %v2026 = vpow.pop %v2025
        %v2027 = vmul.f32 %v2004, 1.442695
        %v2028 = vpow.pop %v2027
        %v2029 = vmul.f32 %v2005, 1.442695
        %v2030 = vpow.pop %v2029
        %v2031 = vmul.f32 %v2006, 1.442695
        %v2032 = vpow.pop %v2031
        %v2033 = vmul.f32 %v2007, 1.442695
        %v2034 = vpow.pop %v2033
        %v2035 = vmul.f32 %v2008, 1.442695
        %v2036 = vpow.pop %v2035
        %v2037 = vmul.f32 %v2009, 1.442695
        %v2038 = vpow.pop %v2037
        %v2039 = vmul.f32 %v2010, 1.442695
        %v2040 = vpow.pop %v2039
        %v2041 = vmul.f32 %v2011, 1.442695
        %v2042 = vpow.pop %v2041
        %v2043 = vmul.f32 %v2012, 1.442695
        %v2044 = vpow.pop %v2043
        %v2045 = vlaneseq
        %v2046 = vshrl.u32 %v2045, 7
        %v2047 = vsub.s32 0, %v2046
        %v2048 = vrot.slane %v994, %v2047
        %2050 = vbcast.lane.b32.xlu0 %v2048, 256
        %v2051 = vpop.permute.xlu0 %2050
        %s2053 = sor.u32 256, 8
        %2054 = vbcast.lane.b32.xlu0 %v2048, %s2053
        %v2055 = vpop.permute.xlu0 %2054
        %v2056 = vlaneseq
        %v2057 = vshrl.u32 %v2056, 7
        %v2058 = vsub.s32 1, %v2057
        %v2059 = vrot.slane %v994, %v2058
        %2061 = vbcast.lane.b32.xlu0 %v2059, 256
        %v2062 = vpop.permute.xlu0 %2061
        %s2064 = sor.u32 256, 8
        %2065 = vbcast.lane.b32.xlu0 %v2059, %s2064
        %v2066 = vpop.permute.xlu0 %2065
        %v2067 = vlaneseq
        %v2068 = vshrl.u32 %v2067, 7
        %v2069 = vsub.s32 2, %v2068
        %v2070 = vrot.slane %v994, %v2069
        %2072 = vbcast.lane.b32.xlu0 %v2070, 256
        %v2073 = vpop.permute.xlu0 %2072
        %s2075 = sor.u32 256, 8
        %2076 = vbcast.lane.b32.xlu0 %v2070, %s2075
        %v2077 = vpop.permute.xlu0 %2076
        %v2078 = vlaneseq
        %v2079 = vshrl.u32 %v2078, 7
        %v2080 = vsub.s32 3, %v2079
        %v2081 = vrot.slane %v994, %v2080
        %2083 = vbcast.lane.b32.xlu0 %v2081, 256
        %v2084 = vpop.permute.xlu0 %2083
        %s2086 = sor.u32 256, 8
        %2087 = vbcast.lane.b32.xlu0 %v2081, %s2086
        %v2088 = vpop.permute.xlu0 %2087
        %v2089 = vlaneseq
        %v2090 = vshrl.u32 %v2089, 7
        %v2091 = vsub.s32 4, %v2090
        %v2092 = vrot.slane %v994, %v2091
        %2094 = vbcast.lane.b32.xlu0 %v2092, 256
        %v2095 = vpop.permute.xlu0 %2094
        %s2097 = sor.u32 256, 8
        %2098 = vbcast.lane.b32.xlu0 %v2092, %s2097
        %v2099 = vpop.permute.xlu0 %2098
        %v2100 = vlaneseq
        %v2101 = vshrl.u32 %v2100, 7
        %v2102 = vsub.s32 5, %v2101
        %v2103 = vrot.slane %v994, %v2102
        %2105 = vbcast.lane.b32.xlu0 %v2103, 256
        %v2106 = vpop.permute.xlu0 %2105
        %s2108 = sor.u32 256, 8
        %2109 = vbcast.lane.b32.xlu0 %v2103, %s2108
        %v2110 = vpop.permute.xlu0 %2109
        %v2111 = vlaneseq
        %v2112 = vshrl.u32 %v2111, 7
        %v2113 = vsub.s32 6, %v2112
        %v2114 = vrot.slane %v994, %v2113
        %2116 = vbcast.lane.b32.xlu0 %v2114, 256
        %v2117 = vpop.permute.xlu0 %2116
        %s2119 = sor.u32 256, 8
        %2120 = vbcast.lane.b32.xlu0 %v2114, %s2119
        %v2121 = vpop.permute.xlu0 %2120
        %v2122 = vlaneseq
        %v2123 = vshrl.u32 %v2122, 7
        %v2124 = vsub.s32 7, %v2123
        %v2125 = vrot.slane %v994, %v2124
        %2127 = vbcast.lane.b32.xlu0 %v2125, 256
        %v2128 = vpop.permute.xlu0 %2127
        %s2130 = sor.u32 256, 8
        %2131 = vbcast.lane.b32.xlu0 %v2125, %s2130
        %v2132 = vpop.permute.xlu0 %2131
        %v2133 = vmul.f32 %v1897, %v827
        %v2135 = vcombine.high %v2133, %v2133
        %v2137 = vunpack.c.l.s4 1966171168
        %v2138 = vunpack.c.0.s8 %v2137
        %v2139 = vlaneseq
        %v2140 = vshrl.u32 %v2139, 7
        %v2141 = vsub.s32 %v2138, %v2140
        %v2142 = vrot.slane %v2133, %v2141
        %v2144 = vunpack.c.l.s4 1966171168
        %v2145 = vunpack.c.0.s8 %v2144
        %v2146 = vlaneseq
        %v2147 = vshrl.u32 %v2146, 7
        %v2148 = vsub.s32 %v2145, %v2147
        %v2149 = vrot.slane %v2135, %v2148
        %v2150 = vcombine.high %v2142, %v2142
        %v2151 = vcombine.high %v2149, %v2149
        %v2153 = vunpack.c.l.s4 1966171168
        %v2154 = vunpack.c.0.s8 %v2153
        %v2155 = vlaneseq
        %v2156 = vshrl.u32 %v2155, 7
        %v2157 = vsub.s32 %v2154, %v2156
        %v2158 = vrot.slane %v2142, %v2157
        %v2160 = vunpack.c.l.s4 1966171168
        %v2161 = vunpack.c.0.s8 %v2160
        %v2162 = vlaneseq
        %v2163 = vshrl.u32 %v2162, 7
        %v2164 = vsub.s32 %v2161, %v2163
        %v2165 = vrot.slane %v2149, %v2164
        %v2167 = vunpack.c.l.s4 1966171168
        %v2168 = vunpack.c.0.s8 %v2167
        %v2169 = vlaneseq
        %v2170 = vshrl.u32 %v2169, 7
        %v2171 = vsub.s32 %v2168, %v2170
        %v2172 = vrot.slane %v2150, %v2171
        %v2174 = vunpack.c.l.s4 1966171168
        %v2175 = vunpack.c.0.s8 %v2174
        %v2176 = vlaneseq
        %v2177 = vshrl.u32 %v2176, 7
        %v2178 = vsub.s32 %v2175, %v2177
        %v2179 = vrot.slane %v2151, %v2178
        %v2180 = vcombine.high %v2158, %v2158
        %v2181 = vcombine.high %v2165, %v2165
        %v2182 = vcombine.high %v2172, %v2172
        %v2183 = vcombine.high %v2179, %v2179
        %v2184 = vlaneseq
        %v2185 = vshrl.u32 %v2184, 7
        %v2186 = vsub.s32 0, %v2185
        %v2187 = vrot.slane %v2158, %v2186
        %v2188 = vlaneseq
        %v2189 = vshrl.u32 %v2188, 7
        %v2190 = vsub.s32 0, %v2189
        %v2191 = vrot.slane %v2172, %v2190
        %v2192 = vlaneseq
        %v2193 = vshrl.u32 %v2192, 7
        %v2194 = vsub.s32 0, %v2193
        %v2195 = vrot.slane %v2180, %v2194
        %v2196 = vlaneseq
        %v2197 = vshrl.u32 %v2196, 7
        %v2198 = vsub.s32 0, %v2197
        %v2199 = vrot.slane %v2182, %v2198
        %v2200 = vlaneseq
        %v2201 = vshrl.u32 %v2200, 7
        %v2202 = vsub.s32 0, %v2201
        %v2203 = vrot.slane %v2165, %v2202
        %v2204 = vlaneseq
        %v2205 = vshrl.u32 %v2204, 7
        %v2206 = vsub.s32 0, %v2205
        %v2207 = vrot.slane %v2179, %v2206
        %v2208 = vlaneseq
        %v2209 = vshrl.u32 %v2208, 7
        %v2210 = vsub.s32 0, %v2209
        %v2211 = vrot.slane %v2181, %v2210
        %v2212 = vlaneseq
        %v2213 = vshrl.u32 %v2212, 7
        %v2214 = vsub.s32 0, %v2213
        %v2215 = vrot.slane %v2183, %v2214
        %v2224 = vmul.f32 %v2051, %v2187
        %v2225 = vmul.f32 %v2055, %v2187
        %v2226 = vmul.f32 %v2062, %v2191
        %v2227 = vmul.f32 %v2066, %v2191
        %v2228 = vmul.f32 %v2073, %v2195
        %v2229 = vmul.f32 %v2077, %v2195
        %v2230 = vmul.f32 %v2084, %v2199
        %v2231 = vmul.f32 %v2088, %v2199
        %v2232 = vmul.f32 %v2095, %v2203
        %v2233 = vmul.f32 %v2099, %v2203
        %v2234 = vmul.f32 %v2106, %v2207
        %v2235 = vmul.f32 %v2110, %v2207
        %v2236 = vmul.f32 %v2117, %v2211
        %v2237 = vmul.f32 %v2121, %v2211
        %v2238 = vmul.f32 %v2128, %v2215
        %v2239 = vmul.f32 %v2132, %v2215
        %v2240 = vmul.f32 %v2014, 0.0
        %v2241 = vmul.f32 %v2016, 0.0
        %v2242 = vadd.f32 %v2240, %v2224
        %v2243 = vadd.f32 %v2241, %v2225
        %v2244 = vlaneseq
        %v2245 = vshrl.u32 %v2244, 7
        %v2246 = vsub.s32 0, %v2245
        %v2247 = vrot.slane %v1077, %v2246
        %2249 = vbcast.lane.b32.xlu0 %v2247, 256
        %v2250 = vpop.permute.xlu0 %2249
        %s2252 = sor.u32 256, 8
        %2253 = vbcast.lane.b32.xlu0 %v2247, %s2252
        %v2254 = vpop.permute.xlu0 %2253
        %v2255 = vmul.f32 %v2242, %v2250
        %v2256 = vmul.f32 %v2243, %v2254
        %v2257 = vsel %vm829, %v2255, 0.0
        %v2258 = vsel %vm829, %v2256, 0.0
        %v2259 = vadd.f32 %v2257, %v2258
        %v2260 = vrot.slane %v2259, 4
        %v2261 = vadd.f32 %v2259, %v2260
        %v2262 = vrot.slane %v2261, 2
        %v2263 = vadd.f32 %v2261, %v2262
        %v2264 = vrot.slane %v2263, 1
        %v2265 = vadd.f32 %v2263, %v2264
        %v2266 = vmul.f32 %v2242, %v2018
        %v2267 = vmul.f32 %v2243, %v2020
        %v2268 = vadd.f32 %v2266, %v2226
        %v2269 = vadd.f32 %v2267, %v2227
        %v2270 = vlaneseq
        %v2271 = vshrl.u32 %v2270, 7
        %v2272 = vsub.s32 1, %v2271
        %v2273 = vrot.slane %v1077, %v2272
        %2275 = vbcast.lane.b32.xlu0 %v2273, 256
        %v2276 = vpop.permute.xlu0 %2275
        %s2278 = sor.u32 256, 8
        %2279 = vbcast.lane.b32.xlu0 %v2273, %s2278
        %v2280 = vpop.permute.xlu0 %2279
        %v2281 = vmul.f32 %v2268, %v2276
        %v2282 = vmul.f32 %v2269, %v2280
        %v2283 = vsel %vm829, %v2281, 0.0
        %v2284 = vsel %vm829, %v2282, 0.0
        %v2285 = vadd.f32 %v2283, %v2284
        %v2286 = vrot.slane %v2285, 4
        %v2287 = vadd.f32 %v2285, %v2286
        %v2288 = vrot.slane %v2287, 2
        %v2289 = vadd.f32 %v2287, %v2288
        %v2290 = vrot.slane %v2289, 1
        %v2291 = vadd.f32 %v2289, %v2290
        %v2292 = vmul.f32 %v2268, %v2022
        %v2293 = vmul.f32 %v2269, %v2024
        %v2294 = vadd.f32 %v2292, %v2228
        %v2295 = vadd.f32 %v2293, %v2229
        %v2296 = vlaneseq
        %v2297 = vshrl.u32 %v2296, 7
        %v2298 = vsub.s32 2, %v2297
        %v2299 = vrot.slane %v1077, %v2298
        %2301 = vbcast.lane.b32.xlu0 %v2299, 256
        %v2302 = vpop.permute.xlu0 %2301
        %s2304 = sor.u32 256, 8
        %2305 = vbcast.lane.b32.xlu0 %v2299, %s2304
        %v2306 = vpop.permute.xlu0 %2305
        %v2307 = vmul.f32 %v2294, %v2302
        %v2308 = vmul.f32 %v2295, %v2306
        %v2309 = vsel %vm829, %v2307, 0.0
        %v2310 = vsel %vm829, %v2308, 0.0
        %v2311 = vadd.f32 %v2309, %v2310
        %v2312 = vrot.slane %v2311, 4
        %v2313 = vadd.f32 %v2311, %v2312
        %v2314 = vrot.slane %v2313, 2
        %v2315 = vadd.f32 %v2313, %v2314
        %v2316 = vrot.slane %v2315, 1
        %v2317 = vadd.f32 %v2315, %v2316
        %v2318 = vmul.f32 %v2294, %v2026
        %v2319 = vmul.f32 %v2295, %v2028
        %v2320 = vadd.f32 %v2318, %v2230
        %v2321 = vadd.f32 %v2319, %v2231
        %v2322 = vlaneseq
        %v2323 = vshrl.u32 %v2322, 7
        %v2324 = vsub.s32 3, %v2323
        %v2325 = vrot.slane %v1077, %v2324
        %2327 = vbcast.lane.b32.xlu0 %v2325, 256
        %v2328 = vpop.permute.xlu0 %2327
        %s2330 = sor.u32 256, 8
        %2331 = vbcast.lane.b32.xlu0 %v2325, %s2330
        %v2332 = vpop.permute.xlu0 %2331
        %v2333 = vmul.f32 %v2320, %v2328
        %v2334 = vmul.f32 %v2321, %v2332
        %v2335 = vsel %vm829, %v2333, 0.0
        %v2336 = vsel %vm829, %v2334, 0.0
        %v2337 = vadd.f32 %v2335, %v2336
        %v2338 = vrot.slane %v2337, 4
        %v2339 = vadd.f32 %v2337, %v2338
        %v2340 = vrot.slane %v2339, 2
        %v2341 = vadd.f32 %v2339, %v2340
        %v2342 = vrot.slane %v2341, 1
        %v2343 = vadd.f32 %v2341, %v2342
        %v2344 = vmul.f32 %v2320, %v2030
        %v2345 = vmul.f32 %v2321, %v2032
        %v2346 = vadd.f32 %v2344, %v2232
        %v2347 = vadd.f32 %v2345, %v2233
        %v2348 = vlaneseq
        %v2349 = vshrl.u32 %v2348, 7
        %v2350 = vsub.s32 4, %v2349
        %v2351 = vrot.slane %v1077, %v2350
        %2353 = vbcast.lane.b32.xlu0 %v2351, 256
        %v2354 = vpop.permute.xlu0 %2353
        %s2356 = sor.u32 256, 8
        %2357 = vbcast.lane.b32.xlu0 %v2351, %s2356
        %v2358 = vpop.permute.xlu0 %2357
        %v2359 = vmul.f32 %v2346, %v2354
        %v2360 = vmul.f32 %v2347, %v2358
        %v2361 = vsel %vm829, %v2359, 0.0
        %v2362 = vsel %vm829, %v2360, 0.0
        %v2363 = vadd.f32 %v2361, %v2362
        %v2364 = vrot.slane %v2363, 4
        %v2365 = vadd.f32 %v2363, %v2364
        %v2366 = vrot.slane %v2365, 2
        %v2367 = vadd.f32 %v2365, %v2366
        %v2368 = vrot.slane %v2367, 1
        %v2369 = vadd.f32 %v2367, %v2368
        %v2370 = vmul.f32 %v2346, %v2034
        %v2371 = vmul.f32 %v2347, %v2036
        %v2372 = vadd.f32 %v2370, %v2234
        %v2373 = vadd.f32 %v2371, %v2235
        %v2374 = vlaneseq
        %v2375 = vshrl.u32 %v2374, 7
        %v2376 = vsub.s32 5, %v2375
        %v2377 = vrot.slane %v1077, %v2376
        %2379 = vbcast.lane.b32.xlu0 %v2377, 256
        %v2380 = vpop.permute.xlu0 %2379
        %s2382 = sor.u32 256, 8
        %2383 = vbcast.lane.b32.xlu0 %v2377, %s2382
        %v2384 = vpop.permute.xlu0 %2383
        %v2385 = vmul.f32 %v2372, %v2380
        %v2386 = vmul.f32 %v2373, %v2384
        %v2387 = vsel %vm829, %v2385, 0.0
        %v2388 = vsel %vm829, %v2386, 0.0
        %v2389 = vadd.f32 %v2387, %v2388
        %v2390 = vrot.slane %v2389, 4
        %v2391 = vadd.f32 %v2389, %v2390
        %v2392 = vrot.slane %v2391, 2
        %v2393 = vadd.f32 %v2391, %v2392
        %v2394 = vrot.slane %v2393, 1
        %v2395 = vadd.f32 %v2393, %v2394
        %v2396 = vmul.f32 %v2372, %v2038
        %v2397 = vmul.f32 %v2373, %v2040
        %v2398 = vadd.f32 %v2396, %v2236
        %v2399 = vadd.f32 %v2397, %v2237
        %v2400 = vlaneseq
        %v2401 = vshrl.u32 %v2400, 7
        %v2402 = vsub.s32 6, %v2401
        %v2403 = vrot.slane %v1077, %v2402
        %2405 = vbcast.lane.b32.xlu0 %v2403, 256
        %v2406 = vpop.permute.xlu0 %2405
        %s2408 = sor.u32 256, 8
        %2409 = vbcast.lane.b32.xlu0 %v2403, %s2408
        %v2410 = vpop.permute.xlu0 %2409
        %v2411 = vmul.f32 %v2398, %v2406
        %v2412 = vmul.f32 %v2399, %v2410
        %v2413 = vsel %vm829, %v2411, 0.0
        %v2414 = vsel %vm829, %v2412, 0.0
        %v2415 = vadd.f32 %v2413, %v2414
        %v2416 = vrot.slane %v2415, 4
        %v2417 = vadd.f32 %v2415, %v2416
        %v2418 = vrot.slane %v2417, 2
        %v2419 = vadd.f32 %v2417, %v2418
        %v2420 = vrot.slane %v2419, 1
        %v2421 = vadd.f32 %v2419, %v2420
        %v2422 = vmul.f32 %v2398, %v2042
        %v2423 = vmul.f32 %v2399, %v2044
        %v2424 = vadd.f32 %v2422, %v2238
        %v2425 = vadd.f32 %v2423, %v2239
        %v2426 = vlaneseq
        %v2427 = vshrl.u32 %v2426, 7
        %v2428 = vsub.s32 7, %v2427
        %v2429 = vrot.slane %v1077, %v2428
        %2431 = vbcast.lane.b32.xlu0 %v2429, 256
        %v2432 = vpop.permute.xlu0 %2431
        %s2434 = sor.u32 256, 8
        %2435 = vbcast.lane.b32.xlu0 %v2429, %s2434
        %v2436 = vpop.permute.xlu0 %2435
        %v2437 = vmul.f32 %v2424, %v2432
        %v2438 = vmul.f32 %v2425, %v2436
        %v2439 = vsel %vm829, %v2437, 0.0
        %v2440 = vsel %vm829, %v2438, 0.0
        %v2441 = vadd.f32 %v2439, %v2440
        %v2442 = vrot.slane %v2441, 4
        %v2443 = vadd.f32 %v2441, %v2442
        %v2444 = vrot.slane %v2443, 2
        %v2445 = vadd.f32 %v2443, %v2444
        %v2446 = vrot.slane %v2445, 1
        %v2447 = vadd.f32 %v2445, %v2446
        %v2448 = vsel %vm1753, %v2265, %v2291
        %v2449 = vsel %vm1755, %v2448, %v2317
        %v2450 = vsel %vm1757, %v2449, %v2343
        %v2451 = vsel %vm1759, %v2450, %v2369
        %v2452 = vsel %vm1761, %v2451, %v2395
        %v2453 = vsel %vm1763, %v2452, %v2421
        %v2454 = vsel %vm1765, %v2453, %v2447
        %v2455 = vlaneseq
        %v2456 = vshrl.u32 %v2455, 7
        %v2457 = vsub.s32 1, %v2456
        %v2458 = vrot.slane %v725, %v2457
        %v2459 = vmul.f32 %v827, %v2458
        %v2460 = vadd.f32 %v2454, %v2459
        %v2461 = vmul.f32 %v2460, %v722
        %2463 = vrot.lane.b32.xlu0 %v2461, 64
        %v2464 = vpop.permute.xlu0 %2463
        %v2466 = vsel %vm829, %v1773, %v2464
        %v2467 = vld [vmem:[%s13] sm:$0xff]
        %v2468 = vld [vmem:[%s13 + $0x8] sm:$0xff]
        %v2469 = vld [vmem:[%s13 + $0x10] sm:$0xff]
        %v2470 = vld [vmem:[%s13 + $0x18] sm:$0xff]
        %v2471 = vld [vmem:[%s13 + $0x20] sm:$0xff]
        %v2472 = vld [vmem:[%s13 + $0x28] sm:$0xff]
        %v2473 = vld [vmem:[%s13 + $0x30] sm:$0xff]
        %v2474 = vld [vmem:[%s13 + $0x38] sm:$0xff]
        %2475 = vmatprep.subr.mxu0 0.0
        %2476 = vmatpush1.xpose.msra.mxu0 %v2467
        %2477 = vmatprep.subr.mxu0 0.0
        %2478 = vmatpush1.xpose.msra.mxu0 %v2468
        %2479 = vmatprep.subr.mxu0 0.0
        %2480 = vmatpush1.xpose.msra.mxu0 %v2469
        %2481 = vmatprep.subr.mxu0 0.0
        %2482 = vmatpush1.xpose.msra.mxu0 %v2470
        %2483 = vmatprep.subr.mxu0 0.0
        %2484 = vmatpush1.xpose.msra.mxu0 %v2471
        %2485 = vmatprep.subr.mxu0 0.0
        %2486 = vmatpush1.xpose.msra.mxu0 %v2472
        %2487 = vmatprep.subr.mxu0 0.0
        %2488 = vmatpush1.xpose.msra.mxu0 %v2473
        %2489 = vmatprep.subr.mxu0 0.0
        %2490 = vmatpush1.xpose.msra.mxu0 %v2474
        %2491 = vmatprep.subr.mxu0 0.0
        %2492 = vmatpush1.xpose.msra.mxu0 0.0
        %2493 = vmatprep.subr.mxu0 0.0
        %2494 = vmatpush1.xpose.msra.mxu0 0.0
        %2495 = vmatprep.subr.mxu0 0.0
        %2496 = vmatpush1.xpose.msra.mxu0 0.0
        %2497 = vmatprep.subr.mxu0 0.0
        %2498 = vmatpush1.xpose.msra.mxu0 0.0
        %2499 = vmatprep.subr.mxu0 0.0
        %2500 = vmatpush1.xpose.msra.mxu0 0.0
        %2501 = vmatprep.subr.mxu0 0.0
        %2502 = vmatpush1.xpose.msra.mxu0 0.0
        %2503 = vmatprep.subr.mxu0 0.0
        %2504 = vmatpush1.xpose.msra.mxu0 0.0
        %2505 = vmatprep.subr.mxu0 0.0
        %2506 = vmatpush1.xpose.msra.mxu0 0.0
        %2507 = vmatprep.subr.mxu0 0.0
        %2508 = vmatpush1.xpose.msra.mxu0 0.0
        %2509 = vmatprep.subr.mxu0 0.0
        %2510 = vmatpush1.xpose.msra.mxu0 0.0
        %2511 = vmatprep.subr.mxu0 0.0
        %2512 = vmatpush1.xpose.msra.mxu0 0.0
        %2513 = vmatprep.subr.mxu0 0.0
        %2514 = vmatpush1.xpose.msra.mxu0 0.0
        %2515 = vmatprep.subr.mxu0 0.0
        %2516 = vmatpush1.xpose.msra.mxu0 0.0
        %2517 = vmatprep.subr.mxu0 0.0
        %2518 = vmatpush1.xpose.msra.mxu0 0.0
        %2519 = vmatprep.subr.mxu0 0.0
        %2520 = vmatpush1.xpose.msra.mxu0 0.0
        %2521 = vmatprep.subr.mxu0 0.0
        %2522 = vmatpush1.xpose.msra.mxu0 0.0
        %2523 = vmatprep.subr.mxu0 0.0
        %2524 = vmatpush1.xpose.msra.mxu0 0.0
        %2525 = vmatprep.subr.mxu0 0.0
        %2526 = vmatpush1.xpose.msra.mxu0 0.0
        %2527 = vmatprep.subr.mxu0 0.0
        %2528 = vmatpush1.xpose.msra.mxu0 0.0
        %2529 = vmatprep.subr.mxu0 0.0
        %2530 = vmatpush1.xpose.msra.mxu0 0.0
        %2531 = vmatprep.subr.mxu0 0.0
        %2532 = vmatpush1.xpose.msra.mxu0 0.0
        %2533 = vmatprep.subr.mxu0 0.0
        %2534 = vmatpush1.xpose.msra.mxu0 0.0
        %2535 = vmatprep.subr.mxu0 0.0
        %2536 = vmatpush1.xpose.msra.mxu0 0.0
        %2537 = vmatprep.subr.mxu0 0.0
        %2538 = vmatpush1.xpose.msra.mxu0 0.0
        %2539 = vmatprep.mubr.f32.mxu0 0.0
        %2540 = vmatmul.mubr.f32.gmra.mrb[0].mxu0 %v2466
        %v2541 = vpop.f32.mrb[0].mxu0
        %v2542 = vadd.f32 0.0, %v2541
        %v2543 = vpop.f32.mrb[0].mxu0
        %2544 = vdwg.mxu0
        %v2545 = vld [vmem:[%s14] sm:$0xff]
        %v2546 = vld [vmem:[%s14 + $0x8] sm:$0xff]
        %v2547 = vld [vmem:[%s14 + $0x10] sm:$0xff]
        %v2548 = vld [vmem:[%s14 + $0x18] sm:$0xff]
        %v2550 = vsel %vm829, %v2542, 0
        %v2553 = vsel %vm829, %v2545, 0
        %v2556 = vsel %vm829, %v2546, 0
        %v2559 = vsel %vm829, %v2547, 0
        %v2562 = vsel %vm829, %v2548, 0
        %2564 = vmatprep.subr.mxu0 0.0
        %2565 = vmatpush1.xpose.msra.mxu0 %v2553
        %2566 = vmatprep.subr.mxu0 0.0
        %2567 = vmatpush1.xpose.msra.mxu0 %v2556
        %2568 = vmatprep.subr.mxu0 0.0
        %2569 = vmatpush1.xpose.msra.mxu0 %v2559
        %2570 = vmatprep.subr.mxu0 0.0
        %2571 = vmatpush1.xpose.msra.mxu0 %v2562
        %2572 = vmatprep.subr.mxu0 0.0
        %2573 = vmatpush1.xpose.msra.mxu0 0.0
        %2574 = vmatprep.subr.mxu0 0.0
        %2575 = vmatpush1.xpose.msra.mxu0 0.0
        %2576 = vmatprep.subr.mxu0 0.0
        %2577 = vmatpush1.xpose.msra.mxu0 0.0
        %2578 = vmatprep.subr.mxu0 0.0
        %2579 = vmatpush1.xpose.msra.mxu0 0.0
        %2580 = vmatprep.subr.mxu0 0.0
        %2581 = vmatpush1.xpose.msra.mxu0 0.0
        %2582 = vmatprep.subr.mxu0 0.0
        %2583 = vmatpush1.xpose.msra.mxu0 0.0
        %2584 = vmatprep.subr.mxu0 0.0
        %2585 = vmatpush1.xpose.msra.mxu0 0.0
        %2586 = vmatprep.subr.mxu0 0.0
        %2587 = vmatpush1.xpose.msra.mxu0 0.0
        %2588 = vmatprep.subr.mxu0 0.0
        %2589 = vmatpush1.xpose.msra.mxu0 0.0
        %2590 = vmatprep.subr.mxu0 0.0
        %2591 = vmatpush1.xpose.msra.mxu0 0.0
        %2592 = vmatprep.subr.mxu0 0.0
        %2593 = vmatpush1.xpose.msra.mxu0 0.0
        %2594 = vmatprep.subr.mxu0 0.0
        %2595 = vmatpush1.xpose.msra.mxu0 0.0
        %2596 = vmatprep.subr.mxu0 0.0
        %2597 = vmatpush1.xpose.msra.mxu0 0.0
        %2598 = vmatprep.subr.mxu0 0.0
        %2599 = vmatpush1.xpose.msra.mxu0 0.0
        %2600 = vmatprep.subr.mxu0 0.0
        %2601 = vmatpush1.xpose.msra.mxu0 0.0
        %2602 = vmatprep.subr.mxu0 0.0
        %2603 = vmatpush1.xpose.msra.mxu0 0.0
        %2604 = vmatprep.subr.mxu0 0.0
        %2605 = vmatpush1.xpose.msra.mxu0 0.0
        %2606 = vmatprep.subr.mxu0 0.0
        %2607 = vmatpush1.xpose.msra.mxu0 0.0
        %2608 = vmatprep.subr.mxu0 0.0
        %2609 = vmatpush1.xpose.msra.mxu0 0.0
        %2610 = vmatprep.subr.mxu0 0.0
        %2611 = vmatpush1.xpose.msra.mxu0 0.0
        %2612 = vmatprep.subr.mxu0 0.0
        %2613 = vmatpush1.xpose.msra.mxu0 0.0
        %2614 = vmatprep.subr.mxu0 0.0
        %2615 = vmatpush1.xpose.msra.mxu0 0.0
        %2616 = vmatprep.subr.mxu0 0.0
        %2617 = vmatpush1.xpose.msra.mxu0 0.0
        %2618 = vmatprep.subr.mxu0 0.0
        %2619 = vmatpush1.xpose.msra.mxu0 0.0
        %2620 = vmatprep.subr.mxu0 0.0
        %2621 = vmatpush1.xpose.msra.mxu0 0.0
        %2622 = vmatprep.subr.mxu0 0.0
        %2623 = vmatpush1.xpose.msra.mxu0 0.0
        %2624 = vmatprep.subr.mxu0 0.0
        %2625 = vmatpush1.xpose.msra.mxu0 0.0
        %2626 = vmatprep.subr.mxu0 0.0
        %2627 = vmatpush1.xpose.msra.mxu0 0.0
        %2628 = vmatprep.mubr.f32.mxu0 0.0
        %2629 = vmatmul.mubr.f32.gmra.mrb[0].mxu0 %v2550
        %v2630 = vpop.f32.mrb[0].mxu0
        %v2631 = vadd.f32 0.0, %v2630
        %v2632 = vpop.f32.mrb[0].mxu0
        %2633 = vdwg.mxu0
        %2634 = vst.msk [vmem:[%s485] sm:$0xff] %vm492, %v2631
        %s2635 = sand.u32 %s357, 1
        %s2636 = scalar_lea.sflag [#allocation3], %s2635
        %s2637 = sand.u32 %s357, 1
        %s2638 = smul.addr %s2637, 8
        %s2639 = scalar_lea.vmem [#allocation2], %s2638
        // Predicated region
        $region81: #{tpu_custom_call.1} parent=79 // pred_check
          %p2640 = pneg %p367
        $region82: #{tpu_custom_call.1} parent=79 // pred_check_branch
          %2642 = sbr.rel (%p2640) target = $region84
        $region83: #{tpu_custom_call.1} parent=79 // pred_region
          %s2644 = ssub.s32 128, 128
          %2645 = vsyncadd %s2636, %s2644
          %s2646 = smul.addr %s29, 128
          %s2647 = scalar_lea.hbm %s15, %s2646
          %s2649 = sshll.u32 %s2639, 4
          %s2650 = int_to_ptr.vmem [resolvable:$true] %s2649
          %2652 = dma.vmem_to_hbm [thread:$0]  %s2650, 128, %s2647, %s2636
        $region84: #{tpu_custom_call.1} parent=79 // pred_fallthru
          _
      $region80: #{tpu_custom_call.1} parent=5 // pred_fallthru
        _
      %p2653 = scmp.le.s32.totalorder 2, %s24
      // Predicated region
      $region85: #{tpu_custom_call.1} parent=5 // pred_check
        %p2654 = pneg %p2653
      $region86: #{tpu_custom_call.1} parent=5 // pred_check_branch
        %2656 = sbr.rel (%p2654) target = $region88
      $region87: #{tpu_custom_call.1} parent=5 // pred_region
        %s2657 = ssub.s32 %s24, 2
        // Predicated region
        $region89: #{tpu_custom_call.1} parent=87 // pred_check
          %p2658 = pneg %p373
        $region90: #{tpu_custom_call.1} parent=87 // pred_check_branch
          %2660 = sbr.rel (%p2658) target = $region92
        $region91: #{tpu_custom_call.1} parent=87 // pred_region
          %s2661 = sand.u32 %s358, 1
          %s2662 = scalar_lea.sflag [#allocation3], %s2661
          %s2663 = sand.u32 %s358, 1
          %s2664 = smul.addr %s2663, 8
          %s2665 = scalar_lea.vmem [#allocation2], %s2664
          %2666 = dma.done %s2662, 128
        $region92: #{tpu_custom_call.1} parent=87 // pred_fallthru
          _
      $region88: #{tpu_custom_call.1} parent=5 // pred_fallthru
        _
    $region6: #{tpu_custom_call.1} parent=1 // loop_footer
      %s28 = sadd.s32 1, %s24
    $region7: #{tpu_custom_call.1} parent=1 // loop_footer_branch
      %23 = sbr.rel target = $region3
    $region8: #{tpu_custom_call.1} parent=1 // loop_exit
      _
    %2667 = vsyncpa [#allocation3], 1
    %s2668 = scalar_lea.sflag [#allocation3], 1
    %2669 = vsyncpa %s2668, 1

</llo_original>
